<compile_context>
chip_gen: v7x
topology: tpu7x:2x2x1
jax: 0.10.0
libtpu: 0.0.40
codegen_flags: <defaults>
</compile_context>

<pallas_src>
import math

import numpy as np
import jax
import jax.numpy as jnp
from jax.experimental import pallas as pl
from jax.experimental.pallas import tpu as pltpu

BN_EPS = 1e-5
K = 3          # 3x3 kernels everywhere
KK = K * K


# ----------------------------------------------------------------------------
# Host-side constant construction (selection matrices + BN-folded weights)
# ----------------------------------------------------------------------------
def _conv_selection(h, w, stride, padding=1):
    """0/1 gather matrix for Conv2d(k=3, stride, pad): (9*p_out, p_in)."""
    ho = (h + 2 * padding - K) // stride + 1
    wo = (w + 2 * padding - K) // stride + 1
    s = np.zeros((KK, ho * wo, h * w), np.float32)
    for ki in range(K):
        for kj in range(K):
            t = ki * K + kj
            for oy in range(ho):
                iy = stride * oy + ki - padding
                if iy < 0 or iy >= h:
                    continue
                for ox in range(wo):
                    ix = stride * ox + kj - padding
                    if ix < 0 or ix >= w:
                        continue
                    s[t, oy * wo + ox, iy * w + ix] = 1.0
    return s.reshape(KK * ho * wo, h * w), ho, wo


def _deconv_scatter_selection(h, w, stride, padding=1, output_padding=1):
    """0/1 scatter matrix for ConvTranspose2d(k=3,s,p,op): (p_out, 9*p_in).

    Columns are ordered tap-major / input-pixel-minor so they line up with the
    in-kernel stacking of z_t = h @ W_t along the row axis (compute-first
    decoder ordering from the perf review)."""
    ho = (h - 1) * stride - 2 * padding + K + output_padding
    wo = (w - 1) * stride - 2 * padding + K + output_padding
    s = np.zeros((KK, ho * wo, h * w), np.float32)
    for ki in range(K):
        for kj in range(K):
            t = ki * K + kj
            for iy in range(h):
                oy = stride * iy - padding + ki
                if oy < 0 or oy >= ho:
                    continue
                for ix in range(w):
                    ox = stride * ix - padding + kj
                    if ox < 0 or ox >= wo:
                        continue
                    s[t, oy * wo + ox, iy * w + ix] = 1.0
    s_cat = np.transpose(s, (1, 0, 2)).reshape(ho * wo, KK * h * w)
    return s_cat, ho, wo


def _fold_conv(w, b, bn):
    """Conv2d weight (Cout,Cin,3,3)+bias+BN(eval) -> (9,Cin,Cout), (1,Cout)."""
    cout, cin = w.shape[0], w.shape[1]
    scale = bn["gamma"] / jnp.sqrt(bn["var"] + BN_EPS)
    taps = jnp.transpose(w, (2, 3, 1, 0)).reshape(KK, cin, cout)
    taps = taps * scale[None, None, :]
    bias = ((b - bn["mean"]) * scale + bn["beta"]).reshape(1, cout)
    return taps, bias


def _fold_deconv(w, b, bn):
    """ConvTranspose2d weight (Cin,Cout,3,3) (+opt BN) -> (9,Cin,Cout),(1,Cout)."""
    cin, cout = w.shape[0], w.shape[1]
    taps = jnp.transpose(w, (2, 3, 0, 1)).reshape(KK, cin, cout)
    if bn is None:
        return taps, b.reshape(1, cout)
    scale = bn["gamma"] / jnp.sqrt(bn["var"] + BN_EPS)
    taps = taps * scale[None, None, :]
    bias = ((b - bn["mean"]) * scale + bn["beta"]).reshape(1, cout)
    return taps, bias


def build_constants(params, height=16, width=16):
    """Selection matrices + BN-folded per-tap weights (built once, on host)."""
    bf16 = jnp.bfloat16
    s1, h1, w1 = _conv_selection(height, width, stride=2)          # (576, 256)
    s2, h2, w2 = _conv_selection(h1, w1, stride=2)                 # (144, 64)
    s3, h3, w3 = _deconv_scatter_selection(h2, w2, stride=2)       # (64, 144)
    s4, h4, w4 = _deconv_scatter_selection(h3, w3, stride=2)       # (256, 576)
    assert (h4, w4) == (height, width)

    t1, c1 = _fold_conv(params["w1"], params["b1"], params["bn1"])   # (9,1,32)
    t2, c2 = _fold_conv(params["w2"], params["b2"], params["bn2"])   # (9,32,64)
    t3, c3 = _fold_deconv(params["w3"], params["b3"], params["bn3"])  # (9,64,32)
    t4, c4 = _fold_deconv(params["w4"], params["b4"], None)          # (9,32,1)
    w4_cat = jnp.transpose(t4[:, :, 0])                              # (32, 9)

    # bf16 matmul operands (S matrices are exactly 0/1 -> gathers stay exact);
    # layer-1 per-tap weights and all biases stay f32 for the VPU epilogues.
    return (jnp.asarray(s1, bf16), t1.astype(jnp.float32), c1,
            jnp.asarray(s2, bf16), t2.astype(bf16), c2,
            t3.astype(bf16), jnp.asarray(s3, bf16), c3,
            w4_cat.astype(bf16), jnp.asarray(s4, bf16), c4)


# ----------------------------------------------------------------------------
# Fused Pallas kernel: whole CAE forward for B_TILE images per grid step
# ----------------------------------------------------------------------------
def _cae_kernel(x_ref,
                s1_ref, w1_ref, b1_ref,
                s2_ref, w2_ref, b2_ref,
                w3_ref, s3_ref, b3_ref,
                w4_ref, s4_ref, b4_ref,
                o_ref, z4_ref):
    bf16 = jnp.bfloat16
    b_tile = x_ref.shape[2]
    p1 = s1_ref.shape[0] // KK          # 64  (8x8 after conv1)
    c1 = w1_ref.shape[2]                # 32
    p2 = s2_ref.shape[0] // KK          # 16  (4x4 after conv2)
    c2 = w2_ref.shape[2]                # 64
    p4 = s4_ref.shape[1] // KK          # 64  (8x8 into deconv2)

    # ---- Encoder layer 1 gather: ONE batched MXU matmul for the whole block.
    x_bf = x_ref[0].astype(bf16)                               # (256, B)
    g1 = jnp.dot(s1_ref[...], x_bf,
                 preferred_element_type=jnp.float32)           # (9*64, B), exact

    for b in range(b_tile):                                    # static unroll
        # -- layer 1 (cin == 1): per-tap outer products on the VPU, f32.
        g1_b = g1[:, b:b + 1]                                  # (576, 1)
        h1 = jnp.zeros((p1, c1), jnp.float32)
        for t in range(KK):
            h1 = h1 + g1_b[t * p1:(t + 1) * p1, :] * w1_ref[t]   # (64,1)*(1,32)
        h1 = jnp.maximum(h1 + b1_ref[...], 0.0)                # conv+BN folded
        h1_bf = h1.astype(bf16)

        # -- layer 2 (conv, gather-first): S2 @ h1, then 9 per-tap matmuls.
        g2 = jnp.dot(s2_ref[...], h1_bf,
                     preferred_element_type=jnp.float32)       # (144, 32)
        h2 = jnp.zeros((p2, c2), jnp.float32)
        for t in range(KK):
            h2 = h2 + jnp.dot(g2[t * p2:(t + 1) * p2, :].astype(bf16),
                              w2_ref[t],
                              preferred_element_type=jnp.float32)
        h2 = jnp.maximum(h2 + b2_ref[...], 0.0)                # (16, 64)
        h2_bf = h2.astype(bf16)

        # -- layer 3 (deconv, compute-first): z_t = h2 @ W3_t, ONE scatter matmul.
        z3 = jnp.concatenate(
            [jnp.dot(h2_bf, w3_ref[t], preferred_element_type=jnp.float32)
             for t in range(KK)], axis=0)                      # (144, 32)
        h3 = jnp.dot(s3_ref[...], z3.astype(bf16),
                     preferred_element_type=jnp.float32)       # (64, 32)
        h3 = jnp.maximum(h3 + b3_ref[...], 0.0)
        h3_bf = h3.astype(bf16)

        # -- layer 4 z-step: all 9 taps in a single matmul (cout == 1).
        z4 = jnp.dot(h3_bf, w4_ref[...],
                     preferred_element_type=jnp.float32)       # (64, 9)
        for t in range(KK):
            z4_ref[t * p4:(t + 1) * p4, b:b + 1] = z4[:, t:t + 1]

    # ---- Decoder layer 4 scatter + sigmoid, batched over the whole block.
    y = jnp.dot(s4_ref[...], z4_ref[...].astype(bf16),
                preferred_element_type=jnp.float32)            # (256, B)
    o_ref[0] = jax.nn.sigmoid(y + b4_ref[...])


def _const_spec(cst):
    if cst.ndim == 2:
        return pl.BlockSpec(cst.shape, lambda i: (0, 0))
    return pl.BlockSpec(cst.shape, lambda i: (0, 0, 0))


def _pick_b_tile(n, max_tile=8):
    # Largest divisor of n (<= max_tile) that still leaves >= 2 grid steps so
    # both v7x TensorCores get work; fall back to the largest divisor.
    cands = [t for t in range(1, min(max_tile, n) + 1) if n % t == 0]
    two_step = [t for t in cands if n // t >= 2]
    return max(two_step) if two_step else max(cands)


@jax.jit
def cae_forward(x, consts):
    # Eval-mode semantics: BatchNorm uses running stats, Dropout is identity.
    # TODO(synk): train-mode Dropout(p=0.2) / batch-statistic BN not implemented.
    n, _c, height, width = x.shape
    p = height * width
    b_tile = _pick_b_tile(n)
    nb = n // b_tile

    # (nb, p, b_tile): pixels on the sublane axis, the block's images on lanes;
    # each BlockSpec's trailing dims equal the array's trailing dims.
    x_blocks = x.astype(jnp.float32).reshape(nb, b_tile, p).transpose(0, 2, 1)

    in_specs = [pl.BlockSpec((1, p, b_tile), lambda i: (i, 0, 0))]
    in_specs += [_const_spec(cst) for cst in consts]

    out = pl.pallas_call(
        _cae_kernel,
        out_shape=jax.ShapeDtypeStruct((nb, p, b_tile), jnp.float32),
        grid=(nb,),
        in_specs=in_specs,
        out_specs=pl.BlockSpec((1, p, b_tile), lambda i: (i, 0, 0)),
        scratch_shapes=[pltpu.VMEM((KK * (p // 4), b_tile), jnp.float32)],
        compiler_params=pltpu.CompilerParams(
            dimension_semantics=("parallel",)),
    )(x_blocks, *consts)
    return out.transpose(0, 2, 1).reshape(n, 1, height, width)


# ----------------------------------------------------------------------------
# Parameter init (PyTorch-default-like, deterministic) and demo
# ----------------------------------------------------------------------------
def init_params(key):
    ks = jax.random.split(key, 8)

    def u(k, shape, fan_in):
        bound = 1.0 / math.sqrt(fan_in)
        return jax.random.uniform(k, shape, jnp.float32, -bound, bound)

    p = {}
    # encoder: Conv2d(1, 32, 3, s=2, p=1), Conv2d(32, 64, 3, s=2, p=1)
    p["w1"] = u(ks[0], (32, 1, 3, 3), 1 * 9)
    p["b1"] = u(ks[1], (32,), 1 * 9)
    p["w2"] = u(ks[2], (64, 32, 3, 3), 32 * 9)
    p["b2"] = u(ks[3], (64,), 32 * 9)
    # decoder: ConvTranspose2d(64, 32, 3, s=2, p=1, op=1),
    #          ConvTranspose2d(32, 1, 3, s=2, p=1, op=1)
    # (PyTorch ConvTranspose2d weight layout is (Cin, Cout, k, k))
    p["w3"] = u(ks[4], (64, 32, 3, 3), 32 * 9)
    p["b3"] = u(ks[5], (32,), 32 * 9)
    p["w4"] = u(ks[6], (32, 1, 3, 3), 1 * 9)
    p["b4"] = u(ks[7], (1,), 1 * 9)
    # BatchNorm params at PyTorch init values (used with eval/running stats).
    for name, c in (("bn1", 32), ("bn2", 64), ("bn3", 32)):
        p[name] = dict(gamma=jnp.ones((c,), jnp.float32),
                       beta=jnp.zeros((c,), jnp.float32),
                       mean=jnp.zeros((c,), jnp.float32),
                       var=jnp.ones((c,), jnp.float32))
    return p


if __name__ == "__main__":
    key = jax.random.PRNGKey(0)
    kx, kp = jax.random.split(key)
    x = jax.random.uniform(kx, (2, 1, 16, 16), dtype=jnp.float32)  # NCHW
    params = init_params(kp)
    consts = build_constants(params, 16, 16)
    y = cae_forward(x, consts)
    y = jax.block_until_ready(y)
    assert y.shape == (2, 1, 16, 16) and y.dtype == jnp.float32
    assert bool(jnp.all(jnp.isfinite(y)))
    assert bool(jnp.all((y >= 0.0) & (y <= 1.0)))   # sigmoid output range
    print("KERNEL_OK")
</pallas_src>

<mosaic_0001>
module attributes {stable_mosaic.version = 11 : i64} {
  func.func @_cae_kernel(%arg0: i32, %arg1: memref<1x256x1xf32, #tpu.memory_space<vmem>>, %arg2: memref<576x256xbf16, #tpu.memory_space<vmem>>, %arg3: memref<9x1x32xf32, #tpu.memory_space<vmem>>, %arg4: memref<1x32xf32, #tpu.memory_space<vmem>>, %arg5: memref<144x64xbf16, #tpu.memory_space<vmem>>, %arg6: memref<9x32x64xbf16, #tpu.memory_space<vmem>>, %arg7: memref<1x64xf32, #tpu.memory_space<vmem>>, %arg8: memref<9x64x32xbf16, #tpu.memory_space<vmem>>, %arg9: memref<64x144xbf16, #tpu.memory_space<vmem>>, %arg10: memref<1x32xf32, #tpu.memory_space<vmem>>, %arg11: memref<32x9xbf16, #tpu.memory_space<vmem>>, %arg12: memref<256x576xbf16, #tpu.memory_space<vmem>>, %arg13: memref<1x1xf32, #tpu.memory_space<vmem>>, %arg14: memref<1x256x1xf32, #tpu.memory_space<vmem>>, %arg15: memref<576x1xf32, #tpu.memory_space<vmem>>) attributes {dimension_semantics = [#tpu.dimension_semantics<parallel>], iteration_bounds = array<i64: 2>, scalar_prefetch = 0 : i64, scratch_operands = 1 : i64, tpu.core_type = #tpu.core_type<tc>, window_params = [{transform_indices = @transform_0, window_bounds = array<i64: 1, 256, 1>}, {pipeline_mode = #tpu.pipeline_mode<synchronous>, transform_indices = @transform_1, window_bounds = array<i64: 576, 256>}, {pipeline_mode = #tpu.pipeline_mode<synchronous>, transform_indices = @transform_2, window_bounds = array<i64: 9, 1, 32>}, {pipeline_mode = #tpu.pipeline_mode<synchronous>, transform_indices = @transform_3, window_bounds = array<i64: 1, 32>}, {pipeline_mode = #tpu.pipeline_mode<synchronous>, transform_indices = @transform_4, window_bounds = array<i64: 144, 64>}, {pipeline_mode = #tpu.pipeline_mode<synchronous>, transform_indices = @transform_5, window_bounds = array<i64: 9, 32, 64>}, {pipeline_mode = #tpu.pipeline_mode<synchronous>, transform_indices = @transform_6, window_bounds = array<i64: 1, 64>}, {pipeline_mode = #tpu.pipeline_mode<synchronous>, transform_indices = @transform_7, window_bounds = array<i64: 9, 64, 32>}, {pipeline_mode = #tpu.pipeline_mode<synchronous>, transform_indices = @transform_8, window_bounds = array<i64: 64, 144>}, {pipeline_mode = #tpu.pipeline_mode<synchronous>, transform_indices = @transform_9, window_bounds = array<i64: 1, 32>}, {pipeline_mode = #tpu.pipeline_mode<synchronous>, transform_indices = @transform_10, window_bounds = array<i64: 32, 9>}, {pipeline_mode = #tpu.pipeline_mode<synchronous>, transform_indices = @transform_11, window_bounds = array<i64: 256, 576>}, {pipeline_mode = #tpu.pipeline_mode<synchronous>, transform_indices = @transform_12, window_bounds = array<i64: 1, 1>}, {transform_indices = @transform_13, window_bounds = array<i64: 1, 256, 1>}]} {
    %c0 = arith.constant 0 : index
    %c0_0 = arith.constant 0 : index
    %c0_1 = arith.constant 0 : index
    %0 = vector.load %arg1[%c0, %c0_0, %c0_1] : memref<1x256x1xf32, #tpu.memory_space<vmem>>, vector<1x256x1xf32>
    %1 = vector.shape_cast %0 : vector<1x256x1xf32> to vector<256x1xf32>
    %2 = arith.truncf %1 : vector<256x1xf32> to vector<256x1xbf16>
    %c0_2 = arith.constant 0 : index
    %c0_3 = arith.constant 0 : index
    %3 = vector.load %arg2[%c0_2, %c0_3] : memref<576x256xbf16, #tpu.memory_space<vmem>>, vector<576x256xbf16>
    %cst = arith.constant dense<0.000000e+00> : vector<576x1xf32>
    %4 = tpu.matmul %3, %2, %cst {dimension_numbers = #tpu.dot_dimension_numbers<[1], [0], [0], [1], [0, 0, 1, 1], [], []>} : vector<576x256xbf16>, vector<256x1xbf16>, vector<576x1xf32> -> vector<576x1xf32>
    %cst_4 = arith.constant 0.000000e+00 : f32
    %5 = vector.broadcast %cst_4 : f32 to vector<64x32xf32>
    %6 = vector.extract_strided_slice %4 {offsets = [0, 0], sizes = [64, 1], strides = [1, 1]} : vector<576x1xf32> to vector<64x1xf32>
    %c0_5 = arith.constant 0 : index
    %c0_6 = arith.constant 0 : index
    %c0_7 = arith.constant 0 : index
    %7 = vector.load %arg3[%c0_5, %c0_6, %c0_7] : memref<9x1x32xf32, #tpu.memory_space<vmem>>, vector<1x1x32xf32>
    %8 = vector.shape_cast %7 : vector<1x1x32xf32> to vector<1x32xf32>
    %9 = vector.broadcast %6 : vector<64x1xf32> to vector<64x32xf32>
    %10 = vector.broadcast %8 : vector<1x32xf32> to vector<64x32xf32>
    %11 = arith.mulf %9, %10 : vector<64x32xf32>
    %12 = arith.addf %5, %11 : vector<64x32xf32>
    %13 = vector.extract_strided_slice %4 {offsets = [64, 0], sizes = [64, 1], strides = [1, 1]} : vector<576x1xf32> to vector<64x1xf32>
    %c1 = arith.constant 1 : index
    %c0_8 = arith.constant 0 : index
    %c0_9 = arith.constant 0 : index
    %14 = vector.load %arg3[%c1, %c0_8, %c0_9] : memref<9x1x32xf32, #tpu.memory_space<vmem>>, vector<1x1x32xf32>
    %15 = vector.shape_cast %14 : vector<1x1x32xf32> to vector<1x32xf32>
    %16 = vector.broadcast %13 : vector<64x1xf32> to vector<64x32xf32>
    %17 = vector.broadcast %15 : vector<1x32xf32> to vector<64x32xf32>
    %18 = arith.mulf %16, %17 : vector<64x32xf32>
    %19 = arith.addf %12, %18 : vector<64x32xf32>
    %20 = vector.extract_strided_slice %4 {offsets = [128, 0], sizes = [64, 1], strides = [1, 1]} : vector<576x1xf32> to vector<64x1xf32>
    %c2 = arith.constant 2 : index
    %c0_10 = arith.constant 0 : index
    %c0_11 = arith.constant 0 : index
    %21 = vector.load %arg3[%c2, %c0_10, %c0_11] : memref<9x1x32xf32, #tpu.memory_space<vmem>>, vector<1x1x32xf32>
    %22 = vector.shape_cast %21 : vector<1x1x32xf32> to vector<1x32xf32>
    %23 = vector.broadcast %20 : vector<64x1xf32> to vector<64x32xf32>
    %24 = vector.broadcast %22 : vector<1x32xf32> to vector<64x32xf32>
    %25 = arith.mulf %23, %24 : vector<64x32xf32>
    %26 = arith.addf %19, %25 : vector<64x32xf32>
    %27 = vector.extract_strided_slice %4 {offsets = [192, 0], sizes = [64, 1], strides = [1, 1]} : vector<576x1xf32> to vector<64x1xf32>
    %c3 = arith.constant 3 : index
    %c0_12 = arith.constant 0 : index
    %c0_13 = arith.constant 0 : index
    %28 = vector.load %arg3[%c3, %c0_12, %c0_13] : memref<9x1x32xf32, #tpu.memory_space<vmem>>, vector<1x1x32xf32>
    %29 = vector.shape_cast %28 : vector<1x1x32xf32> to vector<1x32xf32>
    %30 = vector.broadcast %27 : vector<64x1xf32> to vector<64x32xf32>
    %31 = vector.broadcast %29 : vector<1x32xf32> to vector<64x32xf32>
    %32 = arith.mulf %30, %31 : vector<64x32xf32>
    %33 = arith.addf %26, %32 : vector<64x32xf32>
    %34 = vector.extract_strided_slice %4 {offsets = [256, 0], sizes = [64, 1], strides = [1, 1]} : vector<576x1xf32> to vector<64x1xf32>
    %c4 = arith.constant 4 : index
    %c0_14 = arith.constant 0 : index
    %c0_15 = arith.constant 0 : index
    %35 = vector.load %arg3[%c4, %c0_14, %c0_15] : memref<9x1x32xf32, #tpu.memory_space<vmem>>, vector<1x1x32xf32>
    %36 = vector.shape_cast %35 : vector<1x1x32xf32> to vector<1x32xf32>
    %37 = vector.broadcast %34 : vector<64x1xf32> to vector<64x32xf32>
    %38 = vector.broadcast %36 : vector<1x32xf32> to vector<64x32xf32>
    %39 = arith.mulf %37, %38 : vector<64x32xf32>
    %40 = arith.addf %33, %39 : vector<64x32xf32>
    %41 = vector.extract_strided_slice %4 {offsets = [320, 0], sizes = [64, 1], strides = [1, 1]} : vector<576x1xf32> to vector<64x1xf32>
    %c5 = arith.constant 5 : index
    %c0_16 = arith.constant 0 : index
    %c0_17 = arith.constant 0 : index
    %42 = vector.load %arg3[%c5, %c0_16, %c0_17] : memref<9x1x32xf32, #tpu.memory_space<vmem>>, vector<1x1x32xf32>
    %43 = vector.shape_cast %42 : vector<1x1x32xf32> to vector<1x32xf32>
    %44 = vector.broadcast %41 : vector<64x1xf32> to vector<64x32xf32>
    %45 = vector.broadcast %43 : vector<1x32xf32> to vector<64x32xf32>
    %46 = arith.mulf %44, %45 : vector<64x32xf32>
    %47 = arith.addf %40, %46 : vector<64x32xf32>
    %48 = vector.extract_strided_slice %4 {offsets = [384, 0], sizes = [64, 1], strides = [1, 1]} : vector<576x1xf32> to vector<64x1xf32>
    %c6 = arith.constant 6 : index
    %c0_18 = arith.constant 0 : index
    %c0_19 = arith.constant 0 : index
    %49 = vector.load %arg3[%c6, %c0_18, %c0_19] : memref<9x1x32xf32, #tpu.memory_space<vmem>>, vector<1x1x32xf32>
    %50 = vector.shape_cast %49 : vector<1x1x32xf32> to vector<1x32xf32>
    %51 = vector.broadcast %48 : vector<64x1xf32> to vector<64x32xf32>
    %52 = vector.broadcast %50 : vector<1x32xf32> to vector<64x32xf32>
    %53 = arith.mulf %51, %52 : vector<64x32xf32>
    %54 = arith.addf %47, %53 : vector<64x32xf32>
    %55 = vector.extract_strided_slice %4 {offsets = [448, 0], sizes = [64, 1], strides = [1, 1]} : vector<576x1xf32> to vector<64x1xf32>
    %c7 = arith.constant 7 : index
    %c0_20 = arith.constant 0 : index
    %c0_21 = arith.constant 0 : index
    %56 = vector.load %arg3[%c7, %c0_20, %c0_21] : memref<9x1x32xf32, #tpu.memory_space<vmem>>, vector<1x1x32xf32>
    %57 = vector.shape_cast %56 : vector<1x1x32xf32> to vector<1x32xf32>
    %58 = vector.broadcast %55 : vector<64x1xf32> to vector<64x32xf32>
    %59 = vector.broadcast %57 : vector<1x32xf32> to vector<64x32xf32>
    %60 = arith.mulf %58, %59 : vector<64x32xf32>
    %61 = arith.addf %54, %60 : vector<64x32xf32>
    %62 = vector.extract_strided_slice %4 {offsets = [512, 0], sizes = [64, 1], strides = [1, 1]} : vector<576x1xf32> to vector<64x1xf32>
    %c8 = arith.constant 8 : index
    %c0_22 = arith.constant 0 : index
    %c0_23 = arith.constant 0 : index
    %63 = vector.load %arg3[%c8, %c0_22, %c0_23] : memref<9x1x32xf32, #tpu.memory_space<vmem>>, vector<1x1x32xf32>
    %64 = vector.shape_cast %63 : vector<1x1x32xf32> to vector<1x32xf32>
    %65 = vector.broadcast %62 : vector<64x1xf32> to vector<64x32xf32>
    %66 = vector.broadcast %64 : vector<1x32xf32> to vector<64x32xf32>
    %67 = arith.mulf %65, %66 : vector<64x32xf32>
    %68 = arith.addf %61, %67 : vector<64x32xf32>
    %c0_24 = arith.constant 0 : index
    %c0_25 = arith.constant 0 : index
    %69 = vector.load %arg4[%c0_24, %c0_25] : memref<1x32xf32, #tpu.memory_space<vmem>>, vector<1x32xf32>
    %70 = vector.broadcast %69 : vector<1x32xf32> to vector<64x32xf32>
    %71 = arith.addf %68, %70 : vector<64x32xf32>
    %cst_26 = arith.constant 0.000000e+00 : f32
    %72 = vector.broadcast %cst_26 : f32 to vector<64x32xf32>
    %73 = arith.maximumf %71, %72 : vector<64x32xf32>
    %74 = arith.truncf %73 : vector<64x32xf32> to vector<64x32xbf16>
    %c0_27 = arith.constant 0 : index
    %c0_28 = arith.constant 0 : index
    %75 = vector.load %arg5[%c0_27, %c0_28] : memref<144x64xbf16, #tpu.memory_space<vmem>>, vector<144x64xbf16>
    %cst_29 = arith.constant dense<0.000000e+00> : vector<144x32xf32>
    %76 = tpu.matmul %75, %74, %cst_29 {dimension_numbers = #tpu.dot_dimension_numbers<[1], [0], [0], [1], [0, 0, 1, 1], [], []>} : vector<144x64xbf16>, vector<64x32xbf16>, vector<144x32xf32> -> vector<144x32xf32>
    %cst_30 = arith.constant 0.000000e+00 : f32
    %77 = vector.broadcast %cst_30 : f32 to vector<16x64xf32>
    %78 = vector.extract_strided_slice %76 {offsets = [0, 0], sizes = [16, 32], strides = [1, 1]} : vector<144x32xf32> to vector<16x32xf32>
    %79 = arith.truncf %78 : vector<16x32xf32> to vector<16x32xbf16>
    %c0_31 = arith.constant 0 : index
    %c0_32 = arith.constant 0 : index
    %c0_33 = arith.constant 0 : index
    %80 = vector.load %arg6[%c0_31, %c0_32, %c0_33] : memref<9x32x64xbf16, #tpu.memory_space<vmem>>, vector<1x32x64xbf16>
    %81 = vector.shape_cast %80 : vector<1x32x64xbf16> to vector<32x64xbf16>
    %cst_34 = arith.constant dense<0.000000e+00> : vector<16x64xf32>
    %82 = tpu.matmul %79, %81, %cst_34 {dimension_numbers = #tpu.dot_dimension_numbers<[1], [0], [0], [1], [0, 0, 1, 1], [], []>} : vector<16x32xbf16>, vector<32x64xbf16>, vector<16x64xf32> -> vector<16x64xf32>
    %83 = arith.addf %77, %82 : vector<16x64xf32>
    %84 = vector.extract_strided_slice %76 {offsets = [16, 0], sizes = [16, 32], strides = [1, 1]} : vector<144x32xf32> to vector<16x32xf32>
    %85 = arith.truncf %84 : vector<16x32xf32> to vector<16x32xbf16>
    %c1_35 = arith.constant 1 : index
    %c0_36 = arith.constant 0 : index
    %c0_37 = arith.constant 0 : index
    %86 = vector.load %arg6[%c1_35, %c0_36, %c0_37] : memref<9x32x64xbf16, #tpu.memory_space<vmem>>, vector<1x32x64xbf16>
    %87 = vector.shape_cast %86 : vector<1x32x64xbf16> to vector<32x64xbf16>
    %cst_38 = arith.constant dense<0.000000e+00> : vector<16x64xf32>
    %88 = tpu.matmul %85, %87, %cst_38 {dimension_numbers = #tpu.dot_dimension_numbers<[1], [0], [0], [1], [0, 0, 1, 1], [], []>} : vector<16x32xbf16>, vector<32x64xbf16>, vector<16x64xf32> -> vector<16x64xf32>
    %89 = arith.addf %83, %88 : vector<16x64xf32>
    %90 = vector.extract_strided_slice %76 {offsets = [32, 0], sizes = [16, 32], strides = [1, 1]} : vector<144x32xf32> to vector<16x32xf32>
    %91 = arith.truncf %90 : vector<16x32xf32> to vector<16x32xbf16>
    %c2_39 = arith.constant 2 : index
    %c0_40 = arith.constant 0 : index
    %c0_41 = arith.constant 0 : index
    %92 = vector.load %arg6[%c2_39, %c0_40, %c0_41] : memref<9x32x64xbf16, #tpu.memory_space<vmem>>, vector<1x32x64xbf16>
    %93 = vector.shape_cast %92 : vector<1x32x64xbf16> to vector<32x64xbf16>
    %cst_42 = arith.constant dense<0.000000e+00> : vector<16x64xf32>
    %94 = tpu.matmul %91, %93, %cst_42 {dimension_numbers = #tpu.dot_dimension_numbers<[1], [0], [0], [1], [0, 0, 1, 1], [], []>} : vector<16x32xbf16>, vector<32x64xbf16>, vector<16x64xf32> -> vector<16x64xf32>
    %95 = arith.addf %89, %94 : vector<16x64xf32>
    %96 = vector.extract_strided_slice %76 {offsets = [48, 0], sizes = [16, 32], strides = [1, 1]} : vector<144x32xf32> to vector<16x32xf32>
    %97 = arith.truncf %96 : vector<16x32xf32> to vector<16x32xbf16>
    %c3_43 = arith.constant 3 : index
    %c0_44 = arith.constant 0 : index
    %c0_45 = arith.constant 0 : index
    %98 = vector.load %arg6[%c3_43, %c0_44, %c0_45] : memref<9x32x64xbf16, #tpu.memory_space<vmem>>, vector<1x32x64xbf16>
    %99 = vector.shape_cast %98 : vector<1x32x64xbf16> to vector<32x64xbf16>
    %cst_46 = arith.constant dense<0.000000e+00> : vector<16x64xf32>
    %100 = tpu.matmul %97, %99, %cst_46 {dimension_numbers = #tpu.dot_dimension_numbers<[1], [0], [0], [1], [0, 0, 1, 1], [], []>} : vector<16x32xbf16>, vector<32x64xbf16>, vector<16x64xf32> -> vector<16x64xf32>
    %101 = arith.addf %95, %100 : vector<16x64xf32>
    %102 = vector.extract_strided_slice %76 {offsets = [64, 0], sizes = [16, 32], strides = [1, 1]} : vector<144x32xf32> to vector<16x32xf32>
    %103 = arith.truncf %102 : vector<16x32xf32> to vector<16x32xbf16>
    %c4_47 = arith.constant 4 : index
    %c0_48 = arith.constant 0 : index
    %c0_49 = arith.constant 0 : index
    %104 = vector.load %arg6[%c4_47, %c0_48, %c0_49] : memref<9x32x64xbf16, #tpu.memory_space<vmem>>, vector<1x32x64xbf16>
    %105 = vector.shape_cast %104 : vector<1x32x64xbf16> to vector<32x64xbf16>
    %cst_50 = arith.constant dense<0.000000e+00> : vector<16x64xf32>
    %106 = tpu.matmul %103, %105, %cst_50 {dimension_numbers = #tpu.dot_dimension_numbers<[1], [0], [0], [1], [0, 0, 1, 1], [], []>} : vector<16x32xbf16>, vector<32x64xbf16>, vector<16x64xf32> -> vector<16x64xf32>
    %107 = arith.addf %101, %106 : vector<16x64xf32>
    %108 = vector.extract_strided_slice %76 {offsets = [80, 0], sizes = [16, 32], strides = [1, 1]} : vector<144x32xf32> to vector<16x32xf32>
    %109 = arith.truncf %108 : vector<16x32xf32> to vector<16x32xbf16>
    %c5_51 = arith.constant 5 : index
    %c0_52 = arith.constant 0 : index
    %c0_53 = arith.constant 0 : index
    %110 = vector.load %arg6[%c5_51, %c0_52, %c0_53] : memref<9x32x64xbf16, #tpu.memory_space<vmem>>, vector<1x32x64xbf16>
    %111 = vector.shape_cast %110 : vector<1x32x64xbf16> to vector<32x64xbf16>
    %cst_54 = arith.constant dense<0.000000e+00> : vector<16x64xf32>
    %112 = tpu.matmul %109, %111, %cst_54 {dimension_numbers = #tpu.dot_dimension_numbers<[1], [0], [0], [1], [0, 0, 1, 1], [], []>} : vector<16x32xbf16>, vector<32x64xbf16>, vector<16x64xf32> -> vector<16x64xf32>
    %113 = arith.addf %107, %112 : vector<16x64xf32>
    %114 = vector.extract_strided_slice %76 {offsets = [96, 0], sizes = [16, 32], strides = [1, 1]} : vector<144x32xf32> to vector<16x32xf32>
    %115 = arith.truncf %114 : vector<16x32xf32> to vector<16x32xbf16>
    %c6_55 = arith.constant 6 : index
    %c0_56 = arith.constant 0 : index
    %c0_57 = arith.constant 0 : index
    %116 = vector.load %arg6[%c6_55, %c0_56, %c0_57] : memref<9x32x64xbf16, #tpu.memory_space<vmem>>, vector<1x32x64xbf16>
    %117 = vector.shape_cast %116 : vector<1x32x64xbf16> to vector<32x64xbf16>
    %cst_58 = arith.constant dense<0.000000e+00> : vector<16x64xf32>
    %118 = tpu.matmul %115, %117, %cst_58 {dimension_numbers = #tpu.dot_dimension_numbers<[1], [0], [0], [1], [0, 0, 1, 1], [], []>} : vector<16x32xbf16>, vector<32x64xbf16>, vector<16x64xf32> -> vector<16x64xf32>
    %119 = arith.addf %113, %118 : vector<16x64xf32>
    %120 = vector.extract_strided_slice %76 {offsets = [112, 0], sizes = [16, 32], strides = [1, 1]} : vector<144x32xf32> to vector<16x32xf32>
    %121 = arith.truncf %120 : vector<16x32xf32> to vector<16x32xbf16>
    %c7_59 = arith.constant 7 : index
    %c0_60 = arith.constant 0 : index
    %c0_61 = arith.constant 0 : index
    %122 = vector.load %arg6[%c7_59, %c0_60, %c0_61] : memref<9x32x64xbf16, #tpu.memory_space<vmem>>, vector<1x32x64xbf16>
    %123 = vector.shape_cast %122 : vector<1x32x64xbf16> to vector<32x64xbf16>
    %cst_62 = arith.constant dense<0.000000e+00> : vector<16x64xf32>
    %124 = tpu.matmul %121, %123, %cst_62 {dimension_numbers = #tpu.dot_dimension_numbers<[1], [0], [0], [1], [0, 0, 1, 1], [], []>} : vector<16x32xbf16>, vector<32x64xbf16>, vector<16x64xf32> -> vector<16x64xf32>
    %125 = arith.addf %119, %124 : vector<16x64xf32>
    %126 = vector.extract_strided_slice %76 {offsets = [128, 0], sizes = [16, 32], strides = [1, 1]} : vector<144x32xf32> to vector<16x32xf32>
    %127 = arith.truncf %126 : vector<16x32xf32> to vector<16x32xbf16>
    %c8_63 = arith.constant 8 : index
    %c0_64 = arith.constant 0 : index
    %c0_65 = arith.constant 0 : index
    %128 = vector.load %arg6[%c8_63, %c0_64, %c0_65] : memref<9x32x64xbf16, #tpu.memory_space<vmem>>, vector<1x32x64xbf16>
    %129 = vector.shape_cast %128 : vector<1x32x64xbf16> to vector<32x64xbf16>
    %cst_66 = arith.constant dense<0.000000e+00> : vector<16x64xf32>
    %130 = tpu.matmul %127, %129, %cst_66 {dimension_numbers = #tpu.dot_dimension_numbers<[1], [0], [0], [1], [0, 0, 1, 1], [], []>} : vector<16x32xbf16>, vector<32x64xbf16>, vector<16x64xf32> -> vector<16x64xf32>
    %131 = arith.addf %125, %130 : vector<16x64xf32>
    %c0_67 = arith.constant 0 : index
    %c0_68 = arith.constant 0 : index
    %132 = vector.load %arg7[%c0_67, %c0_68] : memref<1x64xf32, #tpu.memory_space<vmem>>, vector<1x64xf32>
    %133 = vector.broadcast %132 : vector<1x64xf32> to vector<16x64xf32>
    %134 = arith.addf %131, %133 : vector<16x64xf32>
    %cst_69 = arith.constant 0.000000e+00 : f32
    %135 = vector.broadcast %cst_69 : f32 to vector<16x64xf32>
    %136 = arith.maximumf %134, %135 : vector<16x64xf32>
    %137 = arith.truncf %136 : vector<16x64xf32> to vector<16x64xbf16>
    %c0_70 = arith.constant 0 : index
    %c0_71 = arith.constant 0 : index
    %c0_72 = arith.constant 0 : index
    %138 = vector.load %arg8[%c0_70, %c0_71, %c0_72] : memref<9x64x32xbf16, #tpu.memory_space<vmem>>, vector<1x64x32xbf16>
    %139 = vector.shape_cast %138 : vector<1x64x32xbf16> to vector<64x32xbf16>
    %cst_73 = arith.constant dense<0.000000e+00> : vector<16x32xf32>
    %140 = tpu.matmul %137, %139, %cst_73 {dimension_numbers = #tpu.dot_dimension_numbers<[1], [0], [0], [1], [0, 0, 1, 1], [], []>} : vector<16x64xbf16>, vector<64x32xbf16>, vector<16x32xf32> -> vector<16x32xf32>
    %c1_74 = arith.constant 1 : index
    %c0_75 = arith.constant 0 : index
    %c0_76 = arith.constant 0 : index
    %141 = vector.load %arg8[%c1_74, %c0_75, %c0_76] : memref<9x64x32xbf16, #tpu.memory_space<vmem>>, vector<1x64x32xbf16>
    %142 = vector.shape_cast %141 : vector<1x64x32xbf16> to vector<64x32xbf16>
    %cst_77 = arith.constant dense<0.000000e+00> : vector<16x32xf32>
    %143 = tpu.matmul %137, %142, %cst_77 {dimension_numbers = #tpu.dot_dimension_numbers<[1], [0], [0], [1], [0, 0, 1, 1], [], []>} : vector<16x64xbf16>, vector<64x32xbf16>, vector<16x32xf32> -> vector<16x32xf32>
    %c2_78 = arith.constant 2 : index
    %c0_79 = arith.constant 0 : index
    %c0_80 = arith.constant 0 : index
    %144 = vector.load %arg8[%c2_78, %c0_79, %c0_80] : memref<9x64x32xbf16, #tpu.memory_space<vmem>>, vector<1x64x32xbf16>
    %145 = vector.shape_cast %144 : vector<1x64x32xbf16> to vector<64x32xbf16>
    %cst_81 = arith.constant dense<0.000000e+00> : vector<16x32xf32>
    %146 = tpu.matmul %137, %145, %cst_81 {dimension_numbers = #tpu.dot_dimension_numbers<[1], [0], [0], [1], [0, 0, 1, 1], [], []>} : vector<16x64xbf16>, vector<64x32xbf16>, vector<16x32xf32> -> vector<16x32xf32>
    %c3_82 = arith.constant 3 : index
    %c0_83 = arith.constant 0 : index
    %c0_84 = arith.constant 0 : index
    %147 = vector.load %arg8[%c3_82, %c0_83, %c0_84] : memref<9x64x32xbf16, #tpu.memory_space<vmem>>, vector<1x64x32xbf16>
    %148 = vector.shape_cast %147 : vector<1x64x32xbf16> to vector<64x32xbf16>
    %cst_85 = arith.constant dense<0.000000e+00> : vector<16x32xf32>
    %149 = tpu.matmul %137, %148, %cst_85 {dimension_numbers = #tpu.dot_dimension_numbers<[1], [0], [0], [1], [0, 0, 1, 1], [], []>} : vector<16x64xbf16>, vector<64x32xbf16>, vector<16x32xf32> -> vector<16x32xf32>
    %c4_86 = arith.constant 4 : index
    %c0_87 = arith.constant 0 : index
    %c0_88 = arith.constant 0 : index
    %150 = vector.load %arg8[%c4_86, %c0_87, %c0_88] : memref<9x64x32xbf16, #tpu.memory_space<vmem>>, vector<1x64x32xbf16>
    %151 = vector.shape_cast %150 : vector<1x64x32xbf16> to vector<64x32xbf16>
    %cst_89 = arith.constant dense<0.000000e+00> : vector<16x32xf32>
    %152 = tpu.matmul %137, %151, %cst_89 {dimension_numbers = #tpu.dot_dimension_numbers<[1], [0], [0], [1], [0, 0, 1, 1], [], []>} : vector<16x64xbf16>, vector<64x32xbf16>, vector<16x32xf32> -> vector<16x32xf32>
    %c5_90 = arith.constant 5 : index
    %c0_91 = arith.constant 0 : index
    %c0_92 = arith.constant 0 : index
    %153 = vector.load %arg8[%c5_90, %c0_91, %c0_92] : memref<9x64x32xbf16, #tpu.memory_space<vmem>>, vector<1x64x32xbf16>
    %154 = vector.shape_cast %153 : vector<1x64x32xbf16> to vector<64x32xbf16>
    %cst_93 = arith.constant dense<0.000000e+00> : vector<16x32xf32>
    %155 = tpu.matmul %137, %154, %cst_93 {dimension_numbers = #tpu.dot_dimension_numbers<[1], [0], [0], [1], [0, 0, 1, 1], [], []>} : vector<16x64xbf16>, vector<64x32xbf16>, vector<16x32xf32> -> vector<16x32xf32>
    %c6_94 = arith.constant 6 : index
    %c0_95 = arith.constant 0 : index
    %c0_96 = arith.constant 0 : index
    %156 = vector.load %arg8[%c6_94, %c0_95, %c0_96] : memref<9x64x32xbf16, #tpu.memory_space<vmem>>, vector<1x64x32xbf16>
    %157 = vector.shape_cast %156 : vector<1x64x32xbf16> to vector<64x32xbf16>
    %cst_97 = arith.constant dense<0.000000e+00> : vector<16x32xf32>
    %158 = tpu.matmul %137, %157, %cst_97 {dimension_numbers = #tpu.dot_dimension_numbers<[1], [0], [0], [1], [0, 0, 1, 1], [], []>} : vector<16x64xbf16>, vector<64x32xbf16>, vector<16x32xf32> -> vector<16x32xf32>
    %c7_98 = arith.constant 7 : index
    %c0_99 = arith.constant 0 : index
    %c0_100 = arith.constant 0 : index
    %159 = vector.load %arg8[%c7_98, %c0_99, %c0_100] : memref<9x64x32xbf16, #tpu.memory_space<vmem>>, vector<1x64x32xbf16>
    %160 = vector.shape_cast %159 : vector<1x64x32xbf16> to vector<64x32xbf16>
    %cst_101 = arith.constant dense<0.000000e+00> : vector<16x32xf32>
    %161 = tpu.matmul %137, %160, %cst_101 {dimension_numbers = #tpu.dot_dimension_numbers<[1], [0], [0], [1], [0, 0, 1, 1], [], []>} : vector<16x64xbf16>, vector<64x32xbf16>, vector<16x32xf32> -> vector<16x32xf32>
    %c8_102 = arith.constant 8 : index
    %c0_103 = arith.constant 0 : index
    %c0_104 = arith.constant 0 : index
    %162 = vector.load %arg8[%c8_102, %c0_103, %c0_104] : memref<9x64x32xbf16, #tpu.memory_space<vmem>>, vector<1x64x32xbf16>
    %163 = vector.shape_cast %162 : vector<1x64x32xbf16> to vector<64x32xbf16>
    %cst_105 = arith.constant dense<0.000000e+00> : vector<16x32xf32>
    %164 = tpu.matmul %137, %163, %cst_105 {dimension_numbers = #tpu.dot_dimension_numbers<[1], [0], [0], [1], [0, 0, 1, 1], [], []>} : vector<16x64xbf16>, vector<64x32xbf16>, vector<16x32xf32> -> vector<16x32xf32>
    %165 = tpu.concatenate %140, %143, %146, %149, %152, %155, %158, %161, %164 in 0 : vector<16x32xf32>, vector<16x32xf32>, vector<16x32xf32>, vector<16x32xf32>, vector<16x32xf32>, vector<16x32xf32>, vector<16x32xf32>, vector<16x32xf32>, vector<16x32xf32> -> vector<144x32xf32>
    %c0_106 = arith.constant 0 : index
    %c0_107 = arith.constant 0 : index
    %166 = vector.load %arg9[%c0_106, %c0_107] : memref<64x144xbf16, #tpu.memory_space<vmem>>, vector<64x144xbf16>
    %167 = arith.truncf %165 : vector<144x32xf32> to vector<144x32xbf16>
    %cst_108 = arith.constant dense<0.000000e+00> : vector<64x32xf32>
    %168 = tpu.matmul %166, %167, %cst_108 {dimension_numbers = #tpu.dot_dimension_numbers<[1], [0], [0], [1], [0, 0, 1, 1], [], []>} : vector<64x144xbf16>, vector<144x32xbf16>, vector<64x32xf32> -> vector<64x32xf32>
    %c0_109 = arith.constant 0 : index
    %c0_110 = arith.constant 0 : index
    %169 = vector.load %arg10[%c0_109, %c0_110] : memref<1x32xf32, #tpu.memory_space<vmem>>, vector<1x32xf32>
    %170 = vector.broadcast %169 : vector<1x32xf32> to vector<64x32xf32>
    %171 = arith.addf %168, %170 : vector<64x32xf32>
    %cst_111 = arith.constant 0.000000e+00 : f32
    %172 = vector.broadcast %cst_111 : f32 to vector<64x32xf32>
    %173 = arith.maximumf %171, %172 : vector<64x32xf32>
    %174 = arith.truncf %173 : vector<64x32xf32> to vector<64x32xbf16>
    %c0_112 = arith.constant 0 : index
    %c0_113 = arith.constant 0 : index
    %175 = vector.load %arg11[%c0_112, %c0_113] : memref<32x9xbf16, #tpu.memory_space<vmem>>, vector<32x9xbf16>
    %cst_114 = arith.constant dense<0.000000e+00> : vector<64x9xf32>
    %176 = tpu.matmul %174, %175, %cst_114 {dimension_numbers = #tpu.dot_dimension_numbers<[1], [0], [0], [1], [0, 0, 1, 1], [], []>} : vector<64x32xbf16>, vector<32x9xbf16>, vector<64x9xf32> -> vector<64x9xf32>
    %177 = vector.extract_strided_slice %176 {offsets = [0, 0], sizes = [64, 1], strides = [1, 1]} : vector<64x9xf32> to vector<64x1xf32>
    %c0_115 = arith.constant 0 : index
    %c0_116 = arith.constant 0 : index
    %178 = vector.load %arg15[%c0_115, %c0_116] : memref<576x1xf32, #tpu.memory_space<vmem>>, vector<64x1xf32>
    tpu.vector_store %arg15[%c0_115, %c0_116], %177 {strides = array<i32>} : memref<576x1xf32, #tpu.memory_space<vmem>>, vector<64x1xf32>,
    %179 = vector.extract_strided_slice %176 {offsets = [0, 1], sizes = [64, 1], strides = [1, 1]} : vector<64x9xf32> to vector<64x1xf32>
    %c64 = arith.constant 64 : index
    %c0_117 = arith.constant 0 : index
    %180 = vector.load %arg15[%c64, %c0_117] : memref<576x1xf32, #tpu.memory_space<vmem>>, vector<64x1xf32>
    tpu.vector_store %arg15[%c64, %c0_117], %179 {strides = array<i32>} : memref<576x1xf32, #tpu.memory_space<vmem>>, vector<64x1xf32>,
    %181 = vector.extract_strided_slice %176 {offsets = [0, 2], sizes = [64, 1], strides = [1, 1]} : vector<64x9xf32> to vector<64x1xf32>
    %c128 = arith.constant 128 : index
    %c0_118 = arith.constant 0 : index
    %182 = vector.load %arg15[%c128, %c0_118] : memref<576x1xf32, #tpu.memory_space<vmem>>, vector<64x1xf32>
    tpu.vector_store %arg15[%c128, %c0_118], %181 {strides = array<i32>} : memref<576x1xf32, #tpu.memory_space<vmem>>, vector<64x1xf32>,
    %183 = vector.extract_strided_slice %176 {offsets = [0, 3], sizes = [64, 1], strides = [1, 1]} : vector<64x9xf32> to vector<64x1xf32>
    %c192 = arith.constant 192 : index
    %c0_119 = arith.constant 0 : index
    %184 = vector.load %arg15[%c192, %c0_119] : memref<576x1xf32, #tpu.memory_space<vmem>>, vector<64x1xf32>
    tpu.vector_store %arg15[%c192, %c0_119], %183 {strides = array<i32>} : memref<576x1xf32, #tpu.memory_space<vmem>>, vector<64x1xf32>,
    %185 = vector.extract_strided_slice %176 {offsets = [0, 4], sizes = [64, 1], strides = [1, 1]} : vector<64x9xf32> to vector<64x1xf32>
    %c256 = arith.constant 256 : index
    %c0_120 = arith.constant 0 : index
    %186 = vector.load %arg15[%c256, %c0_120] : memref<576x1xf32, #tpu.memory_space<vmem>>, vector<64x1xf32>
    tpu.vector_store %arg15[%c256, %c0_120], %185 {strides = array<i32>} : memref<576x1xf32, #tpu.memory_space<vmem>>, vector<64x1xf32>,
    %187 = vector.extract_strided_slice %176 {offsets = [0, 5], sizes = [64, 1], strides = [1, 1]} : vector<64x9xf32> to vector<64x1xf32>
    %c320 = arith.constant 320 : index
    %c0_121 = arith.constant 0 : index
    %188 = vector.load %arg15[%c320, %c0_121] : memref<576x1xf32, #tpu.memory_space<vmem>>, vector<64x1xf32>
    tpu.vector_store %arg15[%c320, %c0_121], %187 {strides = array<i32>} : memref<576x1xf32, #tpu.memory_space<vmem>>, vector<64x1xf32>,
    %189 = vector.extract_strided_slice %176 {offsets = [0, 6], sizes = [64, 1], strides = [1, 1]} : vector<64x9xf32> to vector<64x1xf32>
    %c384 = arith.constant 384 : index
    %c0_122 = arith.constant 0 : index
    %190 = vector.load %arg15[%c384, %c0_122] : memref<576x1xf32, #tpu.memory_space<vmem>>, vector<64x1xf32>
    tpu.vector_store %arg15[%c384, %c0_122], %189 {strides = array<i32>} : memref<576x1xf32, #tpu.memory_space<vmem>>, vector<64x1xf32>,
    %191 = vector.extract_strided_slice %176 {offsets = [0, 7], sizes = [64, 1], strides = [1, 1]} : vector<64x9xf32> to vector<64x1xf32>
    %c448 = arith.constant 448 : index
    %c0_123 = arith.constant 0 : index
    %192 = vector.load %arg15[%c448, %c0_123] : memref<576x1xf32, #tpu.memory_space<vmem>>, vector<64x1xf32>
    tpu.vector_store %arg15[%c448, %c0_123], %191 {strides = array<i32>} : memref<576x1xf32, #tpu.memory_space<vmem>>, vector<64x1xf32>,
    %193 = vector.extract_strided_slice %176 {offsets = [0, 8], sizes = [64, 1], strides = [1, 1]} : vector<64x9xf32> to vector<64x1xf32>
    %c512 = arith.constant 512 : index
    %c0_124 = arith.constant 0 : index
    %194 = vector.load %arg15[%c512, %c0_124] : memref<576x1xf32, #tpu.memory_space<vmem>>, vector<64x1xf32>
    tpu.vector_store %arg15[%c512, %c0_124], %193 {strides = array<i32>} : memref<576x1xf32, #tpu.memory_space<vmem>>, vector<64x1xf32>,
    %c0_125 = arith.constant 0 : index
    %c0_126 = arith.constant 0 : index
    %195 = vector.load %arg12[%c0_125, %c0_126] : memref<256x576xbf16, #tpu.memory_space<vmem>>, vector<256x576xbf16>
    %c0_127 = arith.constant 0 : index
    %c0_128 = arith.constant 0 : index
    %196 = vector.load %arg15[%c0_127, %c0_128] : memref<576x1xf32, #tpu.memory_space<vmem>>, vector<576x1xf32>
    %197 = arith.truncf %196 : vector<576x1xf32> to vector<576x1xbf16>
    %cst_129 = arith.constant dense<0.000000e+00> : vector<256x1xf32>
    %198 = tpu.matmul %195, %197, %cst_129 {dimension_numbers = #tpu.dot_dimension_numbers<[1], [0], [0], [1], [0, 0, 1, 1], [], []>} : vector<256x576xbf16>, vector<576x1xbf16>, vector<256x1xf32> -> vector<256x1xf32>
    %c0_130 = arith.constant 0 : index
    %c0_131 = arith.constant 0 : index
    %199 = vector.load %arg13[%c0_130, %c0_131] : memref<1x1xf32, #tpu.memory_space<vmem>>, vector<1x1xf32>
    %200 = vector.broadcast %199 : vector<1x1xf32> to vector<256x1xf32>
    %201 = arith.addf %198, %200 : vector<256x1xf32>
    %202 = arith.negf %201 : vector<256x1xf32>
    %203 = math.exp %202 : vector<256x1xf32>
    %cst_132 = arith.constant 1.000000e+00 : f32
    %204 = vector.broadcast %cst_132 : f32 to vector<256x1xf32>
    %205 = arith.addf %204, %203 : vector<256x1xf32>
    %206 = arith.divf %204, %205 : vector<256x1xf32>
    %c0_133 = arith.constant 0 : index
    %c0_134 = arith.constant 0 : index
    %c0_135 = arith.constant 0 : index
    %207 = vector.load %arg14[%c0_133, %c0_134, %c0_135] : memref<1x256x1xf32, #tpu.memory_space<vmem>>, vector<1x256x1xf32>
    %208 = vector.shape_cast %207 : vector<1x256x1xf32> to vector<256x1xf32>
    %209 = vector.shape_cast %206 : vector<256x1xf32> to vector<1x256x1xf32>
    tpu.vector_store %arg14[%c0_133, %c0_134, %c0_135], %209 {strides = array<i32>} : memref<1x256x1xf32, #tpu.memory_space<vmem>>, vector<1x256x1xf32>,
    return
  }
  func.func @transform_0(%arg0: i32) -> (i32, i32, i32) {
    %c0_i32 = arith.constant 0 : i32
    %c0_i32_0 = arith.constant 0 : i32
    %c0_i32_1 = arith.constant 0 : i32
    return %arg0, %c0_i32, %c0_i32_0 : i32, i32, i32
  }
  func.func @transform_1(%arg0: i32) -> (i32, i32) {
    %c0_i32 = arith.constant 0 : i32
    %c0_i32_0 = arith.constant 0 : i32
    %c0_i32_1 = arith.constant 0 : i32
    return %c0_i32, %c0_i32_0 : i32, i32
  }
  func.func @transform_2(%arg0: i32) -> (i32, i32, i32) {
    %c0_i32 = arith.constant 0 : i32
    %c0_i32_0 = arith.constant 0 : i32
    %c0_i32_1 = arith.constant 0 : i32
    %c0_i32_2 = arith.constant 0 : i32
    return %c0_i32, %c0_i32_0, %c0_i32_1 : i32, i32, i32
  }
  func.func @transform_3(%arg0: i32) -> (i32, i32) {
    %c0_i32 = arith.constant 0 : i32
    %c0_i32_0 = arith.constant 0 : i32
    %c0_i32_1 = arith.constant 0 : i32
    return %c0_i32, %c0_i32_0 : i32, i32
  }
  func.func @transform_4(%arg0: i32) -> (i32, i32) {
    %c0_i32 = arith.constant 0 : i32
    %c0_i32_0 = arith.constant 0 : i32
    %c0_i32_1 = arith.constant 0 : i32
    return %c0_i32, %c0_i32_0 : i32, i32
  }
  func.func @transform_5(%arg0: i32) -> (i32, i32, i32) {
    %c0_i32 = arith.constant 0 : i32
    %c0_i32_0 = arith.constant 0 : i32
    %c0_i32_1 = arith.constant 0 : i32
    %c0_i32_2 = arith.constant 0 : i32
    return %c0_i32, %c0_i32_0, %c0_i32_1 : i32, i32, i32
  }
  func.func @transform_6(%arg0: i32) -> (i32, i32) {
    %c0_i32 = arith.constant 0 : i32
    %c0_i32_0 = arith.constant 0 : i32
    %c0_i32_1 = arith.constant 0 : i32
    return %c0_i32, %c0_i32_0 : i32, i32
  }
  func.func @transform_7(%arg0: i32) -> (i32, i32, i32) {
    %c0_i32 = arith.constant 0 : i32
    %c0_i32_0 = arith.constant 0 : i32
    %c0_i32_1 = arith.constant 0 : i32
    %c0_i32_2 = arith.constant 0 : i32
    return %c0_i32, %c0_i32_0, %c0_i32_1 : i32, i32, i32
  }
  func.func @transform_8(%arg0: i32) -> (i32, i32) {
    %c0_i32 = arith.constant 0 : i32
    %c0_i32_0 = arith.constant 0 : i32
    %c0_i32_1 = arith.constant 0 : i32
    return %c0_i32, %c0_i32_0 : i32, i32
  }
  func.func @transform_9(%arg0: i32) -> (i32, i32) {
    %c0_i32 = arith.constant 0 : i32
    %c0_i32_0 = arith.constant 0 : i32
    %c0_i32_1 = arith.constant 0 : i32
    return %c0_i32, %c0_i32_0 : i32, i32
  }
  func.func @transform_10(%arg0: i32) -> (i32, i32) {
    %c0_i32 = arith.constant 0 : i32
    %c0_i32_0 = arith.constant 0 : i32
    %c0_i32_1 = arith.constant 0 : i32
    return %c0_i32, %c0_i32_0 : i32, i32
  }
  func.func @transform_11(%arg0: i32) -> (i32, i32) {
    %c0_i32 = arith.constant 0 : i32
    %c0_i32_0 = arith.constant 0 : i32
    %c0_i32_1 = arith.constant 0 : i32
    return %c0_i32, %c0_i32_0 : i32, i32
  }
  func.func @transform_12(%arg0: i32) -> (i32, i32) {
    %c0_i32 = arith.constant 0 : i32
    %c0_i32_0 = arith.constant 0 : i32
    %c0_i32_1 = arith.constant 0 : i32
    return %c0_i32, %c0_i32_0 : i32, i32
  }
  func.func @transform_13(%arg0: i32) -> (i32, i32, i32) {
    %c0_i32 = arith.constant 0 : i32
    %c0_i32_0 = arith.constant 0 : i32
    %c0_i32_1 = arith.constant 0 : i32
    return %arg0, %c0_i32, %c0_i32_0 : i32, i32, i32
  }
}

</mosaic_0001>

<llo_original>
// kernel: cae_forward.1
$region0: #{cae_forward.1}
  #allocation0 [shape = 'u32[]', space=smem, size = 0x4, offset = 0x4, fixed_abs, tag = 'smem constant byte address 0x4 - core index']
  #allocation1 [shape = 'u32[144,128]{1,0:T(1,128)}', space=vmem, size = 0x12000, scoped, tag = 'internal scratch']
  #allocation2 [shape = 'f32[576,1]{1,0:T(8,128)}', space=vmem, size = 0x48000, scoped, tag = 'scratch operand']
  #allocation3 [shape = 'f32[1,1]{1,0:T(1,128)S(1)}', space=vmem, size = 0x200, scoped, tag = 'scoped memory for cae_forward.1']
  %s0 = inlined_call_operand.vmem [shape: f32[2,256,1], index: 0, kind: input, shape index: {}]
  %s1 = inlined_call_operand.vmem [shape: bf16[576,256], index: 1, kind: input, shape index: {}]
  %s2 = inlined_call_operand.vmem [shape: f32[9,1,32], index: 2, kind: input, shape index: {}]
  %s3 = inlined_call_operand.vmem [shape: f32[1,32], index: 3, kind: input, shape index: {}]
  %s4 = inlined_call_operand.vmem [shape: bf16[144,64], index: 4, kind: input, shape index: {}]
  %s5 = inlined_call_operand.vmem [shape: bf16[9,32,64], index: 5, kind: input, shape index: {}]
  %s6 = inlined_call_operand.vmem [shape: f32[1,64], index: 6, kind: input, shape index: {}]
  %s7 = inlined_call_operand.vmem [shape: bf16[9,64,32], index: 7, kind: input, shape index: {}]
  %s8 = inlined_call_operand.vmem [shape: bf16[64,144], index: 8, kind: input, shape index: {}]
  %s9 = inlined_call_operand.vmem [shape: f32[1,32], index: 9, kind: input, shape index: {}]
  %s10 = inlined_call_operand.vmem [shape: bf16[32,9], index: 10, kind: input, shape index: {}]
  %s11 = inlined_call_operand.vmem [shape: bf16[256,576], index: 11, kind: input, shape index: {}]
  %s12 = inlined_call_operand.<no memory space> [shape: f32[1,1], index: 12, kind: input, shape index: {}]
  %s13 = inlined_call_operand.vmem [shape: f32[2,256,1], index: 13, kind: output, shape index: {}]
  %s14 = sld [smem:[#allocation0]]
  $region85: #{cae_forward.1} parent=0
    _
  %s16 = ssub.s32 1, %s14
  %s17 = scalar_select 0, %s16, %s14
  %v18 = vstv %s12
  %19 = vst [vmem:[#allocation3] sm:$0x1] %v18
  loop: start=0, step=1, limit=4
  $region2: #{cae_forward.1} parent=0 // loop_pre_header
    _
  $region3: #{cae_forward.1} parent=0 // loop_header
    %s21 = sphi 0, %s25
    %p22 = scmp.ge.s32.totalorder %s21, 4
    %s31 = sphi 0, %s33
    %s34 = sphi 0, %s31
    %s35 = sphi 0, %s34
    %s51 = sphi 0, %s35
    %s55 = sphi 0, %s55
    %s57 = sphi 0, %s55
    %s58 = sphi 0, %s57
    %s72 = sphi 0, %s58
    %s76 = sphi 0, %s76
    %s78 = sphi 0, %s76
    %s79 = sphi 0, %s78
    %s93 = sphi 0, %s79
    %s97 = sphi 0, %s97
    %s99 = sphi 0, %s97
    %s100 = sphi 0, %s99
    %s114 = sphi 0, %s100
    %s118 = sphi 0, %s118
    %s120 = sphi 0, %s118
    %s121 = sphi 0, %s120
    %s135 = sphi 0, %s121
    %s139 = sphi 0, %s139
    %s141 = sphi 0, %s139
    %s142 = sphi 0, %s141
    %s156 = sphi 0, %s142
    %s160 = sphi 0, %s160
    %s162 = sphi 0, %s160
    %s163 = sphi 0, %s162
    %s177 = sphi 0, %s163
    %s181 = sphi 0, %s181
    %s183 = sphi 0, %s181
    %s184 = sphi 0, %s183
    %s198 = sphi 0, %s184
    %s202 = sphi 0, %s202
    %s204 = sphi 0, %s202
    %s205 = sphi 0, %s204
    %s219 = sphi 0, %s205
    %s223 = sphi 0, %s223
    %s225 = sphi 0, %s223
    %s226 = sphi 0, %s225
    %s240 = sphi 0, %s226
    %s244 = sphi 0, %s244
    %s246 = sphi 0, %s244
    %s247 = sphi 0, %s246
    %s261 = sphi 0, %s247
    %s265 = sphi 0, %s265
    %s267 = sphi 0, %s265
    %s268 = sphi 0, %s267
    %s282 = sphi 0, %s268
    %s286 = sphi 0, %s286
    %s288 = sphi 0, %s286
    %s289 = sphi 0, %s288
    %s303 = sphi 0, %s289
    %s309 = sphi 0, %s311
    %s312 = sphi 0, %s309
    %s313 = sphi 0, %s312
    %s329 = sphi 0, %s313
  $region4: #{cae_forward.1} parent=0 // loop_header_branch
    %24 = sbr.rel (%p22) target = $region8
  $region5: #{cae_forward.1} parent=0 // loop_body
    %s26 = ssub.s32 %s21, 1
    %s27 = ssub.s32 %s21, 2
    %s28 = sadd.s32 %s21, 1
    %s29 = ssub.s32 %s21, %s28
    %p30 = scmp.eq.s32.totalorder %s29, 0
    %s32 = sadd.s32 %s31, 1
    %s33 = scalar_select %p30, %s31, %s32
    %p36 = pneg %p30
    %p37 = scmp.eq.s32.totalorder %s21, 1
    %p38 = por %p36, %p37
    %p39 = scmp.ne.s32.totalorder %s31, %s34
    %p40 = scmp.eq.s32.totalorder %s21, 0
    %p41 = por %p39, %p40
    %p42 = scmp.ne.s32.totalorder %s31, %s34
    %p43 = scmp.eq.s32.totalorder %s26, 1
    %p44 = por %p42, %p43
    %p45 = scmp.ne.s32.totalorder %s34, %s35
    %p46 = scmp.eq.s32.totalorder %s26, 0
    %p47 = por %p45, %p46
    %p48 = scmp.ne.s32.totalorder %s34, %s35
    %p49 = scmp.eq.s32.totalorder %s27, 1
    %p50 = por %p48, %p49
    %p52 = scmp.ne.s32.totalorder %s35, %s51
    %p53 = scmp.eq.s32.totalorder %s27, 0
    %p54 = por %p52, %p53
    %s56 = sadd.s32 %s55, 1
    %p59 = scmp.eq.s32.totalorder %s21, 1
    %p60 = scmp.ne.s32.totalorder %s55, %s57
    %p61 = scmp.eq.s32.totalorder %s21, 0
    %p62 = por %p60, %p61
    %p63 = scmp.ne.s32.totalorder %s55, %s57
    %p64 = scmp.eq.s32.totalorder %s26, 1
    %p65 = por %p63, %p64
    %p66 = scmp.ne.s32.totalorder %s57, %s58
    %p67 = scmp.eq.s32.totalorder %s26, 0
    %p68 = por %p66, %p67
    %p69 = scmp.ne.s32.totalorder %s57, %s58
    %p70 = scmp.eq.s32.totalorder %s27, 1
    %p71 = por %p69, %p70
    %p73 = scmp.ne.s32.totalorder %s58, %s72
    %p74 = scmp.eq.s32.totalorder %s27, 0
    %p75 = por %p73, %p74
    %s77 = sadd.s32 %s76, 1
    %p80 = scmp.eq.s32.totalorder %s21, 1
    %p81 = scmp.ne.s32.totalorder %s76, %s78
    %p82 = scmp.eq.s32.totalorder %s21, 0
    %p83 = por %p81, %p82
    %p84 = scmp.ne.s32.totalorder %s76, %s78
    %p85 = scmp.eq.s32.totalorder %s26, 1
    %p86 = por %p84, %p85
    %p87 = scmp.ne.s32.totalorder %s78, %s79
    %p88 = scmp.eq.s32.totalorder %s26, 0
    %p89 = por %p87, %p88
    %p90 = scmp.ne.s32.totalorder %s78, %s79
    %p91 = scmp.eq.s32.totalorder %s27, 1
    %p92 = por %p90, %p91
    %p94 = scmp.ne.s32.totalorder %s79, %s93
    %p95 = scmp.eq.s32.totalorder %s27, 0
    %p96 = por %p94, %p95
    %s98 = sadd.s32 %s97, 1
    %p101 = scmp.eq.s32.totalorder %s21, 1
    %p102 = scmp.ne.s32.totalorder %s97, %s99
    %p103 = scmp.eq.s32.totalorder %s21, 0
    %p104 = por %p102, %p103
    %p105 = scmp.ne.s32.totalorder %s97, %s99
    %p106 = scmp.eq.s32.totalorder %s26, 1
    %p107 = por %p105, %p106
    %p108 = scmp.ne.s32.totalorder %s99, %s100
    %p109 = scmp.eq.s32.totalorder %s26, 0
    %p110 = por %p108, %p109
    %p111 = scmp.ne.s32.totalorder %s99, %s100
    %p112 = scmp.eq.s32.totalorder %s27, 1
    %p113 = por %p111, %p112
    %p115 = scmp.ne.s32.totalorder %s100, %s114
    %p116 = scmp.eq.s32.totalorder %s27, 0
    %p117 = por %p115, %p116
    %s119 = sadd.s32 %s118, 1
    %p122 = scmp.eq.s32.totalorder %s21, 1
    %p123 = scmp.ne.s32.totalorder %s118, %s120
    %p124 = scmp.eq.s32.totalorder %s21, 0
    %p125 = por %p123, %p124
    %p126 = scmp.ne.s32.totalorder %s118, %s120
    %p127 = scmp.eq.s32.totalorder %s26, 1
    %p128 = por %p126, %p127
    %p129 = scmp.ne.s32.totalorder %s120, %s121
    %p130 = scmp.eq.s32.totalorder %s26, 0
    %p131 = por %p129, %p130
    %p132 = scmp.ne.s32.totalorder %s120, %s121
    %p133 = scmp.eq.s32.totalorder %s27, 1
    %p134 = por %p132, %p133
    %p136 = scmp.ne.s32.totalorder %s121, %s135
    %p137 = scmp.eq.s32.totalorder %s27, 0
    %p138 = por %p136, %p137
    %s140 = sadd.s32 %s139, 1
    %p143 = scmp.eq.s32.totalorder %s21, 1
    %p144 = scmp.ne.s32.totalorder %s139, %s141
    %p145 = scmp.eq.s32.totalorder %s21, 0
    %p146 = por %p144, %p145
    %p147 = scmp.ne.s32.totalorder %s139, %s141
    %p148 = scmp.eq.s32.totalorder %s26, 1
    %p149 = por %p147, %p148
    %p150 = scmp.ne.s32.totalorder %s141, %s142
    %p151 = scmp.eq.s32.totalorder %s26, 0
    %p152 = por %p150, %p151
    %p153 = scmp.ne.s32.totalorder %s141, %s142
    %p154 = scmp.eq.s32.totalorder %s27, 1
    %p155 = por %p153, %p154
    %p157 = scmp.ne.s32.totalorder %s142, %s156
    %p158 = scmp.eq.s32.totalorder %s27, 0
    %p159 = por %p157, %p158
    %s161 = sadd.s32 %s160, 1
    %p164 = scmp.eq.s32.totalorder %s21, 1
    %p165 = scmp.ne.s32.totalorder %s160, %s162
    %p166 = scmp.eq.s32.totalorder %s21, 0
    %p167 = por %p165, %p166
    %p168 = scmp.ne.s32.totalorder %s160, %s162
    %p169 = scmp.eq.s32.totalorder %s26, 1
    %p170 = por %p168, %p169
    %p171 = scmp.ne.s32.totalorder %s162, %s163
    %p172 = scmp.eq.s32.totalorder %s26, 0
    %p173 = por %p171, %p172
    %p174 = scmp.ne.s32.totalorder %s162, %s163
    %p175 = scmp.eq.s32.totalorder %s27, 1
    %p176 = por %p174, %p175
    %p178 = scmp.ne.s32.totalorder %s163, %s177
    %p179 = scmp.eq.s32.totalorder %s27, 0
    %p180 = por %p178, %p179
    %s182 = sadd.s32 %s181, 1
    %p185 = scmp.eq.s32.totalorder %s21, 1
    %p186 = scmp.ne.s32.totalorder %s181, %s183
    %p187 = scmp.eq.s32.totalorder %s21, 0
    %p188 = por %p186, %p187
    %p189 = scmp.ne.s32.totalorder %s181, %s183
    %p190 = scmp.eq.s32.totalorder %s26, 1
    %p191 = por %p189, %p190
    %p192 = scmp.ne.s32.totalorder %s183, %s184
    %p193 = scmp.eq.s32.totalorder %s26, 0
    %p194 = por %p192, %p193
    %p195 = scmp.ne.s32.totalorder %s183, %s184
    %p196 = scmp.eq.s32.totalorder %s27, 1
    %p197 = por %p195, %p196
    %p199 = scmp.ne.s32.totalorder %s184, %s198
    %p200 = scmp.eq.s32.totalorder %s27, 0
    %p201 = por %p199, %p200
    %s203 = sadd.s32 %s202, 1
    %p206 = scmp.eq.s32.totalorder %s21, 1
    %p207 = scmp.ne.s32.totalorder %s202, %s204
    %p208 = scmp.eq.s32.totalorder %s21, 0
    %p209 = por %p207, %p208
    %p210 = scmp.ne.s32.totalorder %s202, %s204
    %p211 = scmp.eq.s32.totalorder %s26, 1
    %p212 = por %p210, %p211
    %p213 = scmp.ne.s32.totalorder %s204, %s205
    %p214 = scmp.eq.s32.totalorder %s26, 0
    %p215 = por %p213, %p214
    %p216 = scmp.ne.s32.totalorder %s204, %s205
    %p217 = scmp.eq.s32.totalorder %s27, 1
    %p218 = por %p216, %p217
    %p220 = scmp.ne.s32.totalorder %s205, %s219
    %p221 = scmp.eq.s32.totalorder %s27, 0
    %p222 = por %p220, %p221
    %s224 = sadd.s32 %s223, 1
    %p227 = scmp.eq.s32.totalorder %s21, 1
    %p228 = scmp.ne.s32.totalorder %s223, %s225
    %p229 = scmp.eq.s32.totalorder %s21, 0
    %p230 = por %p228, %p229
    %p231 = scmp.ne.s32.totalorder %s223, %s225
    %p232 = scmp.eq.s32.totalorder %s26, 1
    %p233 = por %p231, %p232
    %p234 = scmp.ne.s32.totalorder %s225, %s226
    %p235 = scmp.eq.s32.totalorder %s26, 0
    %p236 = por %p234, %p235
    %p237 = scmp.ne.s32.totalorder %s225, %s226
    %p238 = scmp.eq.s32.totalorder %s27, 1
    %p239 = por %p237, %p238
    %p241 = scmp.ne.s32.totalorder %s226, %s240
    %p242 = scmp.eq.s32.totalorder %s27, 0
    %p243 = por %p241, %p242
    %s245 = sadd.s32 %s244, 1
    %p248 = scmp.eq.s32.totalorder %s21, 1
    %p249 = scmp.ne.s32.totalorder %s244, %s246
    %p250 = scmp.eq.s32.totalorder %s21, 0
    %p251 = por %p249, %p250
    %p252 = scmp.ne.s32.totalorder %s244, %s246
    %p253 = scmp.eq.s32.totalorder %s26, 1
    %p254 = por %p252, %p253
    %p255 = scmp.ne.s32.totalorder %s246, %s247
    %p256 = scmp.eq.s32.totalorder %s26, 0
    %p257 = por %p255, %p256
    %p258 = scmp.ne.s32.totalorder %s246, %s247
    %p259 = scmp.eq.s32.totalorder %s27, 1
    %p260 = por %p258, %p259
    %p262 = scmp.ne.s32.totalorder %s247, %s261
    %p263 = scmp.eq.s32.totalorder %s27, 0
    %p264 = por %p262, %p263
    %s266 = sadd.s32 %s265, 1
    %p269 = scmp.eq.s32.totalorder %s21, 1
    %p270 = scmp.ne.s32.totalorder %s265, %s267
    %p271 = scmp.eq.s32.totalorder %s21, 0
    %p272 = por %p270, %p271
    %p273 = scmp.ne.s32.totalorder %s265, %s267
    %p274 = scmp.eq.s32.totalorder %s26, 1
    %p275 = por %p273, %p274
    %p276 = scmp.ne.s32.totalorder %s267, %s268
    %p277 = scmp.eq.s32.totalorder %s26, 0
    %p278 = por %p276, %p277
    %p279 = scmp.ne.s32.totalorder %s267, %s268
    %p280 = scmp.eq.s32.totalorder %s27, 1
    %p281 = por %p279, %p280
    %p283 = scmp.ne.s32.totalorder %s268, %s282
    %p284 = scmp.eq.s32.totalorder %s27, 0
    %p285 = por %p283, %p284
    %s287 = sadd.s32 %s286, 1
    %p290 = scmp.eq.s32.totalorder %s21, 1
    %p291 = scmp.ne.s32.totalorder %s286, %s288
    %p292 = scmp.eq.s32.totalorder %s21, 0
    %p293 = por %p291, %p292
    %p294 = scmp.ne.s32.totalorder %s286, %s288
    %p295 = scmp.eq.s32.totalorder %s26, 1
    %p296 = por %p294, %p295
    %p297 = scmp.ne.s32.totalorder %s288, %s289
    %p298 = scmp.eq.s32.totalorder %s26, 0
    %p299 = por %p297, %p298
    %p300 = scmp.ne.s32.totalorder %s288, %s289
    %p301 = scmp.eq.s32.totalorder %s27, 1
    %p302 = por %p300, %p301
    %p304 = scmp.ne.s32.totalorder %s289, %s303
    %p305 = scmp.eq.s32.totalorder %s27, 0
    %p306 = por %p304, %p305
    %s307 = ssub.s32 %s21, %s28
    %p308 = scmp.eq.s32.totalorder %s307, 0
    %s310 = sadd.s32 %s309, 1
    %s311 = scalar_select %p308, %s309, %s310
    %p314 = pneg %p308
    %p315 = scmp.eq.s32.totalorder %s21, 1
    %p316 = por %p314, %p315
    %p317 = scmp.ne.s32.totalorder %s309, %s312
    %p318 = scmp.eq.s32.totalorder %s21, 0
    %p319 = por %p317, %p318
    %p320 = scmp.ne.s32.totalorder %s309, %s312
    %p321 = scmp.eq.s32.totalorder %s26, 1
    %p322 = por %p320, %p321
    %p323 = scmp.ne.s32.totalorder %s312, %s313
    %p324 = scmp.eq.s32.totalorder %s26, 0
    %p325 = por %p323, %p324
    %p326 = scmp.ne.s32.totalorder %s312, %s313
    %p327 = scmp.eq.s32.totalorder %s27, 1
    %p328 = por %p326, %p327
    %p330 = scmp.ne.s32.totalorder %s313, %s329
    %p331 = scmp.eq.s32.totalorder %s27, 0
    %p332 = por %p330, %p331
    %p333 = scmp.le.s32.totalorder 1, %s21
    %p334 = scmp.lt.s32.totalorder %s21, 3
    %p335 = pnand %p333, %p334
    %p336 = pneg %p335
    // Predicated region
    $region9: #{cae_forward.1} parent=5 // pred_check
      _
    $region10: #{cae_forward.1} parent=5 // pred_check_branch
      %338 = sbr.rel (%p335) target = $region12
    $region11: #{cae_forward.1} parent=5 // pred_region
      %s339 = ssub.s32 %s21, 1
      // Predicated region
      $region13: #{cae_forward.1} parent=11 // pred_check
        %p340 = pneg %p68
      $region14: #{cae_forward.1} parent=11 // pred_check_branch
        %342 = sbr.rel (%p340) target = $region16
      $region15: #{cae_forward.1} parent=11 // pred_region
        _
      $region16: #{cae_forward.1} parent=11 // pred_fallthru
        _
      // Predicated region
      $region17: #{cae_forward.1} parent=11 // pred_check
        %p343 = pneg %p89
      $region18: #{cae_forward.1} parent=11 // pred_check_branch
        %345 = sbr.rel (%p343) target = $region20
      $region19: #{cae_forward.1} parent=11 // pred_region
        _
      $region20: #{cae_forward.1} parent=11 // pred_fallthru
        _
      // Predicated region
      $region21: #{cae_forward.1} parent=11 // pred_check
        %p346 = pneg %p110
      $region22: #{cae_forward.1} parent=11 // pred_check_branch
        %348 = sbr.rel (%p346) target = $region24
      $region23: #{cae_forward.1} parent=11 // pred_region
        _
      $region24: #{cae_forward.1} parent=11 // pred_fallthru
        _
      // Predicated region
      $region25: #{cae_forward.1} parent=11 // pred_check
        %p349 = pneg %p131
      $region26: #{cae_forward.1} parent=11 // pred_check_branch
        %351 = sbr.rel (%p349) target = $region28
      $region27: #{cae_forward.1} parent=11 // pred_region
        _
      $region28: #{cae_forward.1} parent=11 // pred_fallthru
        _
      // Predicated region
      $region29: #{cae_forward.1} parent=11 // pred_check
        %p352 = pneg %p152
      $region30: #{cae_forward.1} parent=11 // pred_check_branch
        %354 = sbr.rel (%p352) target = $region32
      $region31: #{cae_forward.1} parent=11 // pred_region
        _
      $region32: #{cae_forward.1} parent=11 // pred_fallthru
        _
      // Predicated region
      $region33: #{cae_forward.1} parent=11 // pred_check
        %p355 = pneg %p173
      $region34: #{cae_forward.1} parent=11 // pred_check_branch
        %357 = sbr.rel (%p355) target = $region36
      $region35: #{cae_forward.1} parent=11 // pred_region
        _
      $region36: #{cae_forward.1} parent=11 // pred_fallthru
        _
      // Predicated region
      $region37: #{cae_forward.1} parent=11 // pred_check
        %p358 = pneg %p194
      $region38: #{cae_forward.1} parent=11 // pred_check_branch
        %360 = sbr.rel (%p358) target = $region40
      $region39: #{cae_forward.1} parent=11 // pred_region
        _
      $region40: #{cae_forward.1} parent=11 // pred_fallthru
        _
      // Predicated region
      $region41: #{cae_forward.1} parent=11 // pred_check
        %p361 = pneg %p215
      $region42: #{cae_forward.1} parent=11 // pred_check_branch
        %363 = sbr.rel (%p361) target = $region44
      $region43: #{cae_forward.1} parent=11 // pred_region
        _
      $region44: #{cae_forward.1} parent=11 // pred_fallthru
        _
      // Predicated region
      $region45: #{cae_forward.1} parent=11 // pred_check
        %p364 = pneg %p236
      $region46: #{cae_forward.1} parent=11 // pred_check_branch
        %366 = sbr.rel (%p364) target = $region48
      $region47: #{cae_forward.1} parent=11 // pred_region
        _
      $region48: #{cae_forward.1} parent=11 // pred_fallthru
        _
      // Predicated region
      $region49: #{cae_forward.1} parent=11 // pred_check
        %p367 = pneg %p257
      $region50: #{cae_forward.1} parent=11 // pred_check_branch
        %369 = sbr.rel (%p367) target = $region52
      $region51: #{cae_forward.1} parent=11 // pred_region
        _
      $region52: #{cae_forward.1} parent=11 // pred_fallthru
        _
      // Predicated region
      $region53: #{cae_forward.1} parent=11 // pred_check
        %p370 = pneg %p278
      $region54: #{cae_forward.1} parent=11 // pred_check_branch
        %372 = sbr.rel (%p370) target = $region56
      $region55: #{cae_forward.1} parent=11 // pred_region
        _
      $region56: #{cae_forward.1} parent=11 // pred_fallthru
        _
      // Predicated region
      $region57: #{cae_forward.1} parent=11 // pred_check
        %p373 = pneg %p299
      $region58: #{cae_forward.1} parent=11 // pred_check_branch
        %375 = sbr.rel (%p373) target = $region60
      $region59: #{cae_forward.1} parent=11 // pred_region
        _
      $region60: #{cae_forward.1} parent=11 // pred_fallthru
        _
    $region12: #{cae_forward.1} parent=5 // pred_fallthru
      _
    %p376 = scmp.lt.s32.totalorder %s21, 2
    // Predicated region
    $region61: #{cae_forward.1} parent=5 // pred_check
      %p377 = pneg %p376
    $region62: #{cae_forward.1} parent=5 // pred_check_branch
      %379 = sbr.rel (%p377) target = $region64
    $region63: #{cae_forward.1} parent=5 // pred_region
      // Predicated region
      $region65: #{cae_forward.1} parent=63 // pred_check
        %p380 = pneg %p41
      $region66: #{cae_forward.1} parent=63 // pred_check_branch
        %382 = sbr.rel (%p380) target = $region68
      $region67: #{cae_forward.1} parent=63 // pred_region
        %p383 = scmp.lt.s32.totalorder %s21, 1
        %s384 = scalar_select %p383, %s21, 1
        %s385 = smul.addr %s384, 32
        %s386 = smul.addr %s385, 8
        %s387 = scalar_lea.vmem %s0, %s386
      $region68: #{cae_forward.1} parent=63 // pred_fallthru
        _
    $region64: #{cae_forward.1} parent=5 // pred_fallthru
      _
    %p388 = scmp.le.s32.totalorder 1, %s21
    %p389 = scmp.lt.s32.totalorder %s21, 3
    %p390 = pnand %p388, %p389
    %p391 = pneg %p390
    // Predicated region
    $region69: #{cae_forward.1} parent=5 // pred_check
      _
    $region70: #{cae_forward.1} parent=5 // pred_check_branch
      %393 = sbr.rel (%p390) target = $region72
    $region71: #{cae_forward.1} parent=5 // pred_region
      %s394 = ssub.s32 %s21, 1
      %p395 = scmp.lt.s32.totalorder %s26, 1
      %s396 = scalar_select %p395, %s26, 1
      %s397 = smul.addr %s396, 32
      %s398 = smul.addr %s397, 8
      %s399 = scalar_lea.vmem %s0, %s398
      %p400 = pneg %p47
      %p401 = pneg %p44
      %p402 = pneg %p68
      %p403 = pneg %p65
      %p404 = pneg %p89
      %p405 = pneg %p86
      %p406 = pneg %p110
      %p407 = pneg %p107
      %p408 = pneg %p131
      %p409 = pneg %p128
      %p410 = pneg %p152
      %p411 = pneg %p149
      %p412 = pneg %p173
      %p413 = pneg %p170
      %p414 = pneg %p194
      %p415 = pneg %p191
      %p416 = pneg %p215
      %p417 = pneg %p212
      %p418 = pneg %p236
      %p419 = pneg %p233
      %p420 = pneg %p257
      %p421 = pneg %p254
      %p422 = pneg %p278
      %p423 = pneg %p275
      %p424 = pneg %p299
      %p425 = pneg %p296
      %p426 = pneg %p325
      %p427 = pneg %p322
      %p428 = scmp.lt.s32.totalorder %s26, 1
      %s429 = scalar_select %p428, %s26, 1
      %s430 = smul.addr %s429, 32
      %s431 = smul.addr %s430, 8
      %s432 = scalar_lea.vmem %s13, %s431
      %p433 = scmp.lt.s32.totalorder %s26, 1
      %s434 = scalar_select %p433, %s26, 1
      %s435 = smul.addr %s434, 32
      %s436 = smul.addr %s435, 8
      %s437 = scalar_lea.vmem %s0, %s436
      %p438 = scmp.lt.s32.totalorder %s26, 1
      %s439 = scalar_select %p438, %s26, 1
      %s440 = smul.addr %s439, 32
      %s441 = smul.addr %s440, 8
      %s442 = scalar_lea.vmem %s13, %s441
      %v444 = vld [vmem:[%s437] sm:$0xff]
      %v445 = vld [vmem:[%s437 + $0x8] sm:$0xff]
      %v446 = vld [vmem:[%s437 + $0x10] sm:$0xff]
      %v447 = vld [vmem:[%s437 + $0x18] sm:$0xff]
      %v448 = vld [vmem:[%s437 + $0x20] sm:$0xff]
      %v449 = vld [vmem:[%s437 + $0x28] sm:$0xff]
      %v450 = vld [vmem:[%s437 + $0x30] sm:$0xff]
      %v451 = vld [vmem:[%s437 + $0x38] sm:$0xff]
      %v452 = vld [vmem:[%s437 + $0x40] sm:$0xff]
      %v453 = vld [vmem:[%s437 + $0x48] sm:$0xff]
      %v454 = vld [vmem:[%s437 + $0x50] sm:$0xff]
      %v455 = vld [vmem:[%s437 + $0x58] sm:$0xff]
      %v456 = vld [vmem:[%s437 + $0x60] sm:$0xff]
      %v457 = vld [vmem:[%s437 + $0x68] sm:$0xff]
      %v458 = vld [vmem:[%s437 + $0x70] sm:$0xff]
      %v459 = vld [vmem:[%s437 + $0x78] sm:$0xff]
      %v460 = vld [vmem:[%s437 + $0x80] sm:$0xff]
      %v461 = vld [vmem:[%s437 + $0x88] sm:$0xff]
      %v462 = vld [vmem:[%s437 + $0x90] sm:$0xff]
      %v463 = vld [vmem:[%s437 + $0x98] sm:$0xff]
      %v464 = vld [vmem:[%s437 + $0xa0] sm:$0xff]
      %v465 = vld [vmem:[%s437 + $0xa8] sm:$0xff]
      %v466 = vld [vmem:[%s437 + $0xb0] sm:$0xff]
      %v467 = vld [vmem:[%s437 + $0xb8] sm:$0xff]
      %v468 = vld [vmem:[%s437 + $0xc0] sm:$0xff]
      %v469 = vld [vmem:[%s437 + $0xc8] sm:$0xff]
      %v470 = vld [vmem:[%s437 + $0xd0] sm:$0xff]
      %v471 = vld [vmem:[%s437 + $0xd8] sm:$0xff]
      %v472 = vld [vmem:[%s437 + $0xe0] sm:$0xff]
      %v473 = vld [vmem:[%s437 + $0xe8] sm:$0xff]
      %v474 = vld [vmem:[%s437 + $0xf0] sm:$0xff]
      %v475 = vld [vmem:[%s437 + $0xf8] sm:$0xff]
      %v476 = vpack.c.bf16 %v445, %v444
      %v477 = vpack.c.bf16 %v447, %v446
      %v478 = vpack.c.bf16 %v449, %v448
      %v479 = vpack.c.bf16 %v451, %v450
      %v480 = vpack.c.bf16 %v453, %v452
      %v481 = vpack.c.bf16 %v455, %v454
      %v482 = vpack.c.bf16 %v457, %v456
      %v483 = vpack.c.bf16 %v459, %v458
      %v484 = vpack.c.bf16 %v461, %v460
      %v485 = vpack.c.bf16 %v463, %v462
      %v486 = vpack.c.bf16 %v465, %v464
      %v487 = vpack.c.bf16 %v467, %v466
      %v488 = vpack.c.bf16 %v469, %v468
      %v489 = vpack.c.bf16 %v471, %v470
      %v490 = vpack.c.bf16 %v473, %v472
      %v491 = vpack.c.bf16 %v475, %v474
      %v492 = vld [vmem:[%s1] sm:$0xff]
      %v493 = vld [vmem:[%s1 + $0x8] sm:$0xff]
      %v494 = vld [vmem:[%s1 + $0x10] sm:$0xff]
      %v495 = vld [vmem:[%s1 + $0x18] sm:$0xff]
      %v496 = vld [vmem:[%s1 + $0x20] sm:$0xff]
      %v497 = vld [vmem:[%s1 + $0x28] sm:$0xff]
      %v498 = vld [vmem:[%s1 + $0x30] sm:$0xff]
      %v499 = vld [vmem:[%s1 + $0x38] sm:$0xff]
      %v500 = vld [vmem:[%s1 + $0x40] sm:$0xff]
      %v501 = vld [vmem:[%s1 + $0x48] sm:$0xff]
      %v502 = vld [vmem:[%s1 + $0x50] sm:$0xff]
      %v503 = vld [vmem:[%s1 + $0x58] sm:$0xff]
      %v504 = vld [vmem:[%s1 + $0x60] sm:$0xff]
      %v505 = vld [vmem:[%s1 + $0x68] sm:$0xff]
      %v506 = vld [vmem:[%s1 + $0x70] sm:$0xff]
      %v507 = vld [vmem:[%s1 + $0x78] sm:$0xff]
      %v508 = vld [vmem:[%s1 + $0x80] sm:$0xff]
      %v509 = vld [vmem:[%s1 + $0x88] sm:$0xff]
      %v510 = vld [vmem:[%s1 + $0x90] sm:$0xff]
      %v511 = vld [vmem:[%s1 + $0x98] sm:$0xff]
      %v512 = vld [vmem:[%s1 + $0xa0] sm:$0xff]
      %v513 = vld [vmem:[%s1 + $0xa8] sm:$0xff]
      %v514 = vld [vmem:[%s1 + $0xb0] sm:$0xff]
      %v515 = vld [vmem:[%s1 + $0xb8] sm:$0xff]
      %v516 = vld [vmem:[%s1 + $0xc0] sm:$0xff]
      %v517 = vld [vmem:[%s1 + $0xc8] sm:$0xff]
      %v518 = vld [vmem:[%s1 + $0xd0] sm:$0xff]
      %v519 = vld [vmem:[%s1 + $0xd8] sm:$0xff]
      %v520 = vld [vmem:[%s1 + $0xe0] sm:$0xff]
      %v521 = vld [vmem:[%s1 + $0xe8] sm:$0xff]
      %v522 = vld [vmem:[%s1 + $0xf0] sm:$0xff]
      %v523 = vld [vmem:[%s1 + $0xf8] sm:$0xff]
      %v524 = vld [vmem:[%s1 + $0x100] sm:$0xff]
      %v525 = vld [vmem:[%s1 + $0x108] sm:$0xff]
      %v526 = vld [vmem:[%s1 + $0x110] sm:$0xff]
      %v527 = vld [vmem:[%s1 + $0x118] sm:$0xff]
      %v528 = vld [vmem:[%s1 + $0x120] sm:$0xff]
      %v529 = vld [vmem:[%s1 + $0x128] sm:$0xff]
      %v530 = vld [vmem:[%s1 + $0x130] sm:$0xff]
      %v531 = vld [vmem:[%s1 + $0x138] sm:$0xff]
      %v532 = vld [vmem:[%s1 + $0x140] sm:$0xff]
      %v533 = vld [vmem:[%s1 + $0x148] sm:$0xff]
      %v534 = vld [vmem:[%s1 + $0x150] sm:$0xff]
      %v535 = vld [vmem:[%s1 + $0x158] sm:$0xff]
      %v536 = vld [vmem:[%s1 + $0x160] sm:$0xff]
      %v537 = vld [vmem:[%s1 + $0x168] sm:$0xff]
      %v538 = vld [vmem:[%s1 + $0x170] sm:$0xff]
      %v539 = vld [vmem:[%s1 + $0x178] sm:$0xff]
      %v540 = vld [vmem:[%s1 + $0x180] sm:$0xff]
      %v541 = vld [vmem:[%s1 + $0x188] sm:$0xff]
      %v542 = vld [vmem:[%s1 + $0x190] sm:$0xff]
      %v543 = vld [vmem:[%s1 + $0x198] sm:$0xff]
      %v544 = vld [vmem:[%s1 + $0x1a0] sm:$0xff]
      %v545 = vld [vmem:[%s1 + $0x1a8] sm:$0xff]
      %v546 = vld [vmem:[%s1 + $0x1b0] sm:$0xff]
      %v547 = vld [vmem:[%s1 + $0x1b8] sm:$0xff]
      %v548 = vld [vmem:[%s1 + $0x1c0] sm:$0xff]
      %v549 = vld [vmem:[%s1 + $0x1c8] sm:$0xff]
      %v550 = vld [vmem:[%s1 + $0x1d0] sm:$0xff]
      %v551 = vld [vmem:[%s1 + $0x1d8] sm:$0xff]
      %v552 = vld [vmem:[%s1 + $0x1e0] sm:$0xff]
      %v553 = vld [vmem:[%s1 + $0x1e8] sm:$0xff]
      %v554 = vld [vmem:[%s1 + $0x1f0] sm:$0xff]
      %v555 = vld [vmem:[%s1 + $0x1f8] sm:$0xff]
      %v556 = vld [vmem:[%s1 + $0x200] sm:$0xff]
      %v557 = vld [vmem:[%s1 + $0x208] sm:$0xff]
      %v558 = vld [vmem:[%s1 + $0x210] sm:$0xff]
      %v559 = vld [vmem:[%s1 + $0x218] sm:$0xff]
      %v560 = vld [vmem:[%s1 + $0x220] sm:$0xff]
      %v561 = vld [vmem:[%s1 + $0x228] sm:$0xff]
      %v562 = vld [vmem:[%s1 + $0x230] sm:$0xff]
      %v563 = vld [vmem:[%s1 + $0x238] sm:$0xff]
      %v636 = vunpack.c.l.b16 %v492
      %v637 = vunpack.c.h.b16 %v492
      %v638 = vunpack.c.l.b16 %v493
      %v639 = vunpack.c.h.b16 %v493
      %v640 = vunpack.c.l.b16 %v494
      %v641 = vunpack.c.h.b16 %v494
      %v642 = vunpack.c.l.b16 %v495
      %v643 = vunpack.c.h.b16 %v495
      %v644 = vunpack.c.l.b16 %v496
      %v645 = vunpack.c.h.b16 %v496
      %v646 = vunpack.c.l.b16 %v497
      %v647 = vunpack.c.h.b16 %v497
      %v648 = vunpack.c.l.b16 %v498
      %v649 = vunpack.c.h.b16 %v498
      %v650 = vunpack.c.l.b16 %v499
      %v651 = vunpack.c.h.b16 %v499
      %v652 = vunpack.c.l.b16 %v500
      %v653 = vunpack.c.h.b16 %v500
      %v654 = vunpack.c.l.b16 %v501
      %v655 = vunpack.c.h.b16 %v501
      %v656 = vunpack.c.l.b16 %v502
      %v657 = vunpack.c.h.b16 %v502
      %v658 = vunpack.c.l.b16 %v503
      %v659 = vunpack.c.h.b16 %v503
      %v660 = vunpack.c.l.b16 %v504
      %v661 = vunpack.c.h.b16 %v504
      %v662 = vunpack.c.l.b16 %v505
      %v663 = vunpack.c.h.b16 %v505
      %v664 = vunpack.c.l.b16 %v506
      %v665 = vunpack.c.h.b16 %v506
      %v666 = vunpack.c.l.b16 %v507
      %v667 = vunpack.c.h.b16 %v507
      %v668 = vunpack.c.l.b16 %v508
      %v669 = vunpack.c.h.b16 %v508
      %v670 = vunpack.c.l.b16 %v509
      %v671 = vunpack.c.h.b16 %v509
      %v672 = vunpack.c.l.b16 %v510
      %v673 = vunpack.c.h.b16 %v510
      %v674 = vunpack.c.l.b16 %v511
      %v675 = vunpack.c.h.b16 %v511
      %v676 = vunpack.c.l.b16 %v512
      %v677 = vunpack.c.h.b16 %v512
      %v678 = vunpack.c.l.b16 %v513
      %v679 = vunpack.c.h.b16 %v513
      %v680 = vunpack.c.l.b16 %v514
      %v681 = vunpack.c.h.b16 %v514
      %v682 = vunpack.c.l.b16 %v515
      %v683 = vunpack.c.h.b16 %v515
      %v684 = vunpack.c.l.b16 %v516
      %v685 = vunpack.c.h.b16 %v516
      %v686 = vunpack.c.l.b16 %v517
      %v687 = vunpack.c.h.b16 %v517
      %v688 = vunpack.c.l.b16 %v518
      %v689 = vunpack.c.h.b16 %v518
      %v690 = vunpack.c.l.b16 %v519
      %v691 = vunpack.c.h.b16 %v519
      %v692 = vunpack.c.l.b16 %v520
      %v693 = vunpack.c.h.b16 %v520
      %v694 = vunpack.c.l.b16 %v521
      %v695 = vunpack.c.h.b16 %v521
      %v696 = vunpack.c.l.b16 %v522
      %v697 = vunpack.c.h.b16 %v522
      %v698 = vunpack.c.l.b16 %v523
      %v699 = vunpack.c.h.b16 %v523
      %v700 = vunpack.c.l.b16 %v524
      %v701 = vunpack.c.h.b16 %v524
      %v702 = vunpack.c.l.b16 %v525
      %v703 = vunpack.c.h.b16 %v525
      %v704 = vunpack.c.l.b16 %v526
      %v705 = vunpack.c.h.b16 %v526
      %v706 = vunpack.c.l.b16 %v527
      %v707 = vunpack.c.h.b16 %v527
      %v708 = vunpack.c.l.b16 %v528
      %v709 = vunpack.c.h.b16 %v528
      %v710 = vunpack.c.l.b16 %v529
      %v711 = vunpack.c.h.b16 %v529
      %v712 = vunpack.c.l.b16 %v530
      %v713 = vunpack.c.h.b16 %v530
      %v714 = vunpack.c.l.b16 %v531
      %v715 = vunpack.c.h.b16 %v531
      %v716 = vunpack.c.l.b16 %v532
      %v717 = vunpack.c.h.b16 %v532
      %v718 = vunpack.c.l.b16 %v533
      %v719 = vunpack.c.h.b16 %v533
      %v720 = vunpack.c.l.b16 %v534
      %v721 = vunpack.c.h.b16 %v534
      %v722 = vunpack.c.l.b16 %v535
      %v723 = vunpack.c.h.b16 %v535
      %v724 = vunpack.c.l.b16 %v536
      %v725 = vunpack.c.h.b16 %v536
      %v726 = vunpack.c.l.b16 %v537
      %v727 = vunpack.c.h.b16 %v537
      %v728 = vunpack.c.l.b16 %v538
      %v729 = vunpack.c.h.b16 %v538
      %v730 = vunpack.c.l.b16 %v539
      %v731 = vunpack.c.h.b16 %v539
      %v732 = vunpack.c.l.b16 %v540
      %v733 = vunpack.c.h.b16 %v540
      %v734 = vunpack.c.l.b16 %v541
      %v735 = vunpack.c.h.b16 %v541
      %v736 = vunpack.c.l.b16 %v542
      %v737 = vunpack.c.h.b16 %v542
      %v738 = vunpack.c.l.b16 %v543
      %v739 = vunpack.c.h.b16 %v543
      %v740 = vunpack.c.l.b16 %v544
      %v741 = vunpack.c.h.b16 %v544
      %v742 = vunpack.c.l.b16 %v545
      %v743 = vunpack.c.h.b16 %v545
      %v744 = vunpack.c.l.b16 %v546
      %v745 = vunpack.c.h.b16 %v546
      %v746 = vunpack.c.l.b16 %v547
      %v747 = vunpack.c.h.b16 %v547
      %v748 = vunpack.c.l.b16 %v548
      %v749 = vunpack.c.h.b16 %v548
      %v750 = vunpack.c.l.b16 %v549
      %v751 = vunpack.c.h.b16 %v549
      %v752 = vunpack.c.l.b16 %v550
      %v753 = vunpack.c.h.b16 %v550
      %v754 = vunpack.c.l.b16 %v551
      %v755 = vunpack.c.h.b16 %v551
      %v756 = vunpack.c.l.b16 %v552
      %v757 = vunpack.c.h.b16 %v552
      %v758 = vunpack.c.l.b16 %v553
      %v759 = vunpack.c.h.b16 %v553
      %v760 = vunpack.c.l.b16 %v554
      %v761 = vunpack.c.h.b16 %v554
      %v762 = vunpack.c.l.b16 %v555
      %v763 = vunpack.c.h.b16 %v555
      %v764 = vunpack.c.l.b16 %v556
      %v765 = vunpack.c.h.b16 %v556
      %v766 = vunpack.c.l.b16 %v557
      %v767 = vunpack.c.h.b16 %v557
      %v768 = vunpack.c.l.b16 %v558
      %v769 = vunpack.c.h.b16 %v558
      %v770 = vunpack.c.l.b16 %v559
      %v771 = vunpack.c.h.b16 %v559
      %v772 = vunpack.c.l.b16 %v560
      %v773 = vunpack.c.h.b16 %v560
      %v774 = vunpack.c.l.b16 %v561
      %v775 = vunpack.c.h.b16 %v561
      %v776 = vunpack.c.l.b16 %v562
      %v777 = vunpack.c.h.b16 %v562
      %v778 = vunpack.c.l.b16 %v563
      %v779 = vunpack.c.h.b16 %v563
      %v780 = vpack.c.b16 %v638, %v636
      %v781 = vpack.c.b16 %v639, %v637
      %v782 = vpack.c.b16 %v642, %v640
      %v783 = vpack.c.b16 %v643, %v641
      %v784 = vpack.c.b16 %v646, %v644
      %v785 = vpack.c.b16 %v647, %v645
      %v786 = vpack.c.b16 %v650, %v648
      %v787 = vpack.c.b16 %v651, %v649
      %v788 = vpack.c.b16 %v654, %v652
      %v789 = vpack.c.b16 %v655, %v653
      %v790 = vpack.c.b16 %v658, %v656
      %v791 = vpack.c.b16 %v659, %v657
      %v792 = vpack.c.b16 %v662, %v660
      %v793 = vpack.c.b16 %v663, %v661
      %v794 = vpack.c.b16 %v666, %v664
      %v795 = vpack.c.b16 %v667, %v665
      %v796 = vpack.c.b16 %v670, %v668
      %v797 = vpack.c.b16 %v671, %v669
      %v798 = vpack.c.b16 %v674, %v672
      %v799 = vpack.c.b16 %v675, %v673
      %v800 = vpack.c.b16 %v678, %v676
      %v801 = vpack.c.b16 %v679, %v677
      %v802 = vpack.c.b16 %v682, %v680
      %v803 = vpack.c.b16 %v683, %v681
      %v804 = vpack.c.b16 %v686, %v684
      %v805 = vpack.c.b16 %v687, %v685
      %v806 = vpack.c.b16 %v690, %v688
      %v807 = vpack.c.b16 %v691, %v689
      %v808 = vpack.c.b16 %v694, %v692
      %v809 = vpack.c.b16 %v695, %v693
      %v810 = vpack.c.b16 %v698, %v696
      %v811 = vpack.c.b16 %v699, %v697
      %v812 = vpack.c.b16 %v702, %v700
      %v813 = vpack.c.b16 %v703, %v701
      %v814 = vpack.c.b16 %v706, %v704
      %v815 = vpack.c.b16 %v707, %v705
      %v816 = vpack.c.b16 %v710, %v708
      %v817 = vpack.c.b16 %v711, %v709
      %v818 = vpack.c.b16 %v714, %v712
      %v819 = vpack.c.b16 %v715, %v713
      %v820 = vpack.c.b16 %v718, %v716
      %v821 = vpack.c.b16 %v719, %v717
      %v822 = vpack.c.b16 %v722, %v720
      %v823 = vpack.c.b16 %v723, %v721
      %v824 = vpack.c.b16 %v726, %v724
      %v825 = vpack.c.b16 %v727, %v725
      %v826 = vpack.c.b16 %v730, %v728
      %v827 = vpack.c.b16 %v731, %v729
      %v828 = vpack.c.b16 %v734, %v732
      %v829 = vpack.c.b16 %v735, %v733
      %v830 = vpack.c.b16 %v738, %v736
      %v831 = vpack.c.b16 %v739, %v737
      %v832 = vpack.c.b16 %v742, %v740
      %v833 = vpack.c.b16 %v743, %v741
      %v834 = vpack.c.b16 %v746, %v744
      %v835 = vpack.c.b16 %v747, %v745
      %v836 = vpack.c.b16 %v750, %v748
      %v837 = vpack.c.b16 %v751, %v749
      %v838 = vpack.c.b16 %v754, %v752
      %v839 = vpack.c.b16 %v755, %v753
      %v840 = vpack.c.b16 %v758, %v756
      %v841 = vpack.c.b16 %v759, %v757
      %v842 = vpack.c.b16 %v762, %v760
      %v843 = vpack.c.b16 %v763, %v761
      %v844 = vpack.c.b16 %v766, %v764
      %v845 = vpack.c.b16 %v767, %v765
      %v846 = vpack.c.b16 %v770, %v768
      %v847 = vpack.c.b16 %v771, %v769
      %v848 = vpack.c.b16 %v774, %v772
      %v849 = vpack.c.b16 %v775, %v773
      %v850 = vpack.c.b16 %v778, %v776
      %v851 = vpack.c.b16 %v779, %v777
      %924 = vmatprep.subr.bf16.mxu0 0
      %925 = vmatpush1.bf16.msra.mxu0 %v476
      %926 = vmatprep.subr.bf16.mxu0 0
      %927 = vmatpush1.bf16.msra.mxu0 %v477
      %928 = vmatprep.subr.bf16.mxu0 0
      %929 = vmatpush1.bf16.msra.mxu0 %v478
      %930 = vmatprep.subr.bf16.mxu0 0
      %931 = vmatpush1.bf16.msra.mxu0 %v479
      %932 = vmatprep.subr.bf16.mxu0 0
      %933 = vmatpush1.bf16.msra.mxu0 %v480
      %934 = vmatprep.subr.bf16.mxu0 0
      %935 = vmatpush1.bf16.msra.mxu0 %v481
      %936 = vmatprep.subr.bf16.mxu0 0
      %937 = vmatpush1.bf16.msra.mxu0 %v482
      %938 = vmatprep.subr.bf16.mxu0 0
      %939 = vmatpush1.bf16.msra.mxu0 %v483
      %940 = vmatprep.subr.bf16.mxu0 0
      %941 = vmatpush1.bf16.msra.mxu0 %v484
      %942 = vmatprep.subr.bf16.mxu0 0
      %943 = vmatpush1.bf16.msra.mxu0 %v485
      %944 = vmatprep.subr.bf16.mxu0 0
      %945 = vmatpush1.bf16.msra.mxu0 %v486
      %946 = vmatprep.subr.bf16.mxu0 0
      %947 = vmatpush1.bf16.msra.mxu0 %v487
      %948 = vmatprep.subr.bf16.mxu0 0
      %949 = vmatpush1.bf16.msra.mxu0 %v488
      %950 = vmatprep.subr.bf16.mxu0 0
      %951 = vmatpush1.bf16.msra.mxu0 %v489
      %952 = vmatprep.subr.bf16.mxu0 0
      %953 = vmatpush1.bf16.msra.mxu0 %v490
      %954 = vmatprep.subr.bf16.mxu0 0
      %955 = vmatpush1.bf16.msra.mxu0 %v491
      %956 = vmatprep.mubr.bf16.mxu0 %v781
      %957 = vmatmul.mubr.bf16.gmra.mrb[0].mxu0 %v780
      %v958 = vpop.f32.mrb[0].mxu0
      %v959 = vadd.f32 0.0, %v958
      %v960 = vpop.f32.mrb[0].mxu0
      %v961 = vpop.f32.mrb[0].mxu0
      %v962 = vadd.f32 0.0, %v961
      %v963 = vpop.f32.mrb[0].mxu0
      %964 = vmatprep.mubr.bf16.mxu0 %v783
      %965 = vmatmul.mubr.bf16.gmra.mrb[0].mxu0 %v782
      %v966 = vpop.f32.mrb[0].mxu0
      %v967 = vadd.f32 0.0, %v966
      %v968 = vpop.f32.mrb[0].mxu0
      %v969 = vpop.f32.mrb[0].mxu0
      %v970 = vadd.f32 0.0, %v969
      %v971 = vpop.f32.mrb[0].mxu0
      %972 = vmatprep.mubr.bf16.mxu0 %v785
      %973 = vmatmul.mubr.bf16.gmra.mrb[0].mxu0 %v784
      %v974 = vpop.f32.mrb[0].mxu0
      %v975 = vadd.f32 0.0, %v974
      %v976 = vpop.f32.mrb[0].mxu0
      %v977 = vpop.f32.mrb[0].mxu0
      %v978 = vadd.f32 0.0, %v977
      %v979 = vpop.f32.mrb[0].mxu0
      %980 = vmatprep.mubr.bf16.mxu0 %v787
      %981 = vmatmul.mubr.bf16.gmra.mrb[0].mxu0 %v786
      %v982 = vpop.f32.mrb[0].mxu0
      %v983 = vadd.f32 0.0, %v982
      %v984 = vpop.f32.mrb[0].mxu0
      %v985 = vpop.f32.mrb[0].mxu0
      %v986 = vadd.f32 0.0, %v985
      %v987 = vpop.f32.mrb[0].mxu0
      %988 = vmatprep.mubr.bf16.mxu0 %v789
      %989 = vmatmul.mubr.bf16.gmra.mrb[0].mxu0 %v788
      %v990 = vpop.f32.mrb[0].mxu0
      %v991 = vadd.f32 0.0, %v990
      %v992 = vpop.f32.mrb[0].mxu0
      %v993 = vpop.f32.mrb[0].mxu0
      %v994 = vadd.f32 0.0, %v993
      %v995 = vpop.f32.mrb[0].mxu0
      %996 = vmatprep.mubr.bf16.mxu0 %v791
      %997 = vmatmul.mubr.bf16.gmra.mrb[0].mxu0 %v790
      %v998 = vpop.f32.mrb[0].mxu0
      %v999 = vadd.f32 0.0, %v998
      %v1000 = vpop.f32.mrb[0].mxu0
      %v1001 = vpop.f32.mrb[0].mxu0
      %v1002 = vadd.f32 0.0, %v1001
      %v1003 = vpop.f32.mrb[0].mxu0
      %1004 = vmatprep.mubr.bf16.mxu0 %v793
      %1005 = vmatmul.mubr.bf16.gmra.mrb[0].mxu0 %v792
      %v1006 = vpop.f32.mrb[0].mxu0
      %v1007 = vadd.f32 0.0, %v1006
      %v1008 = vpop.f32.mrb[0].mxu0
      %v1009 = vpop.f32.mrb[0].mxu0
      %v1010 = vadd.f32 0.0, %v1009
      %v1011 = vpop.f32.mrb[0].mxu0
      %1012 = vmatprep.mubr.bf16.mxu0 %v795
      %1013 = vmatmul.mubr.bf16.gmra.mrb[0].mxu0 %v794
      %v1014 = vpop.f32.mrb[0].mxu0
      %v1015 = vadd.f32 0.0, %v1014
      %v1016 = vpop.f32.mrb[0].mxu0
      %v1017 = vpop.f32.mrb[0].mxu0
      %v1018 = vadd.f32 0.0, %v1017
      %v1019 = vpop.f32.mrb[0].mxu0
      %1020 = vmatprep.mubr.bf16.mxu0 %v797
      %1021 = vmatmul.mubr.bf16.gmra.mrb[0].mxu0 %v796
      %v1022 = vpop.f32.mrb[0].mxu0
      %v1023 = vadd.f32 0.0, %v1022
      %v1024 = vpop.f32.mrb[0].mxu0
      %v1025 = vpop.f32.mrb[0].mxu0
      %v1026 = vadd.f32 0.0, %v1025
      %v1027 = vpop.f32.mrb[0].mxu0
      %1028 = vmatprep.mubr.bf16.mxu0 %v799
      %1029 = vmatmul.mubr.bf16.gmra.mrb[0].mxu0 %v798
      %v1030 = vpop.f32.mrb[0].mxu0
      %v1031 = vadd.f32 0.0, %v1030
      %v1032 = vpop.f32.mrb[0].mxu0
      %v1033 = vpop.f32.mrb[0].mxu0
      %v1034 = vadd.f32 0.0, %v1033
      %v1035 = vpop.f32.mrb[0].mxu0
      %1036 = vmatprep.mubr.bf16.mxu0 %v801
      %1037 = vmatmul.mubr.bf16.gmra.mrb[0].mxu0 %v800
      %v1038 = vpop.f32.mrb[0].mxu0
      %v1039 = vadd.f32 0.0, %v1038
      %v1040 = vpop.f32.mrb[0].mxu0
      %v1041 = vpop.f32.mrb[0].mxu0
      %v1042 = vadd.f32 0.0, %v1041
      %v1043 = vpop.f32.mrb[0].mxu0
      %1044 = vmatprep.mubr.bf16.mxu0 %v803
      %1045 = vmatmul.mubr.bf16.gmra.mrb[0].mxu0 %v802
      %v1046 = vpop.f32.mrb[0].mxu0
      %v1047 = vadd.f32 0.0, %v1046
      %v1048 = vpop.f32.mrb[0].mxu0
      %v1049 = vpop.f32.mrb[0].mxu0
      %v1050 = vadd.f32 0.0, %v1049
      %v1051 = vpop.f32.mrb[0].mxu0
      %1052 = vmatprep.mubr.bf16.mxu0 %v805
      %1053 = vmatmul.mubr.bf16.gmra.mrb[0].mxu0 %v804
      %v1054 = vpop.f32.mrb[0].mxu0
      %v1055 = vadd.f32 0.0, %v1054
      %v1056 = vpop.f32.mrb[0].mxu0
      %v1057 = vpop.f32.mrb[0].mxu0
      %v1058 = vadd.f32 0.0, %v1057
      %v1059 = vpop.f32.mrb[0].mxu0
      %1060 = vmatprep.mubr.bf16.mxu0 %v807
      %1061 = vmatmul.mubr.bf16.gmra.mrb[0].mxu0 %v806
      %v1062 = vpop.f32.mrb[0].mxu0
      %v1063 = vadd.f32 0.0, %v1062
      %v1064 = vpop.f32.mrb[0].mxu0
      %v1065 = vpop.f32.mrb[0].mxu0
      %v1066 = vadd.f32 0.0, %v1065
      %v1067 = vpop.f32.mrb[0].mxu0
      %1068 = vmatprep.mubr.bf16.mxu0 %v809
      %1069 = vmatmul.mubr.bf16.gmra.mrb[0].mxu0 %v808
      %v1070 = vpop.f32.mrb[0].mxu0
      %v1071 = vadd.f32 0.0, %v1070
      %v1072 = vpop.f32.mrb[0].mxu0
      %v1073 = vpop.f32.mrb[0].mxu0
      %v1074 = vadd.f32 0.0, %v1073
      %v1075 = vpop.f32.mrb[0].mxu0
      %1076 = vmatprep.mubr.bf16.mxu0 %v811
      %1077 = vmatmul.mubr.bf16.gmra.mrb[0].mxu0 %v810
      %v1078 = vpop.f32.mrb[0].mxu0
      %v1079 = vadd.f32 0.0, %v1078
      %v1080 = vpop.f32.mrb[0].mxu0
      %v1081 = vpop.f32.mrb[0].mxu0
      %v1082 = vadd.f32 0.0, %v1081
      %v1083 = vpop.f32.mrb[0].mxu0
      %1084 = vmatprep.mubr.bf16.mxu0 %v813
      %1085 = vmatmul.mubr.bf16.gmra.mrb[0].mxu0 %v812
      %v1086 = vpop.f32.mrb[0].mxu0
      %v1087 = vadd.f32 0.0, %v1086
      %v1088 = vpop.f32.mrb[0].mxu0
      %v1089 = vpop.f32.mrb[0].mxu0
      %v1090 = vadd.f32 0.0, %v1089
      %v1091 = vpop.f32.mrb[0].mxu0
      %1092 = vmatprep.mubr.bf16.mxu0 %v815
      %1093 = vmatmul.mubr.bf16.gmra.mrb[0].mxu0 %v814
      %v1094 = vpop.f32.mrb[0].mxu0
      %v1095 = vadd.f32 0.0, %v1094
      %v1096 = vpop.f32.mrb[0].mxu0
      %v1097 = vpop.f32.mrb[0].mxu0
      %v1098 = vadd.f32 0.0, %v1097
      %v1099 = vpop.f32.mrb[0].mxu0
      %1100 = vmatprep.mubr.bf16.mxu0 %v817
      %1101 = vmatmul.mubr.bf16.gmra.mrb[0].mxu0 %v816
      %v1102 = vpop.f32.mrb[0].mxu0
      %v1103 = vadd.f32 0.0, %v1102
      %v1104 = vpop.f32.mrb[0].mxu0
      %v1105 = vpop.f32.mrb[0].mxu0
      %v1106 = vadd.f32 0.0, %v1105
      %v1107 = vpop.f32.mrb[0].mxu0
      %1108 = vmatprep.mubr.bf16.mxu0 %v819
      %1109 = vmatmul.mubr.bf16.gmra.mrb[0].mxu0 %v818
      %v1110 = vpop.f32.mrb[0].mxu0
      %v1111 = vadd.f32 0.0, %v1110
      %v1112 = vpop.f32.mrb[0].mxu0
      %v1113 = vpop.f32.mrb[0].mxu0
      %v1114 = vadd.f32 0.0, %v1113
      %v1115 = vpop.f32.mrb[0].mxu0
      %1116 = vmatprep.mubr.bf16.mxu0 %v821
      %1117 = vmatmul.mubr.bf16.gmra.mrb[0].mxu0 %v820
      %v1118 = vpop.f32.mrb[0].mxu0
      %v1119 = vadd.f32 0.0, %v1118
      %v1120 = vpop.f32.mrb[0].mxu0
      %v1121 = vpop.f32.mrb[0].mxu0
      %v1122 = vadd.f32 0.0, %v1121
      %v1123 = vpop.f32.mrb[0].mxu0
      %1124 = vmatprep.mubr.bf16.mxu0 %v823
      %1125 = vmatmul.mubr.bf16.gmra.mrb[0].mxu0 %v822
      %v1126 = vpop.f32.mrb[0].mxu0
      %v1127 = vadd.f32 0.0, %v1126
      %v1128 = vpop.f32.mrb[0].mxu0
      %v1129 = vpop.f32.mrb[0].mxu0
      %v1130 = vadd.f32 0.0, %v1129
      %v1131 = vpop.f32.mrb[0].mxu0
      %1132 = vmatprep.mubr.bf16.mxu0 %v825
      %1133 = vmatmul.mubr.bf16.gmra.mrb[0].mxu0 %v824
      %v1134 = vpop.f32.mrb[0].mxu0
      %v1135 = vadd.f32 0.0, %v1134
      %v1136 = vpop.f32.mrb[0].mxu0
      %v1137 = vpop.f32.mrb[0].mxu0
      %v1138 = vadd.f32 0.0, %v1137
      %v1139 = vpop.f32.mrb[0].mxu0
      %1140 = vmatprep.mubr.bf16.mxu0 %v827
      %1141 = vmatmul.mubr.bf16.gmra.mrb[0].mxu0 %v826
      %v1142 = vpop.f32.mrb[0].mxu0
      %v1143 = vadd.f32 0.0, %v1142
      %v1144 = vpop.f32.mrb[0].mxu0
      %v1145 = vpop.f32.mrb[0].mxu0
      %v1146 = vadd.f32 0.0, %v1145
      %v1147 = vpop.f32.mrb[0].mxu0
      %1148 = vmatprep.mubr.bf16.mxu0 %v829
      %1149 = vmatmul.mubr.bf16.gmra.mrb[0].mxu0 %v828
      %v1150 = vpop.f32.mrb[0].mxu0
      %v1151 = vadd.f32 0.0, %v1150
      %v1152 = vpop.f32.mrb[0].mxu0
      %v1153 = vpop.f32.mrb[0].mxu0
      %v1154 = vadd.f32 0.0, %v1153
      %v1155 = vpop.f32.mrb[0].mxu0
      %1156 = vmatprep.mubr.bf16.mxu0 %v831
      %1157 = vmatmul.mubr.bf16.gmra.mrb[0].mxu0 %v830
      %v1158 = vpop.f32.mrb[0].mxu0
      %v1159 = vadd.f32 0.0, %v1158
      %v1160 = vpop.f32.mrb[0].mxu0
      %v1161 = vpop.f32.mrb[0].mxu0
      %v1162 = vadd.f32 0.0, %v1161
      %v1163 = vpop.f32.mrb[0].mxu0
      %1164 = vmatprep.mubr.bf16.mxu0 %v833
      %1165 = vmatmul.mubr.bf16.gmra.mrb[0].mxu0 %v832
      %v1166 = vpop.f32.mrb[0].mxu0
      %v1167 = vadd.f32 0.0, %v1166
      %v1168 = vpop.f32.mrb[0].mxu0
      %v1169 = vpop.f32.mrb[0].mxu0
      %v1170 = vadd.f32 0.0, %v1169
      %v1171 = vpop.f32.mrb[0].mxu0
      %1172 = vmatprep.mubr.bf16.mxu0 %v835
      %1173 = vmatmul.mubr.bf16.gmra.mrb[0].mxu0 %v834
      %v1174 = vpop.f32.mrb[0].mxu0
      %v1175 = vadd.f32 0.0, %v1174
      %v1176 = vpop.f32.mrb[0].mxu0
      %v1177 = vpop.f32.mrb[0].mxu0
      %v1178 = vadd.f32 0.0, %v1177
      %v1179 = vpop.f32.mrb[0].mxu0
      %1180 = vmatprep.mubr.bf16.mxu0 %v837
      %1181 = vmatmul.mubr.bf16.gmra.mrb[0].mxu0 %v836
      %v1182 = vpop.f32.mrb[0].mxu0
      %v1183 = vadd.f32 0.0, %v1182
      %v1184 = vpop.f32.mrb[0].mxu0
      %v1185 = vpop.f32.mrb[0].mxu0
      %v1186 = vadd.f32 0.0, %v1185
      %v1187 = vpop.f32.mrb[0].mxu0
      %1188 = vmatprep.mubr.bf16.mxu0 %v839
      %1189 = vmatmul.mubr.bf16.gmra.mrb[0].mxu0 %v838
      %v1190 = vpop.f32.mrb[0].mxu0
      %v1191 = vadd.f32 0.0, %v1190
      %v1192 = vpop.f32.mrb[0].mxu0
      %v1193 = vpop.f32.mrb[0].mxu0
      %v1194 = vadd.f32 0.0, %v1193
      %v1195 = vpop.f32.mrb[0].mxu0
      %1196 = vmatprep.mubr.bf16.mxu0 %v841
      %1197 = vmatmul.mubr.bf16.gmra.mrb[0].mxu0 %v840
      %v1198 = vpop.f32.mrb[0].mxu0
      %v1199 = vadd.f32 0.0, %v1198
      %v1200 = vpop.f32.mrb[0].mxu0
      %v1201 = vpop.f32.mrb[0].mxu0
      %v1202 = vadd.f32 0.0, %v1201
      %v1203 = vpop.f32.mrb[0].mxu0
      %1204 = vmatprep.mubr.bf16.mxu0 %v843
      %1205 = vmatmul.mubr.bf16.gmra.mrb[0].mxu0 %v842
      %v1206 = vpop.f32.mrb[0].mxu0
      %v1207 = vadd.f32 0.0, %v1206
      %v1208 = vpop.f32.mrb[0].mxu0
      %v1209 = vpop.f32.mrb[0].mxu0
      %v1210 = vadd.f32 0.0, %v1209
      %v1211 = vpop.f32.mrb[0].mxu0
      %1212 = vmatprep.mubr.bf16.mxu0 %v845
      %1213 = vmatmul.mubr.bf16.gmra.mrb[0].mxu0 %v844
      %v1214 = vpop.f32.mrb[0].mxu0
      %v1215 = vadd.f32 0.0, %v1214
      %v1216 = vpop.f32.mrb[0].mxu0
      %v1217 = vpop.f32.mrb[0].mxu0
      %v1218 = vadd.f32 0.0, %v1217
      %v1219 = vpop.f32.mrb[0].mxu0
      %1220 = vmatprep.mubr.bf16.mxu0 %v847
      %1221 = vmatmul.mubr.bf16.gmra.mrb[0].mxu0 %v846
      %v1222 = vpop.f32.mrb[0].mxu0
      %v1223 = vadd.f32 0.0, %v1222
      %v1224 = vpop.f32.mrb[0].mxu0
      %v1225 = vpop.f32.mrb[0].mxu0
      %v1226 = vadd.f32 0.0, %v1225
      %v1227 = vpop.f32.mrb[0].mxu0
      %1228 = vmatprep.mubr.bf16.mxu0 %v849
      %1229 = vmatmul.mubr.bf16.gmra.mrb[0].mxu0 %v848
      %v1230 = vpop.f32.mrb[0].mxu0
      %v1231 = vadd.f32 0.0, %v1230
      %v1232 = vpop.f32.mrb[0].mxu0
      %v1233 = vpop.f32.mrb[0].mxu0
      %v1234 = vadd.f32 0.0, %v1233
      %v1235 = vpop.f32.mrb[0].mxu0
      %1236 = vmatprep.mubr.bf16.mxu0 %v851
      %1237 = vmatmul.mubr.bf16.gmra.mrb[0].mxu0 %v850
      %v1238 = vpop.f32.mrb[0].mxu0
      %v1239 = vadd.f32 0.0, %v1238
      %v1240 = vpop.f32.mrb[0].mxu0
      %v1241 = vpop.f32.mrb[0].mxu0
      %v1242 = vadd.f32 0.0, %v1241
      %v1243 = vpop.f32.mrb[0].mxu0
      %1244 = vdwg.mxu0
      %v1245 = vld [vmem:[%s2] sm:$0x1]
      %1247 = vset.pattern.permute.xlu0 0
      %1248 = vperm.xlu0 %1247, %v959
      %v1249 = vpop.permute.xlu0 %1248
      %1252 = vset.pattern.permute.xlu0 0
      %1253 = vperm.xlu0 %1252, %v962
      %v1254 = vpop.permute.xlu0 %1253
      %1257 = vset.pattern.permute.xlu0 0
      %1258 = vperm.xlu0 %1257, %v967
      %v1259 = vpop.permute.xlu0 %1258
      %1262 = vset.pattern.permute.xlu0 0
      %1263 = vperm.xlu0 %1262, %v970
      %v1264 = vpop.permute.xlu0 %1263
      %1267 = vset.pattern.permute.xlu0 0
      %1268 = vperm.xlu0 %1267, %v975
      %v1269 = vpop.permute.xlu0 %1268
      %1272 = vset.pattern.permute.xlu0 0
      %1273 = vperm.xlu0 %1272, %v978
      %v1274 = vpop.permute.xlu0 %1273
      %1277 = vset.pattern.permute.xlu0 0
      %1278 = vperm.xlu0 %1277, %v983
      %v1279 = vpop.permute.xlu0 %1278
      %1282 = vset.pattern.permute.xlu0 0
      %1283 = vperm.xlu0 %1282, %v986
      %v1284 = vpop.permute.xlu0 %1283
      %v1287 = vlaneseq
      %v1288 = vshrl.u32 %v1287, 7
      %v1289 = vsub.s32 0, %v1288
      %v1290 = vrot.slane %v1245, %v1289
      %v1292 = vmul.f32 %v1249, %v1290
      %v1293 = vmul.f32 %v1254, %v1290
      %v1294 = vmul.f32 %v1259, %v1290
      %v1295 = vmul.f32 %v1264, %v1290
      %v1296 = vmul.f32 %v1269, %v1290
      %v1297 = vmul.f32 %v1274, %v1290
      %v1298 = vmul.f32 %v1279, %v1290
      %v1299 = vmul.f32 %v1284, %v1290
      %v1300 = vadd.f32 %v1292, 0.0
      %v1301 = vadd.f32 %v1293, 0.0
      %v1302 = vadd.f32 %v1294, 0.0
      %v1303 = vadd.f32 %v1295, 0.0
      %v1304 = vadd.f32 %v1296, 0.0
      %v1305 = vadd.f32 %v1297, 0.0
      %v1306 = vadd.f32 %v1298, 0.0
      %v1307 = vadd.f32 %v1299, 0.0
      %s1308 = scalar_lea.vmem %s2, 1
      %v1309 = vld [vmem:[%s1308] sm:$0x1]
      %1311 = vset.pattern.permute.xlu0 0
      %1312 = vperm.xlu0 %1311, %v991
      %v1313 = vpop.permute.xlu0 %1312
      %1316 = vset.pattern.permute.xlu0 0
      %1317 = vperm.xlu0 %1316, %v994
      %v1318 = vpop.permute.xlu0 %1317
      %1321 = vset.pattern.permute.xlu0 0
      %1322 = vperm.xlu0 %1321, %v999
      %v1323 = vpop.permute.xlu0 %1322
      %1326 = vset.pattern.permute.xlu0 0
      %1327 = vperm.xlu0 %1326, %v1002
      %v1328 = vpop.permute.xlu0 %1327
      %1331 = vset.pattern.permute.xlu0 0
      %1332 = vperm.xlu0 %1331, %v1007
      %v1333 = vpop.permute.xlu0 %1332
      %1336 = vset.pattern.permute.xlu0 0
      %1337 = vperm.xlu0 %1336, %v1010
      %v1338 = vpop.permute.xlu0 %1337
      %1341 = vset.pattern.permute.xlu0 0
      %1342 = vperm.xlu0 %1341, %v1015
      %v1343 = vpop.permute.xlu0 %1342
      %1346 = vset.pattern.permute.xlu0 0
      %1347 = vperm.xlu0 %1346, %v1018
      %v1348 = vpop.permute.xlu0 %1347
      %v1351 = vlaneseq
      %v1352 = vshrl.u32 %v1351, 7
      %v1353 = vsub.s32 0, %v1352
      %v1354 = vrot.slane %v1309, %v1353
      %v1356 = vmul.f32 %v1313, %v1354
      %v1357 = vmul.f32 %v1318, %v1354
      %v1358 = vmul.f32 %v1323, %v1354
      %v1359 = vmul.f32 %v1328, %v1354
      %v1360 = vmul.f32 %v1333, %v1354
      %v1361 = vmul.f32 %v1338, %v1354
      %v1362 = vmul.f32 %v1343, %v1354
      %v1363 = vmul.f32 %v1348, %v1354
      %v1364 = vadd.f32 %v1300, %v1356
      %v1365 = vadd.f32 %v1301, %v1357
      %v1366 = vadd.f32 %v1302, %v1358
      %v1367 = vadd.f32 %v1303, %v1359
      %v1368 = vadd.f32 %v1304, %v1360
      %v1369 = vadd.f32 %v1305, %v1361
      %v1370 = vadd.f32 %v1306, %v1362
      %v1371 = vadd.f32 %v1307, %v1363
      %s1372 = scalar_lea.vmem %s2, 2
      %v1373 = vld [vmem:[%s1372] sm:$0x1]
      %1375 = vset.pattern.permute.xlu0 0
      %1376 = vperm.xlu0 %1375, %v1023
      %v1377 = vpop.permute.xlu0 %1376
      %1380 = vset.pattern.permute.xlu0 0
      %1381 = vperm.xlu0 %1380, %v1026
      %v1382 = vpop.permute.xlu0 %1381
      %1385 = vset.pattern.permute.xlu0 0
      %1386 = vperm.xlu0 %1385, %v1031
      %v1387 = vpop.permute.xlu0 %1386
      %1390 = vset.pattern.permute.xlu0 0
      %1391 = vperm.xlu0 %1390, %v1034
      %v1392 = vpop.permute.xlu0 %1391
      %1395 = vset.pattern.permute.xlu0 0
      %1396 = vperm.xlu0 %1395, %v1039
      %v1397 = vpop.permute.xlu0 %1396
      %1400 = vset.pattern.permute.xlu0 0
      %1401 = vperm.xlu0 %1400, %v1042
      %v1402 = vpop.permute.xlu0 %1401
      %1405 = vset.pattern.permute.xlu0 0
      %1406 = vperm.xlu0 %1405, %v1047
      %v1407 = vpop.permute.xlu0 %1406
      %1410 = vset.pattern.permute.xlu0 0
      %1411 = vperm.xlu0 %1410, %v1050
      %v1412 = vpop.permute.xlu0 %1411
      %v1415 = vlaneseq
      %v1416 = vshrl.u32 %v1415, 7
      %v1417 = vsub.s32 0, %v1416
      %v1418 = vrot.slane %v1373, %v1417
      %v1420 = vmul.f32 %v1377, %v1418
      %v1421 = vmul.f32 %v1382, %v1418
      %v1422 = vmul.f32 %v1387, %v1418
      %v1423 = vmul.f32 %v1392, %v1418
      %v1424 = vmul.f32 %v1397, %v1418
      %v1425 = vmul.f32 %v1402, %v1418
      %v1426 = vmul.f32 %v1407, %v1418
      %v1427 = vmul.f32 %v1412, %v1418
      %v1428 = vadd.f32 %v1364, %v1420
      %v1429 = vadd.f32 %v1365, %v1421
      %v1430 = vadd.f32 %v1366, %v1422
      %v1431 = vadd.f32 %v1367, %v1423
      %v1432 = vadd.f32 %v1368, %v1424
      %v1433 = vadd.f32 %v1369, %v1425
      %v1434 = vadd.f32 %v1370, %v1426
      %v1435 = vadd.f32 %v1371, %v1427
      %s1436 = scalar_lea.vmem %s2, 3
      %v1437 = vld [vmem:[%s1436] sm:$0x1]
      %1439 = vset.pattern.permute.xlu0 0
      %1440 = vperm.xlu0 %1439, %v1055
      %v1441 = vpop.permute.xlu0 %1440
      %1444 = vset.pattern.permute.xlu0 0
      %1445 = vperm.xlu0 %1444, %v1058
      %v1446 = vpop.permute.xlu0 %1445
      %1449 = vset.pattern.permute.xlu0 0
      %1450 = vperm.xlu0 %1449, %v1063
      %v1451 = vpop.permute.xlu0 %1450
      %1454 = vset.pattern.permute.xlu0 0
      %1455 = vperm.xlu0 %1454, %v1066
      %v1456 = vpop.permute.xlu0 %1455
      %1459 = vset.pattern.permute.xlu0 0
      %1460 = vperm.xlu0 %1459, %v1071
      %v1461 = vpop.permute.xlu0 %1460
      %1464 = vset.pattern.permute.xlu0 0
      %1465 = vperm.xlu0 %1464, %v1074
      %v1466 = vpop.permute.xlu0 %1465
      %1469 = vset.pattern.permute.xlu0 0
      %1470 = vperm.xlu0 %1469, %v1079
      %v1471 = vpop.permute.xlu0 %1470
      %1474 = vset.pattern.permute.xlu0 0
      %1475 = vperm.xlu0 %1474, %v1082
      %v1476 = vpop.permute.xlu0 %1475
      %v1479 = vlaneseq
      %v1480 = vshrl.u32 %v1479, 7
      %v1481 = vsub.s32 0, %v1480
      %v1482 = vrot.slane %v1437, %v1481
      %v1484 = vmul.f32 %v1441, %v1482
      %v1485 = vmul.f32 %v1446, %v1482
      %v1486 = vmul.f32 %v1451, %v1482
      %v1487 = vmul.f32 %v1456, %v1482
      %v1488 = vmul.f32 %v1461, %v1482
      %v1489 = vmul.f32 %v1466, %v1482
      %v1490 = vmul.f32 %v1471, %v1482
      %v1491 = vmul.f32 %v1476, %v1482
      %v1492 = vadd.f32 %v1428, %v1484
      %v1493 = vadd.f32 %v1429, %v1485
      %v1494 = vadd.f32 %v1430, %v1486
      %v1495 = vadd.f32 %v1431, %v1487
      %v1496 = vadd.f32 %v1432, %v1488
      %v1497 = vadd.f32 %v1433, %v1489
      %v1498 = vadd.f32 %v1434, %v1490
      %v1499 = vadd.f32 %v1435, %v1491
      %s1500 = scalar_lea.vmem %s2, 4
      %v1501 = vld [vmem:[%s1500] sm:$0x1]
      %1503 = vset.pattern.permute.xlu0 0
      %1504 = vperm.xlu0 %1503, %v1087
      %v1505 = vpop.permute.xlu0 %1504
      %1508 = vset.pattern.permute.xlu0 0
      %1509 = vperm.xlu0 %1508, %v1090
      %v1510 = vpop.permute.xlu0 %1509
      %1513 = vset.pattern.permute.xlu0 0
      %1514 = vperm.xlu0 %1513, %v1095
      %v1515 = vpop.permute.xlu0 %1514
      %1518 = vset.pattern.permute.xlu0 0
      %1519 = vperm.xlu0 %1518, %v1098
      %v1520 = vpop.permute.xlu0 %1519
      %1523 = vset.pattern.permute.xlu0 0
      %1524 = vperm.xlu0 %1523, %v1103
      %v1525 = vpop.permute.xlu0 %1524
      %1528 = vset.pattern.permute.xlu0 0
      %1529 = vperm.xlu0 %1528, %v1106
      %v1530 = vpop.permute.xlu0 %1529
      %1533 = vset.pattern.permute.xlu0 0
      %1534 = vperm.xlu0 %1533, %v1111
      %v1535 = vpop.permute.xlu0 %1534
      %1538 = vset.pattern.permute.xlu0 0
      %1539 = vperm.xlu0 %1538, %v1114
      %v1540 = vpop.permute.xlu0 %1539
      %v1543 = vlaneseq
      %v1544 = vshrl.u32 %v1543, 7
      %v1545 = vsub.s32 0, %v1544
      %v1546 = vrot.slane %v1501, %v1545
      %v1548 = vmul.f32 %v1505, %v1546
      %v1549 = vmul.f32 %v1510, %v1546
      %v1550 = vmul.f32 %v1515, %v1546
      %v1551 = vmul.f32 %v1520, %v1546
      %v1552 = vmul.f32 %v1525, %v1546
      %v1553 = vmul.f32 %v1530, %v1546
      %v1554 = vmul.f32 %v1535, %v1546
      %v1555 = vmul.f32 %v1540, %v1546
      %v1556 = vadd.f32 %v1492, %v1548
      %v1557 = vadd.f32 %v1493, %v1549
      %v1558 = vadd.f32 %v1494, %v1550
      %v1559 = vadd.f32 %v1495, %v1551
      %v1560 = vadd.f32 %v1496, %v1552
      %v1561 = vadd.f32 %v1497, %v1553
      %v1562 = vadd.f32 %v1498, %v1554
      %v1563 = vadd.f32 %v1499, %v1555
      %s1564 = scalar_lea.vmem %s2, 5
      %v1565 = vld [vmem:[%s1564] sm:$0x1]
      %1567 = vset.pattern.permute.xlu0 0
      %1568 = vperm.xlu0 %1567, %v1119
      %v1569 = vpop.permute.xlu0 %1568
      %1572 = vset.pattern.permute.xlu0 0
      %1573 = vperm.xlu0 %1572, %v1122
      %v1574 = vpop.permute.xlu0 %1573
      %1577 = vset.pattern.permute.xlu0 0
      %1578 = vperm.xlu0 %1577, %v1127
      %v1579 = vpop.permute.xlu0 %1578
      %1582 = vset.pattern.permute.xlu0 0
      %1583 = vperm.xlu0 %1582, %v1130
      %v1584 = vpop.permute.xlu0 %1583
      %1587 = vset.pattern.permute.xlu0 0
      %1588 = vperm.xlu0 %1587, %v1135
      %v1589 = vpop.permute.xlu0 %1588
      %1592 = vset.pattern.permute.xlu0 0
      %1593 = vperm.xlu0 %1592, %v1138
      %v1594 = vpop.permute.xlu0 %1593
      %1597 = vset.pattern.permute.xlu0 0
      %1598 = vperm.xlu0 %1597, %v1143
      %v1599 = vpop.permute.xlu0 %1598
      %1602 = vset.pattern.permute.xlu0 0
      %1603 = vperm.xlu0 %1602, %v1146
      %v1604 = vpop.permute.xlu0 %1603
      %v1607 = vlaneseq
      %v1608 = vshrl.u32 %v1607, 7
      %v1609 = vsub.s32 0, %v1608
      %v1610 = vrot.slane %v1565, %v1609
      %v1612 = vmul.f32 %v1569, %v1610
      %v1613 = vmul.f32 %v1574, %v1610
      %v1614 = vmul.f32 %v1579, %v1610
      %v1615 = vmul.f32 %v1584, %v1610
      %v1616 = vmul.f32 %v1589, %v1610
      %v1617 = vmul.f32 %v1594, %v1610
      %v1618 = vmul.f32 %v1599, %v1610
      %v1619 = vmul.f32 %v1604, %v1610
      %v1620 = vadd.f32 %v1556, %v1612
      %v1621 = vadd.f32 %v1557, %v1613
      %v1622 = vadd.f32 %v1558, %v1614
      %v1623 = vadd.f32 %v1559, %v1615
      %v1624 = vadd.f32 %v1560, %v1616
      %v1625 = vadd.f32 %v1561, %v1617
      %v1626 = vadd.f32 %v1562, %v1618
      %v1627 = vadd.f32 %v1563, %v1619
      %s1628 = scalar_lea.vmem %s2, 6
      %v1629 = vld [vmem:[%s1628] sm:$0x1]
      %1631 = vset.pattern.permute.xlu0 0
      %1632 = vperm.xlu0 %1631, %v1151
      %v1633 = vpop.permute.xlu0 %1632
      %1636 = vset.pattern.permute.xlu0 0
      %1637 = vperm.xlu0 %1636, %v1154
      %v1638 = vpop.permute.xlu0 %1637
      %1641 = vset.pattern.permute.xlu0 0
      %1642 = vperm.xlu0 %1641, %v1159
      %v1643 = vpop.permute.xlu0 %1642
      %1646 = vset.pattern.permute.xlu0 0
      %1647 = vperm.xlu0 %1646, %v1162
      %v1648 = vpop.permute.xlu0 %1647
      %1651 = vset.pattern.permute.xlu0 0
      %1652 = vperm.xlu0 %1651, %v1167
      %v1653 = vpop.permute.xlu0 %1652
      %1656 = vset.pattern.permute.xlu0 0
      %1657 = vperm.xlu0 %1656, %v1170
      %v1658 = vpop.permute.xlu0 %1657
      %1661 = vset.pattern.permute.xlu0 0
      %1662 = vperm.xlu0 %1661, %v1175
      %v1663 = vpop.permute.xlu0 %1662
      %1666 = vset.pattern.permute.xlu0 0
      %1667 = vperm.xlu0 %1666, %v1178
      %v1668 = vpop.permute.xlu0 %1667
      %v1671 = vlaneseq
      %v1672 = vshrl.u32 %v1671, 7
      %v1673 = vsub.s32 0, %v1672
      %v1674 = vrot.slane %v1629, %v1673
      %v1676 = vmul.f32 %v1633, %v1674
      %v1677 = vmul.f32 %v1638, %v1674
      %v1678 = vmul.f32 %v1643, %v1674
      %v1679 = vmul.f32 %v1648, %v1674
      %v1680 = vmul.f32 %v1653, %v1674
      %v1681 = vmul.f32 %v1658, %v1674
      %v1682 = vmul.f32 %v1663, %v1674
      %v1683 = vmul.f32 %v1668, %v1674
      %v1684 = vadd.f32 %v1620, %v1676
      %v1685 = vadd.f32 %v1621, %v1677
      %v1686 = vadd.f32 %v1622, %v1678
      %v1687 = vadd.f32 %v1623, %v1679
      %v1688 = vadd.f32 %v1624, %v1680
      %v1689 = vadd.f32 %v1625, %v1681
      %v1690 = vadd.f32 %v1626, %v1682
      %v1691 = vadd.f32 %v1627, %v1683
      %s1692 = scalar_lea.vmem %s2, 7
      %v1693 = vld [vmem:[%s1692] sm:$0x1]
      %1695 = vset.pattern.permute.xlu0 0
      %1696 = vperm.xlu0 %1695, %v1183
      %v1697 = vpop.permute.xlu0 %1696
      %1700 = vset.pattern.permute.xlu0 0
      %1701 = vperm.xlu0 %1700, %v1186
      %v1702 = vpop.permute.xlu0 %1701
      %1705 = vset.pattern.permute.xlu0 0
      %1706 = vperm.xlu0 %1705, %v1191
      %v1707 = vpop.permute.xlu0 %1706
      %1710 = vset.pattern.permute.xlu0 0
      %1711 = vperm.xlu0 %1710, %v1194
      %v1712 = vpop.permute.xlu0 %1711
      %1715 = vset.pattern.permute.xlu0 0
      %1716 = vperm.xlu0 %1715, %v1199
      %v1717 = vpop.permute.xlu0 %1716
      %1720 = vset.pattern.permute.xlu0 0
      %1721 = vperm.xlu0 %1720, %v1202
      %v1722 = vpop.permute.xlu0 %1721
      %1725 = vset.pattern.permute.xlu0 0
      %1726 = vperm.xlu0 %1725, %v1207
      %v1727 = vpop.permute.xlu0 %1726
      %1730 = vset.pattern.permute.xlu0 0
      %1731 = vperm.xlu0 %1730, %v1210
      %v1732 = vpop.permute.xlu0 %1731
      %v1735 = vlaneseq
      %v1736 = vshrl.u32 %v1735, 7
      %v1737 = vsub.s32 0, %v1736
      %v1738 = vrot.slane %v1693, %v1737
      %v1740 = vmul.f32 %v1697, %v1738
      %v1741 = vmul.f32 %v1702, %v1738
      %v1742 = vmul.f32 %v1707, %v1738
      %v1743 = vmul.f32 %v1712, %v1738
      %v1744 = vmul.f32 %v1717, %v1738
      %v1745 = vmul.f32 %v1722, %v1738
      %v1746 = vmul.f32 %v1727, %v1738
      %v1747 = vmul.f32 %v1732, %v1738
      %v1748 = vadd.f32 %v1684, %v1740
      %v1749 = vadd.f32 %v1685, %v1741
      %v1750 = vadd.f32 %v1686, %v1742
      %v1751 = vadd.f32 %v1687, %v1743
      %v1752 = vadd.f32 %v1688, %v1744
      %v1753 = vadd.f32 %v1689, %v1745
      %v1754 = vadd.f32 %v1690, %v1746
      %v1755 = vadd.f32 %v1691, %v1747
      %s1756 = scalar_lea.vmem %s2, 8
      %v1757 = vld [vmem:[%s1756] sm:$0x1]
      %1759 = vset.pattern.permute.xlu0 0
      %1760 = vperm.xlu0 %1759, %v1215
      %v1761 = vpop.permute.xlu0 %1760
      %1764 = vset.pattern.permute.xlu0 0
      %1765 = vperm.xlu0 %1764, %v1218
      %v1766 = vpop.permute.xlu0 %1765
      %1769 = vset.pattern.permute.xlu0 0
      %1770 = vperm.xlu0 %1769, %v1223
      %v1771 = vpop.permute.xlu0 %1770
      %1774 = vset.pattern.permute.xlu0 0
      %1775 = vperm.xlu0 %1774, %v1226
      %v1776 = vpop.permute.xlu0 %1775
      %1779 = vset.pattern.permute.xlu0 0
      %1780 = vperm.xlu0 %1779, %v1231
      %v1781 = vpop.permute.xlu0 %1780
      %1784 = vset.pattern.permute.xlu0 0
      %1785 = vperm.xlu0 %1784, %v1234
      %v1786 = vpop.permute.xlu0 %1785
      %1789 = vset.pattern.permute.xlu0 0
      %1790 = vperm.xlu0 %1789, %v1239
      %v1791 = vpop.permute.xlu0 %1790
      %1794 = vset.pattern.permute.xlu0 0
      %1795 = vperm.xlu0 %1794, %v1242
      %v1796 = vpop.permute.xlu0 %1795
      %v1799 = vlaneseq
      %v1800 = vshrl.u32 %v1799, 7
      %v1801 = vsub.s32 0, %v1800
      %v1802 = vrot.slane %v1757, %v1801
      %v1804 = vmul.f32 %v1761, %v1802
      %v1805 = vmul.f32 %v1766, %v1802
      %v1806 = vmul.f32 %v1771, %v1802
      %v1807 = vmul.f32 %v1776, %v1802
      %v1808 = vmul.f32 %v1781, %v1802
      %v1809 = vmul.f32 %v1786, %v1802
      %v1810 = vmul.f32 %v1791, %v1802
      %v1811 = vmul.f32 %v1796, %v1802
      %v1812 = vadd.f32 %v1748, %v1804
      %v1813 = vadd.f32 %v1749, %v1805
      %v1814 = vadd.f32 %v1750, %v1806
      %v1815 = vadd.f32 %v1751, %v1807
      %v1816 = vadd.f32 %v1752, %v1808
      %v1817 = vadd.f32 %v1753, %v1809
      %v1818 = vadd.f32 %v1754, %v1810
      %v1819 = vadd.f32 %v1755, %v1811
      %v1820 = vld [vmem:[%s3] sm:$0x1]
      %v1822 = vlaneseq
      %v1823 = vshrl.u32 %v1822, 7
      %v1824 = vsub.s32 0, %v1823
      %v1825 = vrot.slane %v1820, %v1824
      %v1827 = vadd.f32 %v1812, %v1825
      %v1828 = vadd.f32 %v1813, %v1825
      %v1829 = vadd.f32 %v1814, %v1825
      %v1830 = vadd.f32 %v1815, %v1825
      %v1831 = vadd.f32 %v1816, %v1825
      %v1832 = vadd.f32 %v1817, %v1825
      %v1833 = vadd.f32 %v1818, %v1825
      %v1834 = vadd.f32 %v1819, %v1825
      %v1835 = vmax.f32 %v1827, 0.0
      %v1836 = vmax.f32 %v1828, 0.0
      %v1837 = vmax.f32 %v1829, 0.0
      %v1838 = vmax.f32 %v1830, 0.0
      %v1839 = vmax.f32 %v1831, 0.0
      %v1840 = vmax.f32 %v1832, 0.0
      %v1841 = vmax.f32 %v1833, 0.0
      %v1842 = vmax.f32 %v1834, 0.0
      %v1843 = vpack.c.bf16 %v1836, %v1835
      %v1844 = vpack.c.bf16 %v1838, %v1837
      %v1845 = vpack.c.bf16 %v1840, %v1839
      %v1846 = vpack.c.bf16 %v1842, %v1841
      %v1847 = vld [vmem:[%s4] sm:$0xf]
      %v1848 = vld [vmem:[%s4 + $0x4] sm:$0xf]
      %v1849 = vld [vmem:[%s4 + $0x8] sm:$0xf]
      %v1850 = vld [vmem:[%s4 + $0xc] sm:$0xf]
      %v1851 = vld [vmem:[%s4 + $0x10] sm:$0xf]
      %v1852 = vld [vmem:[%s4 + $0x14] sm:$0xf]
      %v1853 = vld [vmem:[%s4 + $0x18] sm:$0xf]
      %v1854 = vld [vmem:[%s4 + $0x1c] sm:$0xf]
      %v1855 = vld [vmem:[%s4 + $0x20] sm:$0xf]
      %v1856 = vld [vmem:[%s4 + $0x24] sm:$0xf]
      %v1857 = vld [vmem:[%s4 + $0x28] sm:$0xf]
      %v1858 = vld [vmem:[%s4 + $0x2c] sm:$0xf]
      %v1859 = vld [vmem:[%s4 + $0x30] sm:$0xf]
      %v1860 = vld [vmem:[%s4 + $0x34] sm:$0xf]
      %v1861 = vld [vmem:[%s4 + $0x38] sm:$0xf]
      %v1862 = vld [vmem:[%s4 + $0x3c] sm:$0xf]
      %v1863 = vld [vmem:[%s4 + $0x40] sm:$0xf]
      %v1864 = vld [vmem:[%s4 + $0x44] sm:$0xf]
      %v1883 = vunpack.c.l.b16 %v1847
      %v1884 = vunpack.c.l.b16 %v1848
      %v1885 = vunpack.c.l.b16 %v1849
      %v1886 = vunpack.c.l.b16 %v1850
      %v1887 = vunpack.c.l.b16 %v1851
      %v1888 = vunpack.c.l.b16 %v1852
      %v1889 = vunpack.c.l.b16 %v1853
      %v1890 = vunpack.c.l.b16 %v1854
      %v1891 = vunpack.c.l.b16 %v1855
      %v1892 = vunpack.c.l.b16 %v1856
      %v1893 = vunpack.c.l.b16 %v1857
      %v1894 = vunpack.c.l.b16 %v1858
      %v1895 = vunpack.c.l.b16 %v1859
      %v1896 = vunpack.c.l.b16 %v1860
      %v1897 = vunpack.c.l.b16 %v1861
      %v1898 = vunpack.c.l.b16 %v1862
      %v1899 = vunpack.c.l.b16 %v1863
      %v1900 = vunpack.c.l.b16 %v1864
      %v1901 = vpack.c.b16 %v1884, %v1883
      %v1902 = vpack.c.b16 %v1886, %v1885
      %v1903 = vpack.c.b16 %v1888, %v1887
      %v1904 = vpack.c.b16 %v1890, %v1889
      %v1905 = vpack.c.b16 %v1892, %v1891
      %v1906 = vpack.c.b16 %v1894, %v1893
      %v1907 = vpack.c.b16 %v1896, %v1895
      %v1908 = vpack.c.b16 %v1898, %v1897
      %v1909 = vpack.c.b16 %v1900, %v1899
      %vm1910 = vcmask 523264
      %v1912 = vsel %vm1910, %v1901, 0
      %v1915 = vsel %vm1910, %v1902, 0
      %v1918 = vsel %vm1910, %v1903, 0
      %v1921 = vsel %vm1910, %v1904, 0
      %v1924 = vsel %vm1910, %v1905, 0
      %v1927 = vsel %vm1910, %v1906, 0
      %v1930 = vsel %vm1910, %v1907, 0
      %v1933 = vsel %vm1910, %v1908, 0
      %v1936 = vsel %vm1910, %v1909, 0
      %1938 = vmatprep.subr.bf16.mxu0 0
      %1939 = vmatpush1.bf16.msra.mxu0 %v1843
      %1940 = vmatprep.subr.bf16.mxu0 0
      %1941 = vmatpush1.bf16.msra.mxu0 %v1844
      %1942 = vmatprep.subr.bf16.mxu0 0
      %1943 = vmatpush1.bf16.msra.mxu0 %v1845
      %1944 = vmatprep.subr.bf16.mxu0 0
      %1945 = vmatpush1.bf16.msra.mxu0 %v1846
      %1946 = vmatprep.subr.bf16.mxu0 0
      %1947 = vmatpush1.bf16.msra.mxu0 0
      %1948 = vmatprep.subr.bf16.mxu0 0
      %1949 = vmatpush1.bf16.msra.mxu0 0
      %1950 = vmatprep.subr.bf16.mxu0 0
      %1951 = vmatpush1.bf16.msra.mxu0 0
      %1952 = vmatprep.subr.bf16.mxu0 0
      %1953 = vmatpush1.bf16.msra.mxu0 0
      %1954 = vmatprep.subr.bf16.mxu0 0
      %1955 = vmatpush1.bf16.msra.mxu0 0
      %1956 = vmatprep.subr.bf16.mxu0 0
      %1957 = vmatpush1.bf16.msra.mxu0 0
      %1958 = vmatprep.subr.bf16.mxu0 0
      %1959 = vmatpush1.bf16.msra.mxu0 0
      %1960 = vmatprep.subr.bf16.mxu0 0
      %1961 = vmatpush1.bf16.msra.mxu0 0
      %1962 = vmatprep.subr.bf16.mxu0 0
      %1963 = vmatpush1.bf16.msra.mxu0 0
      %1964 = vmatprep.subr.bf16.mxu0 0
      %1965 = vmatpush1.bf16.msra.mxu0 0
      %1966 = vmatprep.subr.bf16.mxu0 0
      %1967 = vmatpush1.bf16.msra.mxu0 0
      %1968 = vmatprep.subr.bf16.mxu0 0
      %1969 = vmatpush1.bf16.msra.mxu0 0
      %1970 = vmatprep.mubr.bf16.mxu0 0
      %1971 = vmatmul.mubr.bf16.gmra.mrb[0].mxu0 %v1912
      %v1972 = vpop.f32.mrb[0].mxu0
      %v1973 = vadd.f32 0.0, %v1972
      %v1974 = vpop.f32.mrb[0].mxu0
      %v1975 = vpop.f32.mrb[0].mxu0
      %v1976 = vadd.f32 0.0, %v1975
      %v1977 = vpop.f32.mrb[0].mxu0
      %1978 = vmatprep.mubr.bf16.mxu0 0
      %1979 = vmatmul.mubr.bf16.gmra.mrb[0].mxu0 %v1915
      %v1980 = vpop.f32.mrb[0].mxu0
      %v1981 = vadd.f32 0.0, %v1980
      %v1982 = vpop.f32.mrb[0].mxu0
      %v1983 = vpop.f32.mrb[0].mxu0
      %v1984 = vadd.f32 0.0, %v1983
      %v1985 = vpop.f32.mrb[0].mxu0
      %1986 = vmatprep.mubr.bf16.mxu0 0
      %1987 = vmatmul.mubr.bf16.gmra.mrb[0].mxu0 %v1918
      %v1988 = vpop.f32.mrb[0].mxu0
      %v1989 = vadd.f32 0.0, %v1988
      %v1990 = vpop.f32.mrb[0].mxu0
      %v1991 = vpop.f32.mrb[0].mxu0
      %v1992 = vadd.f32 0.0, %v1991
      %v1993 = vpop.f32.mrb[0].mxu0
      %1994 = vmatprep.mubr.bf16.mxu0 0
      %1995 = vmatmul.mubr.bf16.gmra.mrb[0].mxu0 %v1921
      %v1996 = vpop.f32.mrb[0].mxu0
      %v1997 = vadd.f32 0.0, %v1996
      %v1998 = vpop.f32.mrb[0].mxu0
      %v1999 = vpop.f32.mrb[0].mxu0
      %v2000 = vadd.f32 0.0, %v1999
      %v2001 = vpop.f32.mrb[0].mxu0
      %2002 = vmatprep.mubr.bf16.mxu0 0
      %2003 = vmatmul.mubr.bf16.gmra.mrb[0].mxu0 %v1924
      %v2004 = vpop.f32.mrb[0].mxu0
      %v2005 = vadd.f32 0.0, %v2004
      %v2006 = vpop.f32.mrb[0].mxu0
      %v2007 = vpop.f32.mrb[0].mxu0
      %v2008 = vadd.f32 0.0, %v2007
      %v2009 = vpop.f32.mrb[0].mxu0
      %2010 = vmatprep.mubr.bf16.mxu0 0
      %2011 = vmatmul.mubr.bf16.gmra.mrb[0].mxu0 %v1927
      %v2012 = vpop.f32.mrb[0].mxu0
      %v2013 = vadd.f32 0.0, %v2012
      %v2014 = vpop.f32.mrb[0].mxu0
      %v2015 = vpop.f32.mrb[0].mxu0
      %v2016 = vadd.f32 0.0, %v2015
      %v2017 = vpop.f32.mrb[0].mxu0
      %2018 = vmatprep.mubr.bf16.mxu0 0
      %2019 = vmatmul.mubr.bf16.gmra.mrb[0].mxu0 %v1930
      %v2020 = vpop.f32.mrb[0].mxu0
      %v2021 = vadd.f32 0.0, %v2020
      %v2022 = vpop.f32.mrb[0].mxu0
      %v2023 = vpop.f32.mrb[0].mxu0
      %v2024 = vadd.f32 0.0, %v2023
      %v2025 = vpop.f32.mrb[0].mxu0
      %2026 = vmatprep.mubr.bf16.mxu0 0
      %2027 = vmatmul.mubr.bf16.gmra.mrb[0].mxu0 %v1933
      %v2028 = vpop.f32.mrb[0].mxu0
      %v2029 = vadd.f32 0.0, %v2028
      %v2030 = vpop.f32.mrb[0].mxu0
      %v2031 = vpop.f32.mrb[0].mxu0
      %v2032 = vadd.f32 0.0, %v2031
      %v2033 = vpop.f32.mrb[0].mxu0
      %2034 = vmatprep.mubr.bf16.mxu0 0
      %2035 = vmatmul.mubr.bf16.gmra.mrb[0].mxu0 %v1936
      %v2036 = vpop.f32.mrb[0].mxu0
      %v2037 = vadd.f32 0.0, %v2036
      %v2038 = vpop.f32.mrb[0].mxu0
      %v2039 = vpop.f32.mrb[0].mxu0
      %v2040 = vadd.f32 0.0, %v2039
      %v2041 = vpop.f32.mrb[0].mxu0
      %2042 = vdwg.mxu0
      %v2043 = vpack.c.bf16 %v1976, %v1973
      %v2044 = vld [vmem:[%s5] sm:$0xf]
      %v2045 = vld [vmem:[%s5 + $0x4] sm:$0xf]
      %v2046 = vld [vmem:[%s5 + $0x8] sm:$0xf]
      %v2047 = vld [vmem:[%s5 + $0xc] sm:$0xf]
      %v2048 = vpack.c.bf16 %v1984, %v1981
      %s2049 = scalar_lea.vmem %s5, 16
      %v2050 = vld [vmem:[%s2049] sm:$0xf]
      %v2051 = vld [vmem:[%s2049 + $0x4] sm:$0xf]
      %v2052 = vld [vmem:[%s2049 + $0x8] sm:$0xf]
      %v2053 = vld [vmem:[%s2049 + $0xc] sm:$0xf]
      %v2058 = vunpack.c.l.b16 %v2050
      %v2059 = vunpack.c.l.b16 %v2051
      %v2060 = vunpack.c.l.b16 %v2052
      %v2061 = vunpack.c.l.b16 %v2053
      %v2062 = vpack.c.b16 %v2059, %v2058
      %v2063 = vpack.c.b16 %v2061, %v2060
      %vm2066 = vcmask 261120
      %v2068 = vsel %vm2066, %v2048, 0
      %2070 = vmatprep.subr.bf16.mxu0 0
      %2071 = vmatpush1.bf16.msra.mxu0 %v2062
      %2072 = vmatprep.subr.bf16.mxu0 0
      %2073 = vmatpush1.bf16.msra.mxu0 %v2063
      %2074 = vmatprep.subr.bf16.mxu0 0
      %2075 = vmatpush1.bf16.msra.mxu0 0
      %2076 = vmatprep.subr.bf16.mxu0 0
      %2077 = vmatpush1.bf16.msra.mxu0 0
      %2078 = vmatprep.subr.bf16.mxu0 0
      %2079 = vmatpush1.bf16.msra.mxu0 0
      %2080 = vmatprep.subr.bf16.mxu0 0
      %2081 = vmatpush1.bf16.msra.mxu0 0
      %2082 = vmatprep.subr.bf16.mxu0 0
      %2083 = vmatpush1.bf16.msra.mxu0 0
      %2084 = vmatprep.subr.bf16.mxu0 0
      %2085 = vmatpush1.bf16.msra.mxu0 0
      %2086 = vmatprep.subr.bf16.mxu0 0
      %2087 = vmatpush1.bf16.msra.mxu0 0
      %2088 = vmatprep.subr.bf16.mxu0 0
      %2089 = vmatpush1.bf16.msra.mxu0 0
      %2090 = vmatprep.subr.bf16.mxu0 0
      %2091 = vmatpush1.bf16.msra.mxu0 0
      %2092 = vmatprep.subr.bf16.mxu0 0
      %2093 = vmatpush1.bf16.msra.mxu0 0
      %2094 = vmatprep.subr.bf16.mxu0 0
      %2095 = vmatpush1.bf16.msra.mxu0 0
      %2096 = vmatprep.subr.bf16.mxu0 0
      %2097 = vmatpush1.bf16.msra.mxu0 0
      %2098 = vmatprep.subr.bf16.mxu0 0
      %2099 = vmatpush1.bf16.msra.mxu0 0
      %2100 = vmatprep.subr.bf16.mxu0 0
      %2101 = vmatpush1.bf16.msra.mxu0 0
      %2102 = vmatprep.mubr.bf16.mxu0 0
      %2103 = vmatmul.mubr.bf16.gmra.mrb[0].mxu0 %v2068
      %v2104 = vpop.f32.mrb[0].mxu0
      %v2105 = vadd.f32 0.0, %v2104
      %v2106 = vpop.f32.mrb[0].mxu0
      %v2107 = vpop.f32.mrb[0].mxu0
      %v2108 = vadd.f32 0.0, %v2107
      %v2109 = vpop.f32.mrb[0].mxu0
      %2110 = vdwg.mxu0
      %v2115 = vunpack.c.l.b16 %v2044
      %v2116 = vunpack.c.l.b16 %v2045
      %v2117 = vunpack.c.l.b16 %v2046
      %v2118 = vunpack.c.l.b16 %v2047
      %v2119 = vpack.c.b16 %v2116, %v2115
      %v2120 = vpack.c.b16 %v2118, %v2117
      %v2124 = vsel %vm2066, %v2043, 0
      %2126 = vmatprep.subr.bf16.mxu0 0
      %2127 = vmatpush1.bf16.msra.mxu0 %v2119
      %2128 = vmatprep.subr.bf16.mxu0 0
      %2129 = vmatpush1.bf16.msra.mxu0 %v2120
      %2130 = vmatprep.subr.bf16.mxu0 0
      %2131 = vmatpush1.bf16.msra.mxu0 0
      %2132 = vmatprep.subr.bf16.mxu0 0
      %2133 = vmatpush1.bf16.msra.mxu0 0
      %2134 = vmatprep.subr.bf16.mxu0 0
      %2135 = vmatpush1.bf16.msra.mxu0 0
      %2136 = vmatprep.subr.bf16.mxu0 0
      %2137 = vmatpush1.bf16.msra.mxu0 0
      %2138 = vmatprep.subr.bf16.mxu0 0
      %2139 = vmatpush1.bf16.msra.mxu0 0
      %2140 = vmatprep.subr.bf16.mxu0 0
      %2141 = vmatpush1.bf16.msra.mxu0 0
      %2142 = vmatprep.subr.bf16.mxu0 0
      %2143 = vmatpush1.bf16.msra.mxu0 0
      %2144 = vmatprep.subr.bf16.mxu0 0
      %2145 = vmatpush1.bf16.msra.mxu0 0
      %2146 = vmatprep.subr.bf16.mxu0 0
      %2147 = vmatpush1.bf16.msra.mxu0 0
      %2148 = vmatprep.subr.bf16.mxu0 0
      %2149 = vmatpush1.bf16.msra.mxu0 0
      %2150 = vmatprep.subr.bf16.mxu0 0
      %2151 = vmatpush1.bf16.msra.mxu0 0
      %2152 = vmatprep.subr.bf16.mxu0 0
      %2153 = vmatpush1.bf16.msra.mxu0 0
      %2154 = vmatprep.subr.bf16.mxu0 0
      %2155 = vmatpush1.bf16.msra.mxu0 0
      %2156 = vmatprep.subr.bf16.mxu0 0
      %2157 = vmatpush1.bf16.msra.mxu0 0
      %2158 = vmatprep.mubr.bf16.mxu0 0
      %2159 = vmatmul.mubr.bf16.gmra.mrb[0].mxu0 %v2124
      %v2160 = vpop.f32.mrb[0].mxu0
      %v2161 = vadd.f32 %v2105, %v2160
      %v2162 = vpop.f32.mrb[0].mxu0
      %v2163 = vpop.f32.mrb[0].mxu0
      %v2164 = vadd.f32 %v2108, %v2163
      %v2165 = vpop.f32.mrb[0].mxu0
      %2166 = vdwg.mxu0
      %v2167 = vpack.c.bf16 %v1992, %v1989
      %s2168 = scalar_lea.vmem %s5, 32
      %v2169 = vld [vmem:[%s2168] sm:$0xf]
      %v2170 = vld [vmem:[%s2168 + $0x4] sm:$0xf]
      %v2171 = vld [vmem:[%s2168 + $0x8] sm:$0xf]
      %v2172 = vld [vmem:[%s2168 + $0xc] sm:$0xf]
      %v2177 = vunpack.c.l.b16 %v2169
      %v2178 = vunpack.c.l.b16 %v2170
      %v2179 = vunpack.c.l.b16 %v2171
      %v2180 = vunpack.c.l.b16 %v2172
      %v2181 = vpack.c.b16 %v2178, %v2177
      %v2182 = vpack.c.b16 %v2180, %v2179
      %v2186 = vsel %vm2066, %v2167, 0
      %2188 = vmatprep.subr.bf16.mxu0 0
      %2189 = vmatpush1.bf16.msra.mxu0 %v2181
      %2190 = vmatprep.subr.bf16.mxu0 0
      %2191 = vmatpush1.bf16.msra.mxu0 %v2182
      %2192 = vmatprep.subr.bf16.mxu0 0
      %2193 = vmatpush1.bf16.msra.mxu0 0
      %2194 = vmatprep.subr.bf16.mxu0 0
      %2195 = vmatpush1.bf16.msra.mxu0 0
      %2196 = vmatprep.subr.bf16.mxu0 0
      %2197 = vmatpush1.bf16.msra.mxu0 0
      %2198 = vmatprep.subr.bf16.mxu0 0
      %2199 = vmatpush1.bf16.msra.mxu0 0
      %2200 = vmatprep.subr.bf16.mxu0 0
      %2201 = vmatpush1.bf16.msra.mxu0 0
      %2202 = vmatprep.subr.bf16.mxu0 0
      %2203 = vmatpush1.bf16.msra.mxu0 0
      %2204 = vmatprep.subr.bf16.mxu0 0
      %2205 = vmatpush1.bf16.msra.mxu0 0
      %2206 = vmatprep.subr.bf16.mxu0 0
      %2207 = vmatpush1.bf16.msra.mxu0 0
      %2208 = vmatprep.subr.bf16.mxu0 0
      %2209 = vmatpush1.bf16.msra.mxu0 0
      %2210 = vmatprep.subr.bf16.mxu0 0
      %2211 = vmatpush1.bf16.msra.mxu0 0
      %2212 = vmatprep.subr.bf16.mxu0 0
      %2213 = vmatpush1.bf16.msra.mxu0 0
      %2214 = vmatprep.subr.bf16.mxu0 0
      %2215 = vmatpush1.bf16.msra.mxu0 0
      %2216 = vmatprep.subr.bf16.mxu0 0
      %2217 = vmatpush1.bf16.msra.mxu0 0
      %2218 = vmatprep.subr.bf16.mxu0 0
      %2219 = vmatpush1.bf16.msra.mxu0 0
      %2220 = vmatprep.mubr.bf16.mxu0 0
      %2221 = vmatmul.mubr.bf16.gmra.mrb[0].mxu0 %v2186
      %v2222 = vpop.f32.mrb[0].mxu0
      %v2223 = vadd.f32 0.0, %v2222
      %v2224 = vpop.f32.mrb[0].mxu0
      %v2225 = vpop.f32.mrb[0].mxu0
      %v2226 = vadd.f32 0.0, %v2225
      %v2227 = vpop.f32.mrb[0].mxu0
      %2228 = vdwg.mxu0
      %v2229 = vadd.f32 %v2161, %v2223
      %v2230 = vadd.f32 %v2164, %v2226
      %v2231 = vpack.c.bf16 %v2000, %v1997
      %s2232 = scalar_lea.vmem %s5, 48
      %v2233 = vld [vmem:[%s2232] sm:$0xf]
      %v2234 = vld [vmem:[%s2232 + $0x4] sm:$0xf]
      %v2235 = vld [vmem:[%s2232 + $0x8] sm:$0xf]
      %v2236 = vld [vmem:[%s2232 + $0xc] sm:$0xf]
      %v2241 = vunpack.c.l.b16 %v2233
      %v2242 = vunpack.c.l.b16 %v2234
      %v2243 = vunpack.c.l.b16 %v2235
      %v2244 = vunpack.c.l.b16 %v2236
      %v2245 = vpack.c.b16 %v2242, %v2241
      %v2246 = vpack.c.b16 %v2244, %v2243
      %v2250 = vsel %vm2066, %v2231, 0
      %2252 = vmatprep.subr.bf16.mxu0 0
      %2253 = vmatpush1.bf16.msra.mxu0 %v2245
      %2254 = vmatprep.subr.bf16.mxu0 0
      %2255 = vmatpush1.bf16.msra.mxu0 %v2246
      %2256 = vmatprep.subr.bf16.mxu0 0
      %2257 = vmatpush1.bf16.msra.mxu0 0
      %2258 = vmatprep.subr.bf16.mxu0 0
      %2259 = vmatpush1.bf16.msra.mxu0 0
      %2260 = vmatprep.subr.bf16.mxu0 0
      %2261 = vmatpush1.bf16.msra.mxu0 0
      %2262 = vmatprep.subr.bf16.mxu0 0
      %2263 = vmatpush1.bf16.msra.mxu0 0
      %2264 = vmatprep.subr.bf16.mxu0 0
      %2265 = vmatpush1.bf16.msra.mxu0 0
      %2266 = vmatprep.subr.bf16.mxu0 0
      %2267 = vmatpush1.bf16.msra.mxu0 0
      %2268 = vmatprep.subr.bf16.mxu0 0
      %2269 = vmatpush1.bf16.msra.mxu0 0
      %2270 = vmatprep.subr.bf16.mxu0 0
      %2271 = vmatpush1.bf16.msra.mxu0 0
      %2272 = vmatprep.subr.bf16.mxu0 0
      %2273 = vmatpush1.bf16.msra.mxu0 0
      %2274 = vmatprep.subr.bf16.mxu0 0
      %2275 = vmatpush1.bf16.msra.mxu0 0
      %2276 = vmatprep.subr.bf16.mxu0 0
      %2277 = vmatpush1.bf16.msra.mxu0 0
      %2278 = vmatprep.subr.bf16.mxu0 0
      %2279 = vmatpush1.bf16.msra.mxu0 0
      %2280 = vmatprep.subr.bf16.mxu0 0
      %2281 = vmatpush1.bf16.msra.mxu0 0
      %2282 = vmatprep.subr.bf16.mxu0 0
      %2283 = vmatpush1.bf16.msra.mxu0 0
      %2284 = vmatprep.mubr.bf16.mxu0 0
      %2285 = vmatmul.mubr.bf16.gmra.mrb[0].mxu0 %v2250
      %v2286 = vpop.f32.mrb[0].mxu0
      %v2287 = vadd.f32 0.0, %v2286
      %v2288 = vpop.f32.mrb[0].mxu0
      %v2289 = vpop.f32.mrb[0].mxu0
      %v2290 = vadd.f32 0.0, %v2289
      %v2291 = vpop.f32.mrb[0].mxu0
      %2292 = vdwg.mxu0
      %v2293 = vadd.f32 %v2229, %v2287
      %v2294 = vadd.f32 %v2230, %v2290
      %v2295 = vpack.c.bf16 %v2008, %v2005
      %s2296 = scalar_lea.vmem %s5, 64
      %v2297 = vld [vmem:[%s2296] sm:$0xf]
      %v2298 = vld [vmem:[%s2296 + $0x4] sm:$0xf]
      %v2299 = vld [vmem:[%s2296 + $0x8] sm:$0xf]
      %v2300 = vld [vmem:[%s2296 + $0xc] sm:$0xf]
      %v2305 = vunpack.c.l.b16 %v2297
      %v2306 = vunpack.c.l.b16 %v2298
      %v2307 = vunpack.c.l.b16 %v2299
      %v2308 = vunpack.c.l.b16 %v2300
      %v2309 = vpack.c.b16 %v2306, %v2305
      %v2310 = vpack.c.b16 %v2308, %v2307
      %v2314 = vsel %vm2066, %v2295, 0
      %2316 = vmatprep.subr.bf16.mxu0 0
      %2317 = vmatpush1.bf16.msra.mxu0 %v2309
      %2318 = vmatprep.subr.bf16.mxu0 0
      %2319 = vmatpush1.bf16.msra.mxu0 %v2310
      %2320 = vmatprep.subr.bf16.mxu0 0
      %2321 = vmatpush1.bf16.msra.mxu0 0
      %2322 = vmatprep.subr.bf16.mxu0 0
      %2323 = vmatpush1.bf16.msra.mxu0 0
      %2324 = vmatprep.subr.bf16.mxu0 0
      %2325 = vmatpush1.bf16.msra.mxu0 0
      %2326 = vmatprep.subr.bf16.mxu0 0
      %2327 = vmatpush1.bf16.msra.mxu0 0
      %2328 = vmatprep.subr.bf16.mxu0 0
      %2329 = vmatpush1.bf16.msra.mxu0 0
      %2330 = vmatprep.subr.bf16.mxu0 0
      %2331 = vmatpush1.bf16.msra.mxu0 0
      %2332 = vmatprep.subr.bf16.mxu0 0
      %2333 = vmatpush1.bf16.msra.mxu0 0
      %2334 = vmatprep.subr.bf16.mxu0 0
      %2335 = vmatpush1.bf16.msra.mxu0 0
      %2336 = vmatprep.subr.bf16.mxu0 0
      %2337 = vmatpush1.bf16.msra.mxu0 0
      %2338 = vmatprep.subr.bf16.mxu0 0
      %2339 = vmatpush1.bf16.msra.mxu0 0
      %2340 = vmatprep.subr.bf16.mxu0 0
      %2341 = vmatpush1.bf16.msra.mxu0 0
      %2342 = vmatprep.subr.bf16.mxu0 0
      %2343 = vmatpush1.bf16.msra.mxu0 0
      %2344 = vmatprep.subr.bf16.mxu0 0
      %2345 = vmatpush1.bf16.msra.mxu0 0
      %2346 = vmatprep.subr.bf16.mxu0 0
      %2347 = vmatpush1.bf16.msra.mxu0 0
      %2348 = vmatprep.mubr.bf16.mxu0 0
      %2349 = vmatmul.mubr.bf16.gmra.mrb[0].mxu0 %v2314
      %v2350 = vpop.f32.mrb[0].mxu0
      %v2351 = vadd.f32 0.0, %v2350
      %v2352 = vpop.f32.mrb[0].mxu0
      %v2353 = vpop.f32.mrb[0].mxu0
      %v2354 = vadd.f32 0.0, %v2353
      %v2355 = vpop.f32.mrb[0].mxu0
      %2356 = vdwg.mxu0
      %v2357 = vadd.f32 %v2293, %v2351
      %v2358 = vadd.f32 %v2294, %v2354
      %v2359 = vpack.c.bf16 %v2016, %v2013
      %s2360 = scalar_lea.vmem %s5, 80
      %v2361 = vld [vmem:[%s2360] sm:$0xf]
      %v2362 = vld [vmem:[%s2360 + $0x4] sm:$0xf]
      %v2363 = vld [vmem:[%s2360 + $0x8] sm:$0xf]
      %v2364 = vld [vmem:[%s2360 + $0xc] sm:$0xf]
      %v2369 = vunpack.c.l.b16 %v2361
      %v2370 = vunpack.c.l.b16 %v2362
      %v2371 = vunpack.c.l.b16 %v2363
      %v2372 = vunpack.c.l.b16 %v2364
      %v2373 = vpack.c.b16 %v2370, %v2369
      %v2374 = vpack.c.b16 %v2372, %v2371
      %v2378 = vsel %vm2066, %v2359, 0
      %2380 = vmatprep.subr.bf16.mxu0 0
      %2381 = vmatpush1.bf16.msra.mxu0 %v2373
      %2382 = vmatprep.subr.bf16.mxu0 0
      %2383 = vmatpush1.bf16.msra.mxu0 %v2374
      %2384 = vmatprep.subr.bf16.mxu0 0
      %2385 = vmatpush1.bf16.msra.mxu0 0
      %2386 = vmatprep.subr.bf16.mxu0 0
      %2387 = vmatpush1.bf16.msra.mxu0 0
      %2388 = vmatprep.subr.bf16.mxu0 0
      %2389 = vmatpush1.bf16.msra.mxu0 0
      %2390 = vmatprep.subr.bf16.mxu0 0
      %2391 = vmatpush1.bf16.msra.mxu0 0
      %2392 = vmatprep.subr.bf16.mxu0 0
      %2393 = vmatpush1.bf16.msra.mxu0 0
      %2394 = vmatprep.subr.bf16.mxu0 0
      %2395 = vmatpush1.bf16.msra.mxu0 0
      %2396 = vmatprep.subr.bf16.mxu0 0
      %2397 = vmatpush1.bf16.msra.mxu0 0
      %2398 = vmatprep.subr.bf16.mxu0 0
      %2399 = vmatpush1.bf16.msra.mxu0 0
      %2400 = vmatprep.subr.bf16.mxu0 0
      %2401 = vmatpush1.bf16.msra.mxu0 0
      %2402 = vmatprep.subr.bf16.mxu0 0
      %2403 = vmatpush1.bf16.msra.mxu0 0
      %2404 = vmatprep.subr.bf16.mxu0 0
      %2405 = vmatpush1.bf16.msra.mxu0 0
      %2406 = vmatprep.subr.bf16.mxu0 0
      %2407 = vmatpush1.bf16.msra.mxu0 0
      %2408 = vmatprep.subr.bf16.mxu0 0
      %2409 = vmatpush1.bf16.msra.mxu0 0
      %2410 = vmatprep.subr.bf16.mxu0 0
      %2411 = vmatpush1.bf16.msra.mxu0 0
      %2412 = vmatprep.mubr.bf16.mxu0 0
      %2413 = vmatmul.mubr.bf16.gmra.mrb[0].mxu0 %v2378
      %v2414 = vpop.f32.mrb[0].mxu0
      %v2415 = vadd.f32 0.0, %v2414
      %v2416 = vpop.f32.mrb[0].mxu0
      %v2417 = vpop.f32.mrb[0].mxu0
      %v2418 = vadd.f32 0.0, %v2417
      %v2419 = vpop.f32.mrb[0].mxu0
      %2420 = vdwg.mxu0
      %v2421 = vadd.f32 %v2357, %v2415
      %v2422 = vadd.f32 %v2358, %v2418
      %v2423 = vpack.c.bf16 %v2024, %v2021
      %s2424 = scalar_lea.vmem %s5, 96
      %v2425 = vld [vmem:[%s2424] sm:$0xf]
      %v2426 = vld [vmem:[%s2424 + $0x4] sm:$0xf]
      %v2427 = vld [vmem:[%s2424 + $0x8] sm:$0xf]
      %v2428 = vld [vmem:[%s2424 + $0xc] sm:$0xf]
      %v2433 = vunpack.c.l.b16 %v2425
      %v2434 = vunpack.c.l.b16 %v2426
      %v2435 = vunpack.c.l.b16 %v2427
      %v2436 = vunpack.c.l.b16 %v2428
      %v2437 = vpack.c.b16 %v2434, %v2433
      %v2438 = vpack.c.b16 %v2436, %v2435
      %v2442 = vsel %vm2066, %v2423, 0
      %2444 = vmatprep.subr.bf16.mxu0 0
      %2445 = vmatpush1.bf16.msra.mxu0 %v2437
      %2446 = vmatprep.subr.bf16.mxu0 0
      %2447 = vmatpush1.bf16.msra.mxu0 %v2438
      %2448 = vmatprep.subr.bf16.mxu0 0
      %2449 = vmatpush1.bf16.msra.mxu0 0
      %2450 = vmatprep.subr.bf16.mxu0 0
      %2451 = vmatpush1.bf16.msra.mxu0 0
      %2452 = vmatprep.subr.bf16.mxu0 0
      %2453 = vmatpush1.bf16.msra.mxu0 0
      %2454 = vmatprep.subr.bf16.mxu0 0
      %2455 = vmatpush1.bf16.msra.mxu0 0
      %2456 = vmatprep.subr.bf16.mxu0 0
      %2457 = vmatpush1.bf16.msra.mxu0 0
      %2458 = vmatprep.subr.bf16.mxu0 0
      %2459 = vmatpush1.bf16.msra.mxu0 0
      %2460 = vmatprep.subr.bf16.mxu0 0
      %2461 = vmatpush1.bf16.msra.mxu0 0
      %2462 = vmatprep.subr.bf16.mxu0 0
      %2463 = vmatpush1.bf16.msra.mxu0 0
      %2464 = vmatprep.subr.bf16.mxu0 0
      %2465 = vmatpush1.bf16.msra.mxu0 0
      %2466 = vmatprep.subr.bf16.mxu0 0
      %2467 = vmatpush1.bf16.msra.mxu0 0
      %2468 = vmatprep.subr.bf16.mxu0 0
      %2469 = vmatpush1.bf16.msra.mxu0 0
      %2470 = vmatprep.subr.bf16.mxu0 0
      %2471 = vmatpush1.bf16.msra.mxu0 0
      %2472 = vmatprep.subr.bf16.mxu0 0
      %2473 = vmatpush1.bf16.msra.mxu0 0
      %2474 = vmatprep.subr.bf16.mxu0 0
      %2475 = vmatpush1.bf16.msra.mxu0 0
      %2476 = vmatprep.mubr.bf16.mxu0 0
      %2477 = vmatmul.mubr.bf16.gmra.mrb[0].mxu0 %v2442
      %v2478 = vpop.f32.mrb[0].mxu0
      %v2479 = vadd.f32 0.0, %v2478
      %v2480 = vpop.f32.mrb[0].mxu0
      %v2481 = vpop.f32.mrb[0].mxu0
      %v2482 = vadd.f32 0.0, %v2481
      %v2483 = vpop.f32.mrb[0].mxu0
      %2484 = vdwg.mxu0
      %v2485 = vadd.f32 %v2421, %v2479
      %v2486 = vadd.f32 %v2422, %v2482
      %v2487 = vpack.c.bf16 %v2032, %v2029
      %s2488 = scalar_lea.vmem %s5, 112
      %v2489 = vld [vmem:[%s2488] sm:$0xf]
      %v2490 = vld [vmem:[%s2488 + $0x4] sm:$0xf]
      %v2491 = vld [vmem:[%s2488 + $0x8] sm:$0xf]
      %v2492 = vld [vmem:[%s2488 + $0xc] sm:$0xf]
      %v2497 = vunpack.c.l.b16 %v2489
      %v2498 = vunpack.c.l.b16 %v2490
      %v2499 = vunpack.c.l.b16 %v2491
      %v2500 = vunpack.c.l.b16 %v2492
      %v2501 = vpack.c.b16 %v2498, %v2497
      %v2502 = vpack.c.b16 %v2500, %v2499
      %v2506 = vsel %vm2066, %v2487, 0
      %2508 = vmatprep.subr.bf16.mxu0 0
      %2509 = vmatpush1.bf16.msra.mxu0 %v2501
      %2510 = vmatprep.subr.bf16.mxu0 0
      %2511 = vmatpush1.bf16.msra.mxu0 %v2502
      %2512 = vmatprep.subr.bf16.mxu0 0
      %2513 = vmatpush1.bf16.msra.mxu0 0
      %2514 = vmatprep.subr.bf16.mxu0 0
      %2515 = vmatpush1.bf16.msra.mxu0 0
      %2516 = vmatprep.subr.bf16.mxu0 0
      %2517 = vmatpush1.bf16.msra.mxu0 0
      %2518 = vmatprep.subr.bf16.mxu0 0
      %2519 = vmatpush1.bf16.msra.mxu0 0
      %2520 = vmatprep.subr.bf16.mxu0 0
      %2521 = vmatpush1.bf16.msra.mxu0 0
      %2522 = vmatprep.subr.bf16.mxu0 0
      %2523 = vmatpush1.bf16.msra.mxu0 0
      %2524 = vmatprep.subr.bf16.mxu0 0
      %2525 = vmatpush1.bf16.msra.mxu0 0
      %2526 = vmatprep.subr.bf16.mxu0 0
      %2527 = vmatpush1.bf16.msra.mxu0 0
      %2528 = vmatprep.subr.bf16.mxu0 0
      %2529 = vmatpush1.bf16.msra.mxu0 0
      %2530 = vmatprep.subr.bf16.mxu0 0
      %2531 = vmatpush1.bf16.msra.mxu0 0
      %2532 = vmatprep.subr.bf16.mxu0 0
      %2533 = vmatpush1.bf16.msra.mxu0 0
      %2534 = vmatprep.subr.bf16.mxu0 0
      %2535 = vmatpush1.bf16.msra.mxu0 0
      %2536 = vmatprep.subr.bf16.mxu0 0
      %2537 = vmatpush1.bf16.msra.mxu0 0
      %2538 = vmatprep.subr.bf16.mxu0 0
      %2539 = vmatpush1.bf16.msra.mxu0 0
      %2540 = vmatprep.mubr.bf16.mxu0 0
      %2541 = vmatmul.mubr.bf16.gmra.mrb[0].mxu0 %v2506
      %v2542 = vpop.f32.mrb[0].mxu0
      %v2543 = vadd.f32 0.0, %v2542
      %v2544 = vpop.f32.mrb[0].mxu0
      %v2545 = vpop.f32.mrb[0].mxu0
      %v2546 = vadd.f32 0.0, %v2545
      %v2547 = vpop.f32.mrb[0].mxu0
      %2548 = vdwg.mxu0
      %v2549 = vadd.f32 %v2485, %v2543
      %v2550 = vadd.f32 %v2486, %v2546
      %v2551 = vpack.c.bf16 %v2040, %v2037
      %s2552 = scalar_lea.vmem %s5, 128
      %v2553 = vld [vmem:[%s2552] sm:$0xf]
      %v2554 = vld [vmem:[%s2552 + $0x4] sm:$0xf]
      %v2555 = vld [vmem:[%s2552 + $0x8] sm:$0xf]
      %v2556 = vld [vmem:[%s2552 + $0xc] sm:$0xf]
      %v2561 = vunpack.c.l.b16 %v2553
      %v2562 = vunpack.c.l.b16 %v2554
      %v2563 = vunpack.c.l.b16 %v2555
      %v2564 = vunpack.c.l.b16 %v2556
      %v2565 = vpack.c.b16 %v2562, %v2561
      %v2566 = vpack.c.b16 %v2564, %v2563
      %v2570 = vsel %vm2066, %v2551, 0
      %2572 = vmatprep.subr.bf16.mxu0 0
      %2573 = vmatpush1.bf16.msra.mxu0 %v2565
      %2574 = vmatprep.subr.bf16.mxu0 0
      %2575 = vmatpush1.bf16.msra.mxu0 %v2566
      %2576 = vmatprep.subr.bf16.mxu0 0
      %2577 = vmatpush1.bf16.msra.mxu0 0
      %2578 = vmatprep.subr.bf16.mxu0 0
      %2579 = vmatpush1.bf16.msra.mxu0 0
      %2580 = vmatprep.subr.bf16.mxu0 0
      %2581 = vmatpush1.bf16.msra.mxu0 0
      %2582 = vmatprep.subr.bf16.mxu0 0
      %2583 = vmatpush1.bf16.msra.mxu0 0
      %2584 = vmatprep.subr.bf16.mxu0 0
      %2585 = vmatpush1.bf16.msra.mxu0 0
      %2586 = vmatprep.subr.bf16.mxu0 0
      %2587 = vmatpush1.bf16.msra.mxu0 0
      %2588 = vmatprep.subr.bf16.mxu0 0
      %2589 = vmatpush1.bf16.msra.mxu0 0
      %2590 = vmatprep.subr.bf16.mxu0 0
      %2591 = vmatpush1.bf16.msra.mxu0 0
      %2592 = vmatprep.subr.bf16.mxu0 0
      %2593 = vmatpush1.bf16.msra.mxu0 0
      %2594 = vmatprep.subr.bf16.mxu0 0
      %2595 = vmatpush1.bf16.msra.mxu0 0
      %2596 = vmatprep.subr.bf16.mxu0 0
      %2597 = vmatpush1.bf16.msra.mxu0 0
      %2598 = vmatprep.subr.bf16.mxu0 0
      %2599 = vmatpush1.bf16.msra.mxu0 0
      %2600 = vmatprep.subr.bf16.mxu0 0
      %2601 = vmatpush1.bf16.msra.mxu0 0
      %2602 = vmatprep.subr.bf16.mxu0 0
      %2603 = vmatpush1.bf16.msra.mxu0 0
      %2604 = vmatprep.mubr.bf16.mxu0 0
      %2605 = vmatmul.mubr.bf16.gmra.mrb[0].mxu0 %v2570
      %v2606 = vpop.f32.mrb[0].mxu0
      %v2607 = vadd.f32 0.0, %v2606
      %v2608 = vpop.f32.mrb[0].mxu0
      %v2609 = vpop.f32.mrb[0].mxu0
      %v2610 = vadd.f32 0.0, %v2609
      %v2611 = vpop.f32.mrb[0].mxu0
      %2612 = vdwg.mxu0
      %v2613 = vadd.f32 %v2549, %v2607
      %v2614 = vadd.f32 %v2550, %v2610
      %v2615 = vld [vmem:[%s6] sm:$0x1]
      %v2617 = vlaneseq
      %v2618 = vshrl.u32 %v2617, 7
      %v2619 = vsub.s32 0, %v2618
      %v2620 = vrot.slane %v2615, %v2619
      %v2622 = vadd.f32 %v2613, %v2620
      %v2623 = vadd.f32 %v2614, %v2620
      %v2624 = vmax.f32 %v2622, 0.0
      %v2625 = vmax.f32 %v2623, 0.0
      %v2626 = vpack.c.bf16 %v2625, %v2624
      %v2627 = vld [vmem:[%s7] sm:$0xf]
      %v2628 = vld [vmem:[%s7 + $0x4] sm:$0xf]
      %v2629 = vld [vmem:[%s7 + $0x8] sm:$0xf]
      %v2630 = vld [vmem:[%s7 + $0xc] sm:$0xf]
      %v2631 = vld [vmem:[%s7 + $0x10] sm:$0xf]
      %v2632 = vld [vmem:[%s7 + $0x14] sm:$0xf]
      %v2633 = vld [vmem:[%s7 + $0x18] sm:$0xf]
      %v2634 = vld [vmem:[%s7 + $0x1c] sm:$0xf]
      %v2643 = vunpack.c.l.b16 %v2627
      %v2644 = vunpack.c.l.b16 %v2628
      %v2645 = vunpack.c.l.b16 %v2629
      %v2646 = vunpack.c.l.b16 %v2630
      %v2647 = vunpack.c.l.b16 %v2631
      %v2648 = vunpack.c.l.b16 %v2632
      %v2649 = vunpack.c.l.b16 %v2633
      %v2650 = vunpack.c.l.b16 %v2634
      %v2651 = vpack.c.b16 %v2644, %v2643
      %v2652 = vpack.c.b16 %v2646, %v2645
      %v2653 = vpack.c.b16 %v2648, %v2647
      %v2654 = vpack.c.b16 %v2650, %v2649
      %v2660 = vsel %vm1910, %v2626, 0
      %2662 = vmatprep.subr.bf16.mxu0 0
      %2663 = vmatpush1.bf16.msra.mxu0 %v2651
      %2664 = vmatprep.subr.bf16.mxu0 0
      %2665 = vmatpush1.bf16.msra.mxu0 %v2652
      %2666 = vmatprep.subr.bf16.mxu0 0
      %2667 = vmatpush1.bf16.msra.mxu0 %v2653
      %2668 = vmatprep.subr.bf16.mxu0 0
      %2669 = vmatpush1.bf16.msra.mxu0 %v2654
      %2670 = vmatprep.subr.bf16.mxu0 0
      %2671 = vmatpush1.bf16.msra.mxu0 0
      %2672 = vmatprep.subr.bf16.mxu0 0
      %2673 = vmatpush1.bf16.msra.mxu0 0
      %2674 = vmatprep.subr.bf16.mxu0 0
      %2675 = vmatpush1.bf16.msra.mxu0 0
      %2676 = vmatprep.subr.bf16.mxu0 0
      %2677 = vmatpush1.bf16.msra.mxu0 0
      %2678 = vmatprep.subr.bf16.mxu0 0
      %2679 = vmatpush1.bf16.msra.mxu0 0
      %2680 = vmatprep.subr.bf16.mxu0 0
      %2681 = vmatpush1.bf16.msra.mxu0 0
      %2682 = vmatprep.subr.bf16.mxu0 0
      %2683 = vmatpush1.bf16.msra.mxu0 0
      %2684 = vmatprep.subr.bf16.mxu0 0
      %2685 = vmatpush1.bf16.msra.mxu0 0
      %2686 = vmatprep.subr.bf16.mxu0 0
      %2687 = vmatpush1.bf16.msra.mxu0 0
      %2688 = vmatprep.subr.bf16.mxu0 0
      %2689 = vmatpush1.bf16.msra.mxu0 0
      %2690 = vmatprep.subr.bf16.mxu0 0
      %2691 = vmatpush1.bf16.msra.mxu0 0
      %2692 = vmatprep.subr.bf16.mxu0 0
      %2693 = vmatpush1.bf16.msra.mxu0 0
      %2694 = vmatprep.mubr.bf16.mxu0 0
      %2695 = vmatmul.mubr.bf16.gmra.mrb[0].mxu0 %v2660
      %v2696 = vpop.f32.mrb[0].mxu0
      %v2697 = vadd.f32 0.0, %v2696
      %v2698 = vpop.f32.mrb[0].mxu0
      %v2699 = vpop.f32.mrb[0].mxu0
      %v2700 = vadd.f32 0.0, %v2699
      %v2701 = vpop.f32.mrb[0].mxu0
      %2702 = vdwg.mxu0
      %s2703 = scalar_lea.vmem %s7, 32
      %v2704 = vld [vmem:[%s2703] sm:$0xf]
      %v2705 = vld [vmem:[%s2703 + $0x4] sm:$0xf]
      %v2706 = vld [vmem:[%s2703 + $0x8] sm:$0xf]
      %v2707 = vld [vmem:[%s2703 + $0xc] sm:$0xf]
      %v2708 = vld [vmem:[%s2703 + $0x10] sm:$0xf]
      %v2709 = vld [vmem:[%s2703 + $0x14] sm:$0xf]
      %v2710 = vld [vmem:[%s2703 + $0x18] sm:$0xf]
      %v2711 = vld [vmem:[%s2703 + $0x1c] sm:$0xf]
      %v2720 = vunpack.c.l.b16 %v2704
      %v2721 = vunpack.c.l.b16 %v2705
      %v2722 = vunpack.c.l.b16 %v2706
      %v2723 = vunpack.c.l.b16 %v2707
      %v2724 = vunpack.c.l.b16 %v2708
      %v2725 = vunpack.c.l.b16 %v2709
      %v2726 = vunpack.c.l.b16 %v2710
      %v2727 = vunpack.c.l.b16 %v2711
      %v2728 = vpack.c.b16 %v2721, %v2720
      %v2729 = vpack.c.b16 %v2723, %v2722
      %v2730 = vpack.c.b16 %v2725, %v2724
      %v2731 = vpack.c.b16 %v2727, %v2726
      %2736 = vmatprep.subr.bf16.mxu0 0
      %2737 = vmatpush1.bf16.msra.mxu0 %v2728
      %2738 = vmatprep.subr.bf16.mxu0 0
      %2739 = vmatpush1.bf16.msra.mxu0 %v2729
      %2740 = vmatprep.subr.bf16.mxu0 0
      %2741 = vmatpush1.bf16.msra.mxu0 %v2730
      %2742 = vmatprep.subr.bf16.mxu0 0
      %2743 = vmatpush1.bf16.msra.mxu0 %v2731
      %2744 = vmatprep.subr.bf16.mxu0 0
      %2745 = vmatpush1.bf16.msra.mxu0 0
      %2746 = vmatprep.subr.bf16.mxu0 0
      %2747 = vmatpush1.bf16.msra.mxu0 0
      %2748 = vmatprep.subr.bf16.mxu0 0
      %2749 = vmatpush1.bf16.msra.mxu0 0
      %2750 = vmatprep.subr.bf16.mxu0 0
      %2751 = vmatpush1.bf16.msra.mxu0 0
      %2752 = vmatprep.subr.bf16.mxu0 0
      %2753 = vmatpush1.bf16.msra.mxu0 0
      %2754 = vmatprep.subr.bf16.mxu0 0
      %2755 = vmatpush1.bf16.msra.mxu0 0
      %2756 = vmatprep.subr.bf16.mxu0 0
      %2757 = vmatpush1.bf16.msra.mxu0 0
      %2758 = vmatprep.subr.bf16.mxu0 0
      %2759 = vmatpush1.bf16.msra.mxu0 0
      %2760 = vmatprep.subr.bf16.mxu0 0
      %2761 = vmatpush1.bf16.msra.mxu0 0
      %2762 = vmatprep.subr.bf16.mxu0 0
      %2763 = vmatpush1.bf16.msra.mxu0 0
      %2764 = vmatprep.subr.bf16.mxu0 0
      %2765 = vmatpush1.bf16.msra.mxu0 0
      %2766 = vmatprep.subr.bf16.mxu0 0
      %2767 = vmatpush1.bf16.msra.mxu0 0
      %2768 = vmatprep.mubr.bf16.mxu0 0
      %2769 = vmatmul.mubr.bf16.gmra.mrb[0].mxu0 %v2660
      %v2770 = vpop.f32.mrb[0].mxu0
      %v2771 = vadd.f32 0.0, %v2770
      %v2772 = vpop.f32.mrb[0].mxu0
      %v2773 = vpop.f32.mrb[0].mxu0
      %v2774 = vadd.f32 0.0, %v2773
      %v2775 = vpop.f32.mrb[0].mxu0
      %2776 = vdwg.mxu0
      %s2777 = scalar_lea.vmem %s7, 64
      %v2778 = vld [vmem:[%s2777] sm:$0xf]
      %v2779 = vld [vmem:[%s2777 + $0x4] sm:$0xf]
      %v2780 = vld [vmem:[%s2777 + $0x8] sm:$0xf]
      %v2781 = vld [vmem:[%s2777 + $0xc] sm:$0xf]
      %v2782 = vld [vmem:[%s2777 + $0x10] sm:$0xf]
      %v2783 = vld [vmem:[%s2777 + $0x14] sm:$0xf]
      %v2784 = vld [vmem:[%s2777 + $0x18] sm:$0xf]
      %v2785 = vld [vmem:[%s2777 + $0x1c] sm:$0xf]
      %v2794 = vunpack.c.l.b16 %v2778
      %v2795 = vunpack.c.l.b16 %v2779
      %v2796 = vunpack.c.l.b16 %v2780
      %v2797 = vunpack.c.l.b16 %v2781
      %v2798 = vunpack.c.l.b16 %v2782
      %v2799 = vunpack.c.l.b16 %v2783
      %v2800 = vunpack.c.l.b16 %v2784
      %v2801 = vunpack.c.l.b16 %v2785
      %v2802 = vpack.c.b16 %v2795, %v2794
      %v2803 = vpack.c.b16 %v2797, %v2796
      %v2804 = vpack.c.b16 %v2799, %v2798
      %v2805 = vpack.c.b16 %v2801, %v2800
      %2810 = vmatprep.subr.bf16.mxu0 0
      %2811 = vmatpush1.bf16.msra.mxu0 %v2802
      %2812 = vmatprep.subr.bf16.mxu0 0
      %2813 = vmatpush1.bf16.msra.mxu0 %v2803
      %2814 = vmatprep.subr.bf16.mxu0 0
      %2815 = vmatpush1.bf16.msra.mxu0 %v2804
      %2816 = vmatprep.subr.bf16.mxu0 0
      %2817 = vmatpush1.bf16.msra.mxu0 %v2805
      %2818 = vmatprep.subr.bf16.mxu0 0
      %2819 = vmatpush1.bf16.msra.mxu0 0
      %2820 = vmatprep.subr.bf16.mxu0 0
      %2821 = vmatpush1.bf16.msra.mxu0 0
      %2822 = vmatprep.subr.bf16.mxu0 0
      %2823 = vmatpush1.bf16.msra.mxu0 0
      %2824 = vmatprep.subr.bf16.mxu0 0
      %2825 = vmatpush1.bf16.msra.mxu0 0
      %2826 = vmatprep.subr.bf16.mxu0 0
      %2827 = vmatpush1.bf16.msra.mxu0 0
      %2828 = vmatprep.subr.bf16.mxu0 0
      %2829 = vmatpush1.bf16.msra.mxu0 0
      %2830 = vmatprep.subr.bf16.mxu0 0
      %2831 = vmatpush1.bf16.msra.mxu0 0
      %2832 = vmatprep.subr.bf16.mxu0 0
      %2833 = vmatpush1.bf16.msra.mxu0 0
      %2834 = vmatprep.subr.bf16.mxu0 0
      %2835 = vmatpush1.bf16.msra.mxu0 0
      %2836 = vmatprep.subr.bf16.mxu0 0
      %2837 = vmatpush1.bf16.msra.mxu0 0
      %2838 = vmatprep.subr.bf16.mxu0 0
      %2839 = vmatpush1.bf16.msra.mxu0 0
      %2840 = vmatprep.subr.bf16.mxu0 0
      %2841 = vmatpush1.bf16.msra.mxu0 0
      %2842 = vmatprep.mubr.bf16.mxu0 0
      %2843 = vmatmul.mubr.bf16.gmra.mrb[0].mxu0 %v2660
      %v2844 = vpop.f32.mrb[0].mxu0
      %v2845 = vadd.f32 0.0, %v2844
      %v2846 = vpop.f32.mrb[0].mxu0
      %v2847 = vpop.f32.mrb[0].mxu0
      %v2848 = vadd.f32 0.0, %v2847
      %v2849 = vpop.f32.mrb[0].mxu0
      %2850 = vdwg.mxu0
      %s2851 = scalar_lea.vmem %s7, 96
      %v2852 = vld [vmem:[%s2851] sm:$0xf]
      %v2853 = vld [vmem:[%s2851 + $0x4] sm:$0xf]
      %v2854 = vld [vmem:[%s2851 + $0x8] sm:$0xf]
      %v2855 = vld [vmem:[%s2851 + $0xc] sm:$0xf]
      %v2856 = vld [vmem:[%s2851 + $0x10] sm:$0xf]
      %v2857 = vld [vmem:[%s2851 + $0x14] sm:$0xf]
      %v2858 = vld [vmem:[%s2851 + $0x18] sm:$0xf]
      %v2859 = vld [vmem:[%s2851 + $0x1c] sm:$0xf]
      %v2868 = vunpack.c.l.b16 %v2852
      %v2869 = vunpack.c.l.b16 %v2853
      %v2870 = vunpack.c.l.b16 %v2854
      %v2871 = vunpack.c.l.b16 %v2855
      %v2872 = vunpack.c.l.b16 %v2856
      %v2873 = vunpack.c.l.b16 %v2857
      %v2874 = vunpack.c.l.b16 %v2858
      %v2875 = vunpack.c.l.b16 %v2859
      %v2876 = vpack.c.b16 %v2869, %v2868
      %v2877 = vpack.c.b16 %v2871, %v2870
      %v2878 = vpack.c.b16 %v2873, %v2872
      %v2879 = vpack.c.b16 %v2875, %v2874
      %2884 = vmatprep.subr.bf16.mxu0 0
      %2885 = vmatpush1.bf16.msra.mxu0 %v2876
      %2886 = vmatprep.subr.bf16.mxu0 0
      %2887 = vmatpush1.bf16.msra.mxu0 %v2877
      %2888 = vmatprep.subr.bf16.mxu0 0
      %2889 = vmatpush1.bf16.msra.mxu0 %v2878
      %2890 = vmatprep.subr.bf16.mxu0 0
      %2891 = vmatpush1.bf16.msra.mxu0 %v2879
      %2892 = vmatprep.subr.bf16.mxu0 0
      %2893 = vmatpush1.bf16.msra.mxu0 0
      %2894 = vmatprep.subr.bf16.mxu0 0
      %2895 = vmatpush1.bf16.msra.mxu0 0
      %2896 = vmatprep.subr.bf16.mxu0 0
      %2897 = vmatpush1.bf16.msra.mxu0 0
      %2898 = vmatprep.subr.bf16.mxu0 0
      %2899 = vmatpush1.bf16.msra.mxu0 0
      %2900 = vmatprep.subr.bf16.mxu0 0
      %2901 = vmatpush1.bf16.msra.mxu0 0
      %2902 = vmatprep.subr.bf16.mxu0 0
      %2903 = vmatpush1.bf16.msra.mxu0 0
      %2904 = vmatprep.subr.bf16.mxu0 0
      %2905 = vmatpush1.bf16.msra.mxu0 0
      %2906 = vmatprep.subr.bf16.mxu0 0
      %2907 = vmatpush1.bf16.msra.mxu0 0
      %2908 = vmatprep.subr.bf16.mxu0 0
      %2909 = vmatpush1.bf16.msra.mxu0 0
      %2910 = vmatprep.subr.bf16.mxu0 0
      %2911 = vmatpush1.bf16.msra.mxu0 0
      %2912 = vmatprep.subr.bf16.mxu0 0
      %2913 = vmatpush1.bf16.msra.mxu0 0
      %2914 = vmatprep.subr.bf16.mxu0 0
      %2915 = vmatpush1.bf16.msra.mxu0 0
      %2916 = vmatprep.mubr.bf16.mxu0 0
      %2917 = vmatmul.mubr.bf16.gmra.mrb[0].mxu0 %v2660
      %v2918 = vpop.f32.mrb[0].mxu0
      %v2919 = vadd.f32 0.0, %v2918
      %v2920 = vpop.f32.mrb[0].mxu0
      %v2921 = vpop.f32.mrb[0].mxu0
      %v2922 = vadd.f32 0.0, %v2921
      %v2923 = vpop.f32.mrb[0].mxu0
      %2924 = vdwg.mxu0
      %s2925 = scalar_lea.vmem %s7, 128
      %v2926 = vld [vmem:[%s2925] sm:$0xf]
      %v2927 = vld [vmem:[%s2925 + $0x4] sm:$0xf]
      %v2928 = vld [vmem:[%s2925 + $0x8] sm:$0xf]
      %v2929 = vld [vmem:[%s2925 + $0xc] sm:$0xf]
      %v2930 = vld [vmem:[%s2925 + $0x10] sm:$0xf]
      %v2931 = vld [vmem:[%s2925 + $0x14] sm:$0xf]
      %v2932 = vld [vmem:[%s2925 + $0x18] sm:$0xf]
      %v2933 = vld [vmem:[%s2925 + $0x1c] sm:$0xf]
      %v2942 = vunpack.c.l.b16 %v2926
      %v2943 = vunpack.c.l.b16 %v2927
      %v2944 = vunpack.c.l.b16 %v2928
      %v2945 = vunpack.c.l.b16 %v2929
      %v2946 = vunpack.c.l.b16 %v2930
      %v2947 = vunpack.c.l.b16 %v2931
      %v2948 = vunpack.c.l.b16 %v2932
      %v2949 = vunpack.c.l.b16 %v2933
      %v2950 = vpack.c.b16 %v2943, %v2942
      %v2951 = vpack.c.b16 %v2945, %v2944
      %v2952 = vpack.c.b16 %v2947, %v2946
      %v2953 = vpack.c.b16 %v2949, %v2948
      %2958 = vmatprep.subr.bf16.mxu0 0
      %2959 = vmatpush1.bf16.msra.mxu0 %v2950
      %2960 = vmatprep.subr.bf16.mxu0 0
      %2961 = vmatpush1.bf16.msra.mxu0 %v2951
      %2962 = vmatprep.subr.bf16.mxu0 0
      %2963 = vmatpush1.bf16.msra.mxu0 %v2952
      %2964 = vmatprep.subr.bf16.mxu0 0
      %2965 = vmatpush1.bf16.msra.mxu0 %v2953
      %2966 = vmatprep.subr.bf16.mxu0 0
      %2967 = vmatpush1.bf16.msra.mxu0 0
      %2968 = vmatprep.subr.bf16.mxu0 0
      %2969 = vmatpush1.bf16.msra.mxu0 0
      %2970 = vmatprep.subr.bf16.mxu0 0
      %2971 = vmatpush1.bf16.msra.mxu0 0
      %2972 = vmatprep.subr.bf16.mxu0 0
      %2973 = vmatpush1.bf16.msra.mxu0 0
      %2974 = vmatprep.subr.bf16.mxu0 0
      %2975 = vmatpush1.bf16.msra.mxu0 0
      %2976 = vmatprep.subr.bf16.mxu0 0
      %2977 = vmatpush1.bf16.msra.mxu0 0
      %2978 = vmatprep.subr.bf16.mxu0 0
      %2979 = vmatpush1.bf16.msra.mxu0 0
      %2980 = vmatprep.subr.bf16.mxu0 0
      %2981 = vmatpush1.bf16.msra.mxu0 0
      %2982 = vmatprep.subr.bf16.mxu0 0
      %2983 = vmatpush1.bf16.msra.mxu0 0
      %2984 = vmatprep.subr.bf16.mxu0 0
      %2985 = vmatpush1.bf16.msra.mxu0 0
      %2986 = vmatprep.subr.bf16.mxu0 0
      %2987 = vmatpush1.bf16.msra.mxu0 0
      %2988 = vmatprep.subr.bf16.mxu0 0
      %2989 = vmatpush1.bf16.msra.mxu0 0
      %2990 = vmatprep.mubr.bf16.mxu0 0
      %2991 = vmatmul.mubr.bf16.gmra.mrb[0].mxu0 %v2660
      %v2992 = vpop.f32.mrb[0].mxu0
      %v2993 = vadd.f32 0.0, %v2992
      %v2994 = vpop.f32.mrb[0].mxu0
      %v2995 = vpop.f32.mrb[0].mxu0
      %v2996 = vadd.f32 0.0, %v2995
      %v2997 = vpop.f32.mrb[0].mxu0
      %2998 = vdwg.mxu0
      %s2999 = scalar_lea.vmem %s7, 160
      %v3000 = vld [vmem:[%s2999] sm:$0xf]
      %v3001 = vld [vmem:[%s2999 + $0x4] sm:$0xf]
      %v3002 = vld [vmem:[%s2999 + $0x8] sm:$0xf]
      %v3003 = vld [vmem:[%s2999 + $0xc] sm:$0xf]
      %v3004 = vld [vmem:[%s2999 + $0x10] sm:$0xf]
      %v3005 = vld [vmem:[%s2999 + $0x14] sm:$0xf]
      %v3006 = vld [vmem:[%s2999 + $0x18] sm:$0xf]
      %v3007 = vld [vmem:[%s2999 + $0x1c] sm:$0xf]
      %v3016 = vunpack.c.l.b16 %v3000
      %v3017 = vunpack.c.l.b16 %v3001
      %v3018 = vunpack.c.l.b16 %v3002
      %v3019 = vunpack.c.l.b16 %v3003
      %v3020 = vunpack.c.l.b16 %v3004
      %v3021 = vunpack.c.l.b16 %v3005
      %v3022 = vunpack.c.l.b16 %v3006
      %v3023 = vunpack.c.l.b16 %v3007
      %v3024 = vpack.c.b16 %v3017, %v3016
      %v3025 = vpack.c.b16 %v3019, %v3018
      %v3026 = vpack.c.b16 %v3021, %v3020
      %v3027 = vpack.c.b16 %v3023, %v3022
      %3032 = vmatprep.subr.bf16.mxu0 0
      %3033 = vmatpush1.bf16.msra.mxu0 %v3024
      %3034 = vmatprep.subr.bf16.mxu0 0
      %3035 = vmatpush1.bf16.msra.mxu0 %v3025
      %3036 = vmatprep.subr.bf16.mxu0 0
      %3037 = vmatpush1.bf16.msra.mxu0 %v3026
      %3038 = vmatprep.subr.bf16.mxu0 0
      %3039 = vmatpush1.bf16.msra.mxu0 %v3027
      %3040 = vmatprep.subr.bf16.mxu0 0
      %3041 = vmatpush1.bf16.msra.mxu0 0
      %3042 = vmatprep.subr.bf16.mxu0 0
      %3043 = vmatpush1.bf16.msra.mxu0 0
      %3044 = vmatprep.subr.bf16.mxu0 0
      %3045 = vmatpush1.bf16.msra.mxu0 0
      %3046 = vmatprep.subr.bf16.mxu0 0
      %3047 = vmatpush1.bf16.msra.mxu0 0
      %3048 = vmatprep.subr.bf16.mxu0 0
      %3049 = vmatpush1.bf16.msra.mxu0 0
      %3050 = vmatprep.subr.bf16.mxu0 0
      %3051 = vmatpush1.bf16.msra.mxu0 0
      %3052 = vmatprep.subr.bf16.mxu0 0
      %3053 = vmatpush1.bf16.msra.mxu0 0
      %3054 = vmatprep.subr.bf16.mxu0 0
      %3055 = vmatpush1.bf16.msra.mxu0 0
      %3056 = vmatprep.subr.bf16.mxu0 0
      %3057 = vmatpush1.bf16.msra.mxu0 0
      %3058 = vmatprep.subr.bf16.mxu0 0
      %3059 = vmatpush1.bf16.msra.mxu0 0
      %3060 = vmatprep.subr.bf16.mxu0 0
      %3061 = vmatpush1.bf16.msra.mxu0 0
      %3062 = vmatprep.subr.bf16.mxu0 0
      %3063 = vmatpush1.bf16.msra.mxu0 0
      %3064 = vmatprep.mubr.bf16.mxu0 0
      %3065 = vmatmul.mubr.bf16.gmra.mrb[0].mxu0 %v2660
      %v3066 = vpop.f32.mrb[0].mxu0
      %v3067 = vadd.f32 0.0, %v3066
      %v3068 = vpop.f32.mrb[0].mxu0
      %v3069 = vpop.f32.mrb[0].mxu0
      %v3070 = vadd.f32 0.0, %v3069
      %v3071 = vpop.f32.mrb[0].mxu0
      %3072 = vdwg.mxu0
      %s3073 = scalar_lea.vmem %s7, 192
      %v3074 = vld [vmem:[%s3073] sm:$0xf]
      %v3075 = vld [vmem:[%s3073 + $0x4] sm:$0xf]
      %v3076 = vld [vmem:[%s3073 + $0x8] sm:$0xf]
      %v3077 = vld [vmem:[%s3073 + $0xc] sm:$0xf]
      %v3078 = vld [vmem:[%s3073 + $0x10] sm:$0xf]
      %v3079 = vld [vmem:[%s3073 + $0x14] sm:$0xf]
      %v3080 = vld [vmem:[%s3073 + $0x18] sm:$0xf]
      %v3081 = vld [vmem:[%s3073 + $0x1c] sm:$0xf]
      %v3090 = vunpack.c.l.b16 %v3074
      %v3091 = vunpack.c.l.b16 %v3075
      %v3092 = vunpack.c.l.b16 %v3076
      %v3093 = vunpack.c.l.b16 %v3077
      %v3094 = vunpack.c.l.b16 %v3078
      %v3095 = vunpack.c.l.b16 %v3079
      %v3096 = vunpack.c.l.b16 %v3080
      %v3097 = vunpack.c.l.b16 %v3081
      %v3098 = vpack.c.b16 %v3091, %v3090
      %v3099 = vpack.c.b16 %v3093, %v3092
      %v3100 = vpack.c.b16 %v3095, %v3094
      %v3101 = vpack.c.b16 %v3097, %v3096
      %3106 = vmatprep.subr.bf16.mxu0 0
      %3107 = vmatpush1.bf16.msra.mxu0 %v3098
      %3108 = vmatprep.subr.bf16.mxu0 0
      %3109 = vmatpush1.bf16.msra.mxu0 %v3099
      %3110 = vmatprep.subr.bf16.mxu0 0
      %3111 = vmatpush1.bf16.msra.mxu0 %v3100
      %3112 = vmatprep.subr.bf16.mxu0 0
      %3113 = vmatpush1.bf16.msra.mxu0 %v3101
      %3114 = vmatprep.subr.bf16.mxu0 0
      %3115 = vmatpush1.bf16.msra.mxu0 0
      %3116 = vmatprep.subr.bf16.mxu0 0
      %3117 = vmatpush1.bf16.msra.mxu0 0
      %3118 = vmatprep.subr.bf16.mxu0 0
      %3119 = vmatpush1.bf16.msra.mxu0 0
      %3120 = vmatprep.subr.bf16.mxu0 0
      %3121 = vmatpush1.bf16.msra.mxu0 0
      %3122 = vmatprep.subr.bf16.mxu0 0
      %3123 = vmatpush1.bf16.msra.mxu0 0
      %3124 = vmatprep.subr.bf16.mxu0 0
      %3125 = vmatpush1.bf16.msra.mxu0 0
      %3126 = vmatprep.subr.bf16.mxu0 0
      %3127 = vmatpush1.bf16.msra.mxu0 0
      %3128 = vmatprep.subr.bf16.mxu0 0
      %3129 = vmatpush1.bf16.msra.mxu0 0
      %3130 = vmatprep.subr.bf16.mxu0 0
      %3131 = vmatpush1.bf16.msra.mxu0 0
      %3132 = vmatprep.subr.bf16.mxu0 0
      %3133 = vmatpush1.bf16.msra.mxu0 0
      %3134 = vmatprep.subr.bf16.mxu0 0
      %3135 = vmatpush1.bf16.msra.mxu0 0
      %3136 = vmatprep.subr.bf16.mxu0 0
      %3137 = vmatpush1.bf16.msra.mxu0 0
      %3138 = vmatprep.mubr.bf16.mxu0 0
      %3139 = vmatmul.mubr.bf16.gmra.mrb[0].mxu0 %v2660
      %v3140 = vpop.f32.mrb[0].mxu0
      %v3141 = vadd.f32 0.0, %v3140
      %v3142 = vpop.f32.mrb[0].mxu0
      %v3143 = vpop.f32.mrb[0].mxu0
      %v3144 = vadd.f32 0.0, %v3143
      %v3145 = vpop.f32.mrb[0].mxu0
      %3146 = vdwg.mxu0
      %s3147 = scalar_lea.vmem %s7, 224
      %v3148 = vld [vmem:[%s3147] sm:$0xf]
      %v3149 = vld [vmem:[%s3147 + $0x4] sm:$0xf]
      %v3150 = vld [vmem:[%s3147 + $0x8] sm:$0xf]
      %v3151 = vld [vmem:[%s3147 + $0xc] sm:$0xf]
      %v3152 = vld [vmem:[%s3147 + $0x10] sm:$0xf]
      %v3153 = vld [vmem:[%s3147 + $0x14] sm:$0xf]
      %v3154 = vld [vmem:[%s3147 + $0x18] sm:$0xf]
      %v3155 = vld [vmem:[%s3147 + $0x1c] sm:$0xf]
      %v3164 = vunpack.c.l.b16 %v3148
      %v3165 = vunpack.c.l.b16 %v3149
      %v3166 = vunpack.c.l.b16 %v3150
      %v3167 = vunpack.c.l.b16 %v3151
      %v3168 = vunpack.c.l.b16 %v3152
      %v3169 = vunpack.c.l.b16 %v3153
      %v3170 = vunpack.c.l.b16 %v3154
      %v3171 = vunpack.c.l.b16 %v3155
      %v3172 = vpack.c.b16 %v3165, %v3164
      %v3173 = vpack.c.b16 %v3167, %v3166
      %v3174 = vpack.c.b16 %v3169, %v3168
      %v3175 = vpack.c.b16 %v3171, %v3170
      %3180 = vmatprep.subr.bf16.mxu0 0
      %3181 = vmatpush1.bf16.msra.mxu0 %v3172
      %3182 = vmatprep.subr.bf16.mxu0 0
      %3183 = vmatpush1.bf16.msra.mxu0 %v3173
      %3184 = vmatprep.subr.bf16.mxu0 0
      %3185 = vmatpush1.bf16.msra.mxu0 %v3174
      %3186 = vmatprep.subr.bf16.mxu0 0
      %3187 = vmatpush1.bf16.msra.mxu0 %v3175
      %3188 = vmatprep.subr.bf16.mxu0 0
      %3189 = vmatpush1.bf16.msra.mxu0 0
      %3190 = vmatprep.subr.bf16.mxu0 0
      %3191 = vmatpush1.bf16.msra.mxu0 0
      %3192 = vmatprep.subr.bf16.mxu0 0
      %3193 = vmatpush1.bf16.msra.mxu0 0
      %3194 = vmatprep.subr.bf16.mxu0 0
      %3195 = vmatpush1.bf16.msra.mxu0 0
      %3196 = vmatprep.subr.bf16.mxu0 0
      %3197 = vmatpush1.bf16.msra.mxu0 0
      %3198 = vmatprep.subr.bf16.mxu0 0
      %3199 = vmatpush1.bf16.msra.mxu0 0
      %3200 = vmatprep.subr.bf16.mxu0 0
      %3201 = vmatpush1.bf16.msra.mxu0 0
      %3202 = vmatprep.subr.bf16.mxu0 0
      %3203 = vmatpush1.bf16.msra.mxu0 0
      %3204 = vmatprep.subr.bf16.mxu0 0
      %3205 = vmatpush1.bf16.msra.mxu0 0
      %3206 = vmatprep.subr.bf16.mxu0 0
      %3207 = vmatpush1.bf16.msra.mxu0 0
      %3208 = vmatprep.subr.bf16.mxu0 0
      %3209 = vmatpush1.bf16.msra.mxu0 0
      %3210 = vmatprep.subr.bf16.mxu0 0
      %3211 = vmatpush1.bf16.msra.mxu0 0
      %3212 = vmatprep.mubr.bf16.mxu0 0
      %3213 = vmatmul.mubr.bf16.gmra.mrb[0].mxu0 %v2660
      %v3214 = vpop.f32.mrb[0].mxu0
      %v3215 = vadd.f32 0.0, %v3214
      %v3216 = vpop.f32.mrb[0].mxu0
      %v3217 = vpop.f32.mrb[0].mxu0
      %v3218 = vadd.f32 0.0, %v3217
      %v3219 = vpop.f32.mrb[0].mxu0
      %3220 = vdwg.mxu0
      %s3221 = scalar_lea.vmem %s7, 256
      %v3222 = vld [vmem:[%s3221] sm:$0xf]
      %v3223 = vld [vmem:[%s3221 + $0x4] sm:$0xf]
      %v3224 = vld [vmem:[%s3221 + $0x8] sm:$0xf]
      %v3225 = vld [vmem:[%s3221 + $0xc] sm:$0xf]
      %v3226 = vld [vmem:[%s3221 + $0x10] sm:$0xf]
      %v3227 = vld [vmem:[%s3221 + $0x14] sm:$0xf]
      %v3228 = vld [vmem:[%s3221 + $0x18] sm:$0xf]
      %v3229 = vld [vmem:[%s3221 + $0x1c] sm:$0xf]
      %v3238 = vunpack.c.l.b16 %v3222
      %v3239 = vunpack.c.l.b16 %v3223
      %v3240 = vunpack.c.l.b16 %v3224
      %v3241 = vunpack.c.l.b16 %v3225
      %v3242 = vunpack.c.l.b16 %v3226
      %v3243 = vunpack.c.l.b16 %v3227
      %v3244 = vunpack.c.l.b16 %v3228
      %v3245 = vunpack.c.l.b16 %v3229
      %v3246 = vpack.c.b16 %v3239, %v3238
      %v3247 = vpack.c.b16 %v3241, %v3240
      %v3248 = vpack.c.b16 %v3243, %v3242
      %v3249 = vpack.c.b16 %v3245, %v3244
      %3254 = vmatprep.subr.bf16.mxu0 0
      %3255 = vmatpush1.bf16.msra.mxu0 %v3246
      %3256 = vmatprep.subr.bf16.mxu0 0
      %3257 = vmatpush1.bf16.msra.mxu0 %v3247
      %3258 = vmatprep.subr.bf16.mxu0 0
      %3259 = vmatpush1.bf16.msra.mxu0 %v3248
      %3260 = vmatprep.subr.bf16.mxu0 0
      %3261 = vmatpush1.bf16.msra.mxu0 %v3249
      %3262 = vmatprep.subr.bf16.mxu0 0
      %3263 = vmatpush1.bf16.msra.mxu0 0
      %3264 = vmatprep.subr.bf16.mxu0 0
      %3265 = vmatpush1.bf16.msra.mxu0 0
      %3266 = vmatprep.subr.bf16.mxu0 0
      %3267 = vmatpush1.bf16.msra.mxu0 0
      %3268 = vmatprep.subr.bf16.mxu0 0
      %3269 = vmatpush1.bf16.msra.mxu0 0
      %3270 = vmatprep.subr.bf16.mxu0 0
      %3271 = vmatpush1.bf16.msra.mxu0 0
      %3272 = vmatprep.subr.bf16.mxu0 0
      %3273 = vmatpush1.bf16.msra.mxu0 0
      %3274 = vmatprep.subr.bf16.mxu0 0
      %3275 = vmatpush1.bf16.msra.mxu0 0
      %3276 = vmatprep.subr.bf16.mxu0 0
      %3277 = vmatpush1.bf16.msra.mxu0 0
      %3278 = vmatprep.subr.bf16.mxu0 0
      %3279 = vmatpush1.bf16.msra.mxu0 0
      %3280 = vmatprep.subr.bf16.mxu0 0
      %3281 = vmatpush1.bf16.msra.mxu0 0
      %3282 = vmatprep.subr.bf16.mxu0 0
      %3283 = vmatpush1.bf16.msra.mxu0 0
      %3284 = vmatprep.subr.bf16.mxu0 0
      %3285 = vmatpush1.bf16.msra.mxu0 0
      %3286 = vmatprep.mubr.bf16.mxu0 0
      %3287 = vmatmul.mubr.bf16.gmra.mrb[0].mxu0 %v2660
      %v3288 = vpop.f32.mrb[0].mxu0
      %v3289 = vadd.f32 0.0, %v3288
      %v3290 = vpop.f32.mrb[0].mxu0
      %v3291 = vpop.f32.mrb[0].mxu0
      %v3292 = vadd.f32 0.0, %v3291
      %v3293 = vpop.f32.mrb[0].mxu0
      %3294 = vdwg.mxu0
      %v3295 = vld [vmem:[%s8] sm:$0xff]
      %v3296 = vld [vmem:[%s8 + $0x8] sm:$0xff]
      %v3297 = vld [vmem:[%s8 + $0x10] sm:$0xff]
      %v3298 = vld [vmem:[%s8 + $0x18] sm:$0xff]
      %v3299 = vld [vmem:[%s8 + $0x20] sm:$0xff]
      %v3300 = vld [vmem:[%s8 + $0x28] sm:$0xff]
      %v3301 = vld [vmem:[%s8 + $0x30] sm:$0xff]
      %v3302 = vld [vmem:[%s8 + $0x38] sm:$0xff]
      %v3303 = vpack.c.bf16 %v2700, %v2697
      %v3304 = vpack.c.bf16 %v2774, %v2771
      %v3305 = vpack.c.bf16 %v2848, %v2845
      %v3306 = vpack.c.bf16 %v2922, %v2919
      %v3307 = vpack.c.bf16 %v2996, %v2993
      %v3308 = vpack.c.bf16 %v3070, %v3067
      %v3309 = vpack.c.bf16 %v3144, %v3141
      %v3310 = vpack.c.bf16 %v3218, %v3215
      %v3311 = vpack.c.bf16 %v3292, %v3289
      %v3312 = vld [vmem:[%s9] sm:$0x1]
      %v3314 = vlaneseq
      %v3315 = vshrl.u32 %v3314, 7
      %v3316 = vsub.s32 0, %v3315
      %v3317 = vrot.slane %v3312, %v3316
      %v3327 = vunpack.c.l.b16 %v3295
      %v3328 = vunpack.c.h.b16 %v3295
      %v3329 = vunpack.c.l.b16 %v3296
      %v3330 = vunpack.c.h.b16 %v3296
      %v3331 = vunpack.c.l.b16 %v3297
      %v3332 = vunpack.c.h.b16 %v3297
      %v3333 = vunpack.c.l.b16 %v3298
      %v3334 = vunpack.c.h.b16 %v3298
      %v3335 = vunpack.c.l.b16 %v3299
      %v3336 = vunpack.c.h.b16 %v3299
      %v3337 = vunpack.c.l.b16 %v3300
      %v3338 = vunpack.c.h.b16 %v3300
      %v3339 = vunpack.c.l.b16 %v3301
      %v3340 = vunpack.c.h.b16 %v3301
      %v3341 = vunpack.c.l.b16 %v3302
      %v3342 = vunpack.c.h.b16 %v3302
      %v3343 = vpack.c.b16 %v3329, %v3327
      %v3344 = vpack.c.b16 %v3330, %v3328
      %v3345 = vpack.c.b16 %v3333, %v3331
      %v3346 = vpack.c.b16 %v3334, %v3332
      %v3347 = vpack.c.b16 %v3337, %v3335
      %v3348 = vpack.c.b16 %v3338, %v3336
      %v3349 = vpack.c.b16 %v3341, %v3339
      %v3350 = vpack.c.b16 %v3342, %v3340
      %vm3355 = vcmask 130048
      %v3357 = vsel %vm3355, %v3344, 0
      %v3360 = vsel %vm3355, %v3346, 0
      %v3363 = vsel %vm3355, %v3348, 0
      %v3366 = vsel %vm3355, %v3350, 0
      %3368 = vmatprep.subr.bf16.mxu0 0
      %3369 = vmatpush1.bf16.msra.mxu0 %v3303
      %3370 = vmatprep.subr.bf16.mxu0 0
      %3371 = vmatpush1.bf16.msra.mxu0 %v3304
      %3372 = vmatprep.subr.bf16.mxu0 0
      %3373 = vmatpush1.bf16.msra.mxu0 %v3305
      %3374 = vmatprep.subr.bf16.mxu0 0
      %3375 = vmatpush1.bf16.msra.mxu0 %v3306
      %3376 = vmatprep.subr.bf16.mxu0 0
      %3377 = vmatpush1.bf16.msra.mxu0 %v3307
      %3378 = vmatprep.subr.bf16.mxu0 0
      %3379 = vmatpush1.bf16.msra.mxu0 %v3308
      %3380 = vmatprep.subr.bf16.mxu0 0
      %3381 = vmatpush1.bf16.msra.mxu0 %v3309
      %3382 = vmatprep.subr.bf16.mxu0 0
      %3383 = vmatpush1.bf16.msra.mxu0 %v3310
      %3384 = vmatprep.subr.bf16.mxu0 0
      %3385 = vmatpush1.bf16.msra.mxu0 %v3311
      %3386 = vmatprep.subr.bf16.mxu0 0
      %3387 = vmatpush1.bf16.msra.mxu0 0
      %3388 = vmatprep.subr.bf16.mxu0 0
      %3389 = vmatpush1.bf16.msra.mxu0 0
      %3390 = vmatprep.subr.bf16.mxu0 0
      %3391 = vmatpush1.bf16.msra.mxu0 0
      %3392 = vmatprep.subr.bf16.mxu0 0
      %3393 = vmatpush1.bf16.msra.mxu0 0
      %3394 = vmatprep.subr.bf16.mxu0 0
      %3395 = vmatpush1.bf16.msra.mxu0 0
      %3396 = vmatprep.subr.bf16.mxu0 0
      %3397 = vmatpush1.bf16.msra.mxu0 0
      %3398 = vmatprep.subr.bf16.mxu0 0
      %3399 = vmatpush1.bf16.msra.mxu0 0
      %3400 = vmatprep.mubr.bf16.mxu0 %v3357
      %3401 = vmatmul.mubr.bf16.gmra.mrb[0].mxu0 %v3343
      %v3402 = vpop.f32.mrb[0].mxu0
      %v3403 = vadd.f32 %v3317, %v3402
      %v3404 = vpop.f32.mrb[0].mxu0
      %v3405 = vpop.f32.mrb[0].mxu0
      %v3406 = vadd.f32 %v3317, %v3405
      %v3407 = vpop.f32.mrb[0].mxu0
      %3408 = vmatprep.mubr.bf16.mxu0 %v3360
      %3409 = vmatmul.mubr.bf16.gmra.mrb[0].mxu0 %v3345
      %v3410 = vpop.f32.mrb[0].mxu0
      %v3411 = vadd.f32 %v3317, %v3410
      %v3412 = vpop.f32.mrb[0].mxu0
      %v3413 = vpop.f32.mrb[0].mxu0
      %v3414 = vadd.f32 %v3317, %v3413
      %v3415 = vpop.f32.mrb[0].mxu0
      %3416 = vmatprep.mubr.bf16.mxu0 %v3363
      %3417 = vmatmul.mubr.bf16.gmra.mrb[0].mxu0 %v3347
      %v3418 = vpop.f32.mrb[0].mxu0
      %v3419 = vadd.f32 %v3317, %v3418
      %v3420 = vpop.f32.mrb[0].mxu0
      %v3421 = vpop.f32.mrb[0].mxu0
      %v3422 = vadd.f32 %v3317, %v3421
      %v3423 = vpop.f32.mrb[0].mxu0
      %3424 = vmatprep.mubr.bf16.mxu0 %v3366
      %3425 = vmatmul.mubr.bf16.gmra.mrb[0].mxu0 %v3349
      %v3426 = vpop.f32.mrb[0].mxu0
      %v3427 = vadd.f32 %v3317, %v3426
      %v3428 = vpop.f32.mrb[0].mxu0
      %v3429 = vpop.f32.mrb[0].mxu0
      %v3430 = vadd.f32 %v3317, %v3429
      %v3431 = vpop.f32.mrb[0].mxu0
      %3432 = vdwg.mxu0
      %v3433 = vmax.f32 %v3403, 0.0
      %v3434 = vmax.f32 %v3406, 0.0
      %v3435 = vmax.f32 %v3411, 0.0
      %v3436 = vmax.f32 %v3414, 0.0
      %v3437 = vmax.f32 %v3419, 0.0
      %v3438 = vmax.f32 %v3422, 0.0
      %v3439 = vmax.f32 %v3427, 0.0
      %v3440 = vmax.f32 %v3430, 0.0
      %v3441 = vpack.c.bf16 %v3434, %v3433
      %v3442 = vpack.c.bf16 %v3436, %v3435
      %v3443 = vpack.c.bf16 %v3438, %v3437
      %v3444 = vpack.c.bf16 %v3440, %v3439
      %v3445 = vld [vmem:[%s10] sm:$0xf]
      %v3446 = vld [vmem:[%s10 + $0x4] sm:$0xf]
      %v3447 = vld [vmem:[%s10 + $0x8] sm:$0xf]
      %v3448 = vld [vmem:[%s10 + $0xc] sm:$0xf]
      %v3453 = vunpack.c.l.b16 %v3445
      %v3454 = vunpack.c.l.b16 %v3446
      %v3455 = vunpack.c.l.b16 %v3447
      %v3456 = vunpack.c.l.b16 %v3448
      %v3457 = vpack.c.b16 %v3454, %v3453
      %v3458 = vpack.c.b16 %v3456, %v3455
      %v3462 = vsel %vm2066, %v3441, 0
      %v3465 = vsel %vm2066, %v3442, 0
      %v3468 = vsel %vm2066, %v3443, 0
      %v3471 = vsel %vm2066, %v3444, 0
      %3473 = vmatprep.subr.bf16.mxu0 0
      %3474 = vmatpush1.bf16.msra.mxu0 %v3457
      %3475 = vmatprep.subr.bf16.mxu0 0
      %3476 = vmatpush1.bf16.msra.mxu0 %v3458
      %3477 = vmatprep.subr.bf16.mxu0 0
      %3478 = vmatpush1.bf16.msra.mxu0 0
      %3479 = vmatprep.subr.bf16.mxu0 0
      %3480 = vmatpush1.bf16.msra.mxu0 0
      %3481 = vmatprep.subr.bf16.mxu0 0
      %3482 = vmatpush1.bf16.msra.mxu0 0
      %3483 = vmatprep.subr.bf16.mxu0 0
      %3484 = vmatpush1.bf16.msra.mxu0 0
      %3485 = vmatprep.subr.bf16.mxu0 0
      %3486 = vmatpush1.bf16.msra.mxu0 0
      %3487 = vmatprep.subr.bf16.mxu0 0
      %3488 = vmatpush1.bf16.msra.mxu0 0
      %3489 = vmatprep.subr.bf16.mxu0 0
      %3490 = vmatpush1.bf16.msra.mxu0 0
      %3491 = vmatprep.subr.bf16.mxu0 0
      %3492 = vmatpush1.bf16.msra.mxu0 0
      %3493 = vmatprep.subr.bf16.mxu0 0
      %3494 = vmatpush1.bf16.msra.mxu0 0
      %3495 = vmatprep.subr.bf16.mxu0 0
      %3496 = vmatpush1.bf16.msra.mxu0 0
      %3497 = vmatprep.subr.bf16.mxu0 0
      %3498 = vmatpush1.bf16.msra.mxu0 0
      %3499 = vmatprep.subr.bf16.mxu0 0
      %3500 = vmatpush1.bf16.msra.mxu0 0
      %3501 = vmatprep.subr.bf16.mxu0 0
      %3502 = vmatpush1.bf16.msra.mxu0 0
      %3503 = vmatprep.subr.bf16.mxu0 0
      %3504 = vmatpush1.bf16.msra.mxu0 0
      %3505 = vmatprep.mubr.bf16.mxu0 0
      %3506 = vmatmul.mubr.bf16.gmra.mrb[0].mxu0 %v3462
      %v3507 = vpop.f32.mrb[0].mxu0
      %v3508 = vadd.f32 0.0, %v3507
      %v3509 = vpop.f32.mrb[0].mxu0
      %v3510 = vpop.f32.mrb[0].mxu0
      %v3511 = vadd.f32 0.0, %v3510
      %v3512 = vpop.f32.mrb[0].mxu0
      %3513 = vmatprep.mubr.bf16.mxu0 0
      %3514 = vmatmul.mubr.bf16.gmra.mrb[0].mxu0 %v3465
      %v3515 = vpop.f32.mrb[0].mxu0
      %v3516 = vadd.f32 0.0, %v3515
      %v3517 = vpop.f32.mrb[0].mxu0
      %v3518 = vpop.f32.mrb[0].mxu0
      %v3519 = vadd.f32 0.0, %v3518
      %v3520 = vpop.f32.mrb[0].mxu0
      %3521 = vmatprep.mubr.bf16.mxu0 0
      %3522 = vmatmul.mubr.bf16.gmra.mrb[0].mxu0 %v3468
      %v3523 = vpop.f32.mrb[0].mxu0
      %v3524 = vadd.f32 0.0, %v3523
      %v3525 = vpop.f32.mrb[0].mxu0
      %v3526 = vpop.f32.mrb[0].mxu0
      %v3527 = vadd.f32 0.0, %v3526
      %v3528 = vpop.f32.mrb[0].mxu0
      %3529 = vmatprep.mubr.bf16.mxu0 0
      %3530 = vmatmul.mubr.bf16.gmra.mrb[0].mxu0 %v3471
      %v3531 = vpop.f32.mrb[0].mxu0
      %v3532 = vadd.f32 0.0, %v3531
      %v3533 = vpop.f32.mrb[0].mxu0
      %v3534 = vpop.f32.mrb[0].mxu0
      %v3535 = vadd.f32 0.0, %v3534
      %v3536 = vpop.f32.mrb[0].mxu0
      %3537 = vdwg.mxu0
      %vm3538 = vcmask 7168
      %3539 = vst.msk [vmem:[#allocation2] sm:$0xff] %vm3538, %v3508
      %3540 = vst.msk [vmem:[#allocation2 + $0x8] sm:$0xff] %vm3538, %v3511
      %3541 = vst.msk [vmem:[#allocation2 + $0x10] sm:$0xff] %vm3538, %v3516
      %3542 = vst.msk [vmem:[#allocation2 + $0x18] sm:$0xff] %vm3538, %v3519
      %3543 = vst.msk [vmem:[#allocation2 + $0x20] sm:$0xff] %vm3538, %v3524
      %3544 = vst.msk [vmem:[#allocation2 + $0x28] sm:$0xff] %vm3538, %v3527
      %3545 = vst.msk [vmem:[#allocation2 + $0x30] sm:$0xff] %vm3538, %v3532
      %3546 = vst.msk [vmem:[#allocation2 + $0x38] sm:$0xff] %vm3538, %v3535
      %3555 = vrot.lane.b32.xlu0 %v3508, 127
      %v3556 = vpop.permute.xlu0 %3555
      %3557 = vrot.lane.b32.xlu0 %v3511, 127
      %v3558 = vpop.permute.xlu0 %3557
      %3559 = vrot.lane.b32.xlu0 %v3516, 127
      %v3560 = vpop.permute.xlu0 %3559
      %3561 = vrot.lane.b32.xlu0 %v3519, 127
      %v3562 = vpop.permute.xlu0 %3561
      %3563 = vrot.lane.b32.xlu0 %v3524, 127
      %v3564 = vpop.permute.xlu0 %3563
      %3565 = vrot.lane.b32.xlu0 %v3527, 127
      %v3566 = vpop.permute.xlu0 %3565
      %3567 = vrot.lane.b32.xlu0 %v3532, 127
      %v3568 = vpop.permute.xlu0 %3567
      %3569 = vrot.lane.b32.xlu0 %v3535, 127
      %v3570 = vpop.permute.xlu0 %3569
      %3579 = vst.msk [vmem:[#allocation2 + $0x40] sm:$0xff] %vm3538, %v3556
      %3580 = vst.msk [vmem:[#allocation2 + $0x48] sm:$0xff] %vm3538, %v3558
      %3581 = vst.msk [vmem:[#allocation2 + $0x50] sm:$0xff] %vm3538, %v3560
      %3582 = vst.msk [vmem:[#allocation2 + $0x58] sm:$0xff] %vm3538, %v3562
      %3583 = vst.msk [vmem:[#allocation2 + $0x60] sm:$0xff] %vm3538, %v3564
      %3584 = vst.msk [vmem:[#allocation2 + $0x68] sm:$0xff] %vm3538, %v3566
      %3585 = vst.msk [vmem:[#allocation2 + $0x70] sm:$0xff] %vm3538, %v3568
      %3586 = vst.msk [vmem:[#allocation2 + $0x78] sm:$0xff] %vm3538, %v3570
      %3587 = vrot.lane.b32.xlu0 %v3508, 126
      %v3588 = vpop.permute.xlu0 %3587
      %3589 = vrot.lane.b32.xlu0 %v3511, 126
      %v3590 = vpop.permute.xlu0 %3589
      %3591 = vrot.lane.b32.xlu0 %v3516, 126
      %v3592 = vpop.permute.xlu0 %3591
      %3593 = vrot.lane.b32.xlu0 %v3519, 126
      %v3594 = vpop.permute.xlu0 %3593
      %3595 = vrot.lane.b32.xlu0 %v3524, 126
      %v3596 = vpop.permute.xlu0 %3595
      %3597 = vrot.lane.b32.xlu0 %v3527, 126
      %v3598 = vpop.permute.xlu0 %3597
      %3599 = vrot.lane.b32.xlu0 %v3532, 126
      %v3600 = vpop.permute.xlu0 %3599
      %3601 = vrot.lane.b32.xlu0 %v3535, 126
      %v3602 = vpop.permute.xlu0 %3601
      %3611 = vst.msk [vmem:[#allocation2 + $0x80] sm:$0xff] %vm3538, %v3588
      %3612 = vst.msk [vmem:[#allocation2 + $0x88] sm:$0xff] %vm3538, %v3590
      %3613 = vst.msk [vmem:[#allocation2 + $0x90] sm:$0xff] %vm3538, %v3592
      %3614 = vst.msk [vmem:[#allocation2 + $0x98] sm:$0xff] %vm3538, %v3594
      %3615 = vst.msk [vmem:[#allocation2 + $0xa0] sm:$0xff] %vm3538, %v3596
      %3616 = vst.msk [vmem:[#allocation2 + $0xa8] sm:$0xff] %vm3538, %v3598
      %3617 = vst.msk [vmem:[#allocation2 + $0xb0] sm:$0xff] %vm3538, %v3600
      %3618 = vst.msk [vmem:[#allocation2 + $0xb8] sm:$0xff] %vm3538, %v3602
      %3619 = vrot.lane.b32.xlu0 %v3508, 125
      %v3620 = vpop.permute.xlu0 %3619
      %3621 = vrot.lane.b32.xlu0 %v3511, 125
      %v3622 = vpop.permute.xlu0 %3621
      %3623 = vrot.lane.b32.xlu0 %v3516, 125
      %v3624 = vpop.permute.xlu0 %3623
      %3625 = vrot.lane.b32.xlu0 %v3519, 125
      %v3626 = vpop.permute.xlu0 %3625
      %3627 = vrot.lane.b32.xlu0 %v3524, 125
      %v3628 = vpop.permute.xlu0 %3627
      %3629 = vrot.lane.b32.xlu0 %v3527, 125
      %v3630 = vpop.permute.xlu0 %3629
      %3631 = vrot.lane.b32.xlu0 %v3532, 125
      %v3632 = vpop.permute.xlu0 %3631
      %3633 = vrot.lane.b32.xlu0 %v3535, 125
      %v3634 = vpop.permute.xlu0 %3633
      %3643 = vst.msk [vmem:[#allocation2 + $0xc0] sm:$0xff] %vm3538, %v3620
      %3644 = vst.msk [vmem:[#allocation2 + $0xc8] sm:$0xff] %vm3538, %v3622
      %3645 = vst.msk [vmem:[#allocation2 + $0xd0] sm:$0xff] %vm3538, %v3624
      %3646 = vst.msk [vmem:[#allocation2 + $0xd8] sm:$0xff] %vm3538, %v3626
      %3647 = vst.msk [vmem:[#allocation2 + $0xe0] sm:$0xff] %vm3538, %v3628
      %3648 = vst.msk [vmem:[#allocation2 + $0xe8] sm:$0xff] %vm3538, %v3630
      %3649 = vst.msk [vmem:[#allocation2 + $0xf0] sm:$0xff] %vm3538, %v3632
      %3650 = vst.msk [vmem:[#allocation2 + $0xf8] sm:$0xff] %vm3538, %v3634
      %3651 = vrot.lane.b32.xlu0 %v3508, 124
      %v3652 = vpop.permute.xlu0 %3651
      %3653 = vrot.lane.b32.xlu0 %v3511, 124
      %v3654 = vpop.permute.xlu0 %3653
      %3655 = vrot.lane.b32.xlu0 %v3516, 124
      %v3656 = vpop.permute.xlu0 %3655
      %3657 = vrot.lane.b32.xlu0 %v3519, 124
      %v3658 = vpop.permute.xlu0 %3657
      %3659 = vrot.lane.b32.xlu0 %v3524, 124
      %v3660 = vpop.permute.xlu0 %3659
      %3661 = vrot.lane.b32.xlu0 %v3527, 124
      %v3662 = vpop.permute.xlu0 %3661
      %3663 = vrot.lane.b32.xlu0 %v3532, 124
      %v3664 = vpop.permute.xlu0 %3663
      %3665 = vrot.lane.b32.xlu0 %v3535, 124
      %v3666 = vpop.permute.xlu0 %3665
      %3675 = vst.msk [vmem:[#allocation2 + $0x100] sm:$0xff] %vm3538, %v3652
      %3676 = vst.msk [vmem:[#allocation2 + $0x108] sm:$0xff] %vm3538, %v3654
      %3677 = vst.msk [vmem:[#allocation2 + $0x110] sm:$0xff] %vm3538, %v3656
      %3678 = vst.msk [vmem:[#allocation2 + $0x118] sm:$0xff] %vm3538, %v3658
      %3679 = vst.msk [vmem:[#allocation2 + $0x120] sm:$0xff] %vm3538, %v3660
      %3680 = vst.msk [vmem:[#allocation2 + $0x128] sm:$0xff] %vm3538, %v3662
      %3681 = vst.msk [vmem:[#allocation2 + $0x130] sm:$0xff] %vm3538, %v3664
      %3682 = vst.msk [vmem:[#allocation2 + $0x138] sm:$0xff] %vm3538, %v3666
      %3683 = vrot.lane.b32.xlu0 %v3508, 123
      %v3684 = vpop.permute.xlu0 %3683
      %3685 = vrot.lane.b32.xlu0 %v3511, 123
      %v3686 = vpop.permute.xlu0 %3685
      %3687 = vrot.lane.b32.xlu0 %v3516, 123
      %v3688 = vpop.permute.xlu0 %3687
      %3689 = vrot.lane.b32.xlu0 %v3519, 123
      %v3690 = vpop.permute.xlu0 %3689
      %3691 = vrot.lane.b32.xlu0 %v3524, 123
      %v3692 = vpop.permute.xlu0 %3691
      %3693 = vrot.lane.b32.xlu0 %v3527, 123
      %v3694 = vpop.permute.xlu0 %3693
      %3695 = vrot.lane.b32.xlu0 %v3532, 123
      %v3696 = vpop.permute.xlu0 %3695
      %3697 = vrot.lane.b32.xlu0 %v3535, 123
      %v3698 = vpop.permute.xlu0 %3697
      %3707 = vst.msk [vmem:[#allocation2 + $0x140] sm:$0xff] %vm3538, %v3684
      %3708 = vst.msk [vmem:[#allocation2 + $0x148] sm:$0xff] %vm3538, %v3686
      %3709 = vst.msk [vmem:[#allocation2 + $0x150] sm:$0xff] %vm3538, %v3688
      %3710 = vst.msk [vmem:[#allocation2 + $0x158] sm:$0xff] %vm3538, %v3690
      %3711 = vst.msk [vmem:[#allocation2 + $0x160] sm:$0xff] %vm3538, %v3692
      %3712 = vst.msk [vmem:[#allocation2 + $0x168] sm:$0xff] %vm3538, %v3694
      %3713 = vst.msk [vmem:[#allocation2 + $0x170] sm:$0xff] %vm3538, %v3696
      %3714 = vst.msk [vmem:[#allocation2 + $0x178] sm:$0xff] %vm3538, %v3698
      %3715 = vrot.lane.b32.xlu0 %v3508, 122
      %v3716 = vpop.permute.xlu0 %3715
      %3717 = vrot.lane.b32.xlu0 %v3511, 122
      %v3718 = vpop.permute.xlu0 %3717
      %3719 = vrot.lane.b32.xlu0 %v3516, 122
      %v3720 = vpop.permute.xlu0 %3719
      %3721 = vrot.lane.b32.xlu0 %v3519, 122
      %v3722 = vpop.permute.xlu0 %3721
      %3723 = vrot.lane.b32.xlu0 %v3524, 122
      %v3724 = vpop.permute.xlu0 %3723
      %3725 = vrot.lane.b32.xlu0 %v3527, 122
      %v3726 = vpop.permute.xlu0 %3725
      %3727 = vrot.lane.b32.xlu0 %v3532, 122
      %v3728 = vpop.permute.xlu0 %3727
      %3729 = vrot.lane.b32.xlu0 %v3535, 122
      %v3730 = vpop.permute.xlu0 %3729
      %3739 = vst.msk [vmem:[#allocation2 + $0x180] sm:$0xff] %vm3538, %v3716
      %3740 = vst.msk [vmem:[#allocation2 + $0x188] sm:$0xff] %vm3538, %v3718
      %3741 = vst.msk [vmem:[#allocation2 + $0x190] sm:$0xff] %vm3538, %v3720
      %3742 = vst.msk [vmem:[#allocation2 + $0x198] sm:$0xff] %vm3538, %v3722
      %3743 = vst.msk [vmem:[#allocation2 + $0x1a0] sm:$0xff] %vm3538, %v3724
      %3744 = vst.msk [vmem:[#allocation2 + $0x1a8] sm:$0xff] %vm3538, %v3726
      %3745 = vst.msk [vmem:[#allocation2 + $0x1b0] sm:$0xff] %vm3538, %v3728
      %3746 = vst.msk [vmem:[#allocation2 + $0x1b8] sm:$0xff] %vm3538, %v3730
      %3747 = vrot.lane.b32.xlu0 %v3508, 121
      %v3748 = vpop.permute.xlu0 %3747
      %3749 = vrot.lane.b32.xlu0 %v3511, 121
      %v3750 = vpop.permute.xlu0 %3749
      %3751 = vrot.lane.b32.xlu0 %v3516, 121
      %v3752 = vpop.permute.xlu0 %3751
      %3753 = vrot.lane.b32.xlu0 %v3519, 121
      %v3754 = vpop.permute.xlu0 %3753
      %3755 = vrot.lane.b32.xlu0 %v3524, 121
      %v3756 = vpop.permute.xlu0 %3755
      %3757 = vrot.lane.b32.xlu0 %v3527, 121
      %v3758 = vpop.permute.xlu0 %3757
      %3759 = vrot.lane.b32.xlu0 %v3532, 121
      %v3760 = vpop.permute.xlu0 %3759
      %3761 = vrot.lane.b32.xlu0 %v3535, 121
      %v3762 = vpop.permute.xlu0 %3761
      %3771 = vst.msk [vmem:[#allocation2 + $0x1c0] sm:$0xff] %vm3538, %v3748
      %3772 = vst.msk [vmem:[#allocation2 + $0x1c8] sm:$0xff] %vm3538, %v3750
      %3773 = vst.msk [vmem:[#allocation2 + $0x1d0] sm:$0xff] %vm3538, %v3752
      %3774 = vst.msk [vmem:[#allocation2 + $0x1d8] sm:$0xff] %vm3538, %v3754
      %3775 = vst.msk [vmem:[#allocation2 + $0x1e0] sm:$0xff] %vm3538, %v3756
      %3776 = vst.msk [vmem:[#allocation2 + $0x1e8] sm:$0xff] %vm3538, %v3758
      %3777 = vst.msk [vmem:[#allocation2 + $0x1f0] sm:$0xff] %vm3538, %v3760
      %3778 = vst.msk [vmem:[#allocation2 + $0x1f8] sm:$0xff] %vm3538, %v3762
      %3779 = vrot.lane.b32.xlu0 %v3508, 120
      %v3780 = vpop.permute.xlu0 %3779
      %3781 = vrot.lane.b32.xlu0 %v3511, 120
      %v3782 = vpop.permute.xlu0 %3781
      %3783 = vrot.lane.b32.xlu0 %v3516, 120
      %v3784 = vpop.permute.xlu0 %3783
      %3785 = vrot.lane.b32.xlu0 %v3519, 120
      %v3786 = vpop.permute.xlu0 %3785
      %3787 = vrot.lane.b32.xlu0 %v3524, 120
      %v3788 = vpop.permute.xlu0 %3787
      %3789 = vrot.lane.b32.xlu0 %v3527, 120
      %v3790 = vpop.permute.xlu0 %3789
      %3791 = vrot.lane.b32.xlu0 %v3532, 120
      %v3792 = vpop.permute.xlu0 %3791
      %3793 = vrot.lane.b32.xlu0 %v3535, 120
      %v3794 = vpop.permute.xlu0 %3793
      %3803 = vst.msk [vmem:[#allocation2 + $0x200] sm:$0xff] %vm3538, %v3780
      %3804 = vst.msk [vmem:[#allocation2 + $0x208] sm:$0xff] %vm3538, %v3782
      %3805 = vst.msk [vmem:[#allocation2 + $0x210] sm:$0xff] %vm3538, %v3784
      %3806 = vst.msk [vmem:[#allocation2 + $0x218] sm:$0xff] %vm3538, %v3786
      %3807 = vst.msk [vmem:[#allocation2 + $0x220] sm:$0xff] %vm3538, %v3788
      %3808 = vst.msk [vmem:[#allocation2 + $0x228] sm:$0xff] %vm3538, %v3790
      %3809 = vst.msk [vmem:[#allocation2 + $0x230] sm:$0xff] %vm3538, %v3792
      %3810 = vst.msk [vmem:[#allocation2 + $0x238] sm:$0xff] %vm3538, %v3794
      %v3811 = vld [vmem:[%s11] sm:$0xff]
      %v3812 = vld [vmem:[%s11 + $0x8] sm:$0xff]
      %v3813 = vld [vmem:[%s11 + $0x10] sm:$0xf]
      %v3814 = vld [vmem:[%s11 + $0x14] sm:$0xff]
      %v3815 = vld [vmem:[%s11 + $0x1c] sm:$0xff]
      %v3816 = vld [vmem:[%s11 + $0x24] sm:$0xf]
      %v3817 = vld [vmem:[%s11 + $0x28] sm:$0xff]
      %v3818 = vld [vmem:[%s11 + $0x30] sm:$0xff]
      %v3819 = vld [vmem:[%s11 + $0x38] sm:$0xf]
      %v3820 = vld [vmem:[%s11 + $0x3c] sm:$0xff]
      %v3821 = vld [vmem:[%s11 + $0x44] sm:$0xff]
      %v3822 = vld [vmem:[%s11 + $0x4c] sm:$0xf]
      %v3823 = vld [vmem:[%s11 + $0x50] sm:$0xff]
      %v3824 = vld [vmem:[%s11 + $0x58] sm:$0xff]
      %v3825 = vld [vmem:[%s11 + $0x60] sm:$0xf]
      %v3826 = vld [vmem:[%s11 + $0x64] sm:$0xff]
      %v3827 = vld [vmem:[%s11 + $0x6c] sm:$0xff]
      %v3828 = vld [vmem:[%s11 + $0x74] sm:$0xf]
      %v3829 = vld [vmem:[%s11 + $0x78] sm:$0xff]
      %v3830 = vld [vmem:[%s11 + $0x80] sm:$0xff]
      %v3831 = vld [vmem:[%s11 + $0x88] sm:$0xf]
      %v3832 = vld [vmem:[%s11 + $0x8c] sm:$0xff]
      %v3833 = vld [vmem:[%s11 + $0x94] sm:$0xff]
      %v3834 = vld [vmem:[%s11 + $0x9c] sm:$0xf]
      %v3835 = vld [vmem:[%s11 + $0xa0] sm:$0xff]
      %v3836 = vld [vmem:[%s11 + $0xa8] sm:$0xff]
      %v3837 = vld [vmem:[%s11 + $0xb0] sm:$0xf]
      %v3838 = vld [vmem:[%s11 + $0xb4] sm:$0xff]
      %v3839 = vld [vmem:[%s11 + $0xbc] sm:$0xff]
      %v3840 = vld [vmem:[%s11 + $0xc4] sm:$0xf]
      %v3841 = vld [vmem:[%s11 + $0xc8] sm:$0xff]
      %v3842 = vld [vmem:[%s11 + $0xd0] sm:$0xff]
      %v3843 = vld [vmem:[%s11 + $0xd8] sm:$0xf]
      %v3844 = vld [vmem:[%s11 + $0xdc] sm:$0xff]
      %v3845 = vld [vmem:[%s11 + $0xe4] sm:$0xff]
      %v3846 = vld [vmem:[%s11 + $0xec] sm:$0xf]
      %v3847 = vld [vmem:[%s11 + $0xf0] sm:$0xff]
      %v3848 = vld [vmem:[%s11 + $0xf8] sm:$0xff]
      %v3849 = vld [vmem:[%s11 + $0x100] sm:$0xf]
      %v3850 = vld [vmem:[%s11 + $0x104] sm:$0xff]
      %v3851 = vld [vmem:[%s11 + $0x10c] sm:$0xff]
      %v3852 = vld [vmem:[%s11 + $0x114] sm:$0xf]
      %v3853 = vld [vmem:[%s11 + $0x118] sm:$0xff]
      %v3854 = vld [vmem:[%s11 + $0x120] sm:$0xff]
      %v3855 = vld [vmem:[%s11 + $0x128] sm:$0xf]
      %v3856 = vld [vmem:[%s11 + $0x12c] sm:$0xff]
      %v3857 = vld [vmem:[%s11 + $0x134] sm:$0xff]
      %v3858 = vld [vmem:[%s11 + $0x13c] sm:$0xf]
      %v3859 = vld [vmem:[%s11 + $0x140] sm:$0xff]
      %v3860 = vld [vmem:[%s11 + $0x148] sm:$0xff]
      %v3861 = vld [vmem:[%s11 + $0x150] sm:$0xf]
      %v3862 = vld [vmem:[%s11 + $0x154] sm:$0xff]
      %v3863 = vld [vmem:[%s11 + $0x15c] sm:$0xff]
      %v3864 = vld [vmem:[%s11 + $0x164] sm:$0xf]
      %v3865 = vld [vmem:[%s11 + $0x168] sm:$0xff]
      %v3866 = vld [vmem:[%s11 + $0x170] sm:$0xff]
      %v3867 = vld [vmem:[%s11 + $0x178] sm:$0xf]
      %v3868 = vld [vmem:[%s11 + $0x17c] sm:$0xff]
      %v3869 = vld [vmem:[%s11 + $0x184] sm:$0xff]
      %v3870 = vld [vmem:[%s11 + $0x18c] sm:$0xf]
      %v3871 = vld [vmem:[%s11 + $0x190] sm:$0xff]
      %v3872 = vld [vmem:[%s11 + $0x198] sm:$0xff]
      %v3873 = vld [vmem:[%s11 + $0x1a0] sm:$0xf]
      %v3874 = vld [vmem:[%s11 + $0x1a4] sm:$0xff]
      %v3875 = vld [vmem:[%s11 + $0x1ac] sm:$0xff]
      %v3876 = vld [vmem:[%s11 + $0x1b4] sm:$0xf]
      %v3877 = vld [vmem:[%s11 + $0x1b8] sm:$0xff]
      %v3878 = vld [vmem:[%s11 + $0x1c0] sm:$0xff]
      %v3879 = vld [vmem:[%s11 + $0x1c8] sm:$0xf]
      %v3880 = vld [vmem:[%s11 + $0x1cc] sm:$0xff]
      %v3881 = vld [vmem:[%s11 + $0x1d4] sm:$0xff]
      %v3882 = vld [vmem:[%s11 + $0x1dc] sm:$0xf]
      %v3883 = vld [vmem:[%s11 + $0x1e0] sm:$0xff]
      %v3884 = vld [vmem:[%s11 + $0x1e8] sm:$0xff]
      %v3885 = vld [vmem:[%s11 + $0x1f0] sm:$0xf]
      %v3886 = vld [vmem:[%s11 + $0x1f4] sm:$0xff]
      %v3887 = vld [vmem:[%s11 + $0x1fc] sm:$0xff]
      %v3888 = vld [vmem:[%s11 + $0x204] sm:$0xf]
      %v3889 = vld [vmem:[%s11 + $0x208] sm:$0xff]
      %v3890 = vld [vmem:[%s11 + $0x210] sm:$0xff]
      %v3891 = vld [vmem:[%s11 + $0x218] sm:$0xf]
      %v3892 = vld [vmem:[%s11 + $0x21c] sm:$0xff]
      %v3893 = vld [vmem:[%s11 + $0x224] sm:$0xff]
      %v3894 = vld [vmem:[%s11 + $0x22c] sm:$0xf]
      %v3895 = vld [vmem:[%s11 + $0x230] sm:$0xff]
      %v3896 = vld [vmem:[%s11 + $0x238] sm:$0xff]
      %v3897 = vld [vmem:[%s11 + $0x240] sm:$0xf]
      %v3898 = vld [vmem:[%s11 + $0x244] sm:$0xff]
      %v3899 = vld [vmem:[%s11 + $0x24c] sm:$0xff]
      %v3900 = vld [vmem:[%s11 + $0x254] sm:$0xf]
      %v3901 = vld [vmem:[%s11 + $0x258] sm:$0xff]
      %v3902 = vld [vmem:[%s11 + $0x260] sm:$0xff]
      %v3903 = vld [vmem:[%s11 + $0x268] sm:$0xf]
      %v3904 = vld [vmem:[%s11 + $0x26c] sm:$0xff]
      %v3905 = vld [vmem:[%s11 + $0x274] sm:$0xff]
      %v3906 = vld [vmem:[%s11 + $0x27c] sm:$0xf]
      %v3907 = vld [vmem:[#allocation2] sm:$0xff]
      %v3908 = vld [vmem:[#allocation2 + $0x8] sm:$0xff]
      %v3909 = vld [vmem:[#allocation2 + $0x10] sm:$0xff]
      %v3910 = vld [vmem:[#allocation2 + $0x18] sm:$0xff]
      %v3911 = vld [vmem:[#allocation2 + $0x20] sm:$0xff]
      %v3912 = vld [vmem:[#allocation2 + $0x28] sm:$0xff]
      %v3913 = vld [vmem:[#allocation2 + $0x30] sm:$0xff]
      %v3914 = vld [vmem:[#allocation2 + $0x38] sm:$0xff]
      %v3915 = vld [vmem:[#allocation2 + $0x40] sm:$0xff]
      %v3916 = vld [vmem:[#allocation2 + $0x48] sm:$0xff]
      %v3917 = vld [vmem:[#allocation2 + $0x50] sm:$0xff]
      %v3918 = vld [vmem:[#allocation2 + $0x58] sm:$0xff]
      %v3919 = vld [vmem:[#allocation2 + $0x60] sm:$0xff]
      %v3920 = vld [vmem:[#allocation2 + $0x68] sm:$0xff]
      %v3921 = vld [vmem:[#allocation2 + $0x70] sm:$0xff]
      %v3922 = vld [vmem:[#allocation2 + $0x78] sm:$0xff]
      %v3923 = vld [vmem:[#allocation2 + $0x80] sm:$0xff]
      %v3924 = vld [vmem:[#allocation2 + $0x88] sm:$0xff]
      %v3925 = vld [vmem:[#allocation2 + $0x90] sm:$0xff]
      %v3926 = vld [vmem:[#allocation2 + $0x98] sm:$0xff]
      %v3927 = vld [vmem:[#allocation2 + $0xa0] sm:$0xff]
      %v3928 = vld [vmem:[#allocation2 + $0xa8] sm:$0xff]
      %v3929 = vld [vmem:[#allocation2 + $0xb0] sm:$0xff]
      %v3930 = vld [vmem:[#allocation2 + $0xb8] sm:$0xff]
      %v3931 = vld [vmem:[#allocation2 + $0xc0] sm:$0xff]
      %v3932 = vld [vmem:[#allocation2 + $0xc8] sm:$0xff]
      %v3933 = vld [vmem:[#allocation2 + $0xd0] sm:$0xff]
      %v3934 = vld [vmem:[#allocation2 + $0xd8] sm:$0xff]
      %v3935 = vld [vmem:[#allocation2 + $0xe0] sm:$0xff]
      %v3936 = vld [vmem:[#allocation2 + $0xe8] sm:$0xff]
      %v3937 = vld [vmem:[#allocation2 + $0xf0] sm:$0xff]
      %v3938 = vld [vmem:[#allocation2 + $0xf8] sm:$0xff]
      %v3939 = vld [vmem:[#allocation2 + $0x100] sm:$0xff]
      %v3940 = vld [vmem:[#allocation2 + $0x108] sm:$0xff]
      %v3941 = vld [vmem:[#allocation2 + $0x110] sm:$0xff]
      %v3942 = vld [vmem:[#allocation2 + $0x118] sm:$0xff]
      %v3943 = vld [vmem:[#allocation2 + $0x120] sm:$0xff]
      %v3944 = vld [vmem:[#allocation2 + $0x128] sm:$0xff]
      %v3945 = vld [vmem:[#allocation2 + $0x130] sm:$0xff]
      %v3946 = vld [vmem:[#allocation2 + $0x138] sm:$0xff]
      %v3947 = vld [vmem:[#allocation2 + $0x140] sm:$0xff]
      %v3948 = vld [vmem:[#allocation2 + $0x148] sm:$0xff]
      %v3949 = vld [vmem:[#allocation2 + $0x150] sm:$0xff]
      %v3950 = vld [vmem:[#allocation2 + $0x158] sm:$0xff]
      %v3951 = vld [vmem:[#allocation2 + $0x160] sm:$0xff]
      %v3952 = vld [vmem:[#allocation2 + $0x168] sm:$0xff]
      %v3953 = vld [vmem:[#allocation2 + $0x170] sm:$0xff]
      %v3954 = vld [vmem:[#allocation2 + $0x178] sm:$0xff]
      %v3955 = vld [vmem:[#allocation2 + $0x180] sm:$0xff]
      %v3956 = vld [vmem:[#allocation2 + $0x188] sm:$0xff]
      %v3957 = vld [vmem:[#allocation2 + $0x190] sm:$0xff]
      %v3958 = vld [vmem:[#allocation2 + $0x198] sm:$0xff]
      %v3959 = vld [vmem:[#allocation2 + $0x1a0] sm:$0xff]
      %v3960 = vld [vmem:[#allocation2 + $0x1a8] sm:$0xff]
      %v3961 = vld [vmem:[#allocation2 + $0x1b0] sm:$0xff]
      %v3962 = vld [vmem:[#allocation2 + $0x1b8] sm:$0xff]
      %v3963 = vld [vmem:[#allocation2 + $0x1c0] sm:$0xff]
      %v3964 = vld [vmem:[#allocation2 + $0x1c8] sm:$0xff]
      %v3965 = vld [vmem:[#allocation2 + $0x1d0] sm:$0xff]
      %v3966 = vld [vmem:[#allocation2 + $0x1d8] sm:$0xff]
      %v3967 = vld [vmem:[#allocation2 + $0x1e0] sm:$0xff]
      %v3968 = vld [vmem:[#allocation2 + $0x1e8] sm:$0xff]
      %v3969 = vld [vmem:[#allocation2 + $0x1f0] sm:$0xff]
      %v3970 = vld [vmem:[#allocation2 + $0x1f8] sm:$0xff]
      %v3971 = vld [vmem:[#allocation2 + $0x200] sm:$0xff]
      %v3972 = vld [vmem:[#allocation2 + $0x208] sm:$0xff]
      %v3973 = vld [vmem:[#allocation2 + $0x210] sm:$0xff]
      %v3974 = vld [vmem:[#allocation2 + $0x218] sm:$0xff]
      %v3975 = vld [vmem:[#allocation2 + $0x220] sm:$0xff]
      %v3976 = vld [vmem:[#allocation2 + $0x228] sm:$0xff]
      %v3977 = vld [vmem:[#allocation2 + $0x230] sm:$0xff]
      %v3978 = vld [vmem:[#allocation2 + $0x238] sm:$0xff]
      %v3979 = vpack.c.bf16 %v3908, %v3907
      %v3980 = vpack.c.bf16 %v3910, %v3909
      %v3981 = vpack.c.bf16 %v3912, %v3911
      %v3982 = vpack.c.bf16 %v3914, %v3913
      %v3983 = vpack.c.bf16 %v3916, %v3915
      %v3984 = vpack.c.bf16 %v3918, %v3917
      %v3985 = vpack.c.bf16 %v3920, %v3919
      %v3986 = vpack.c.bf16 %v3922, %v3921
      %v3987 = vpack.c.bf16 %v3924, %v3923
      %v3988 = vpack.c.bf16 %v3926, %v3925
      %v3989 = vpack.c.bf16 %v3928, %v3927
      %v3990 = vpack.c.bf16 %v3930, %v3929
      %v3991 = vpack.c.bf16 %v3932, %v3931
      %v3992 = vpack.c.bf16 %v3934, %v3933
      %v3993 = vpack.c.bf16 %v3936, %v3935
      %v3994 = vpack.c.bf16 %v3938, %v3937
      %v3995 = vpack.c.bf16 %v3940, %v3939
      %v3996 = vpack.c.bf16 %v3942, %v3941
      %v3997 = vpack.c.bf16 %v3944, %v3943
      %v3998 = vpack.c.bf16 %v3946, %v3945
      %v3999 = vpack.c.bf16 %v3948, %v3947
      %v4000 = vpack.c.bf16 %v3950, %v3949
      %v4001 = vpack.c.bf16 %v3952, %v3951
      %v4002 = vpack.c.bf16 %v3954, %v3953
      %v4003 = vpack.c.bf16 %v3956, %v3955
      %v4004 = vpack.c.bf16 %v3958, %v3957
      %v4005 = vpack.c.bf16 %v3960, %v3959
      %v4006 = vpack.c.bf16 %v3962, %v3961
      %v4007 = vpack.c.bf16 %v3964, %v3963
      %v4008 = vpack.c.bf16 %v3966, %v3965
      %v4009 = vpack.c.bf16 %v3968, %v3967
      %v4010 = vpack.c.bf16 %v3970, %v3969
      %v4011 = vpack.c.bf16 %v3972, %v3971
      %v4012 = vpack.c.bf16 %v3974, %v3973
      %v4013 = vpack.c.bf16 %v3976, %v3975
      %v4014 = vpack.c.bf16 %v3978, %v3977
      %v4015 = vld [vmem:[#allocation3] sm:$0x1]
      %v4017 = vlaneseq
      %v4018 = vshrl.u32 %v4017, 7
      %v4019 = vsub.s32 0, %v4018
      %v4020 = vrot.slane %v4015, %v4019
      %v4118 = vunpack.c.l.b16 %v3811
      %v4119 = vunpack.c.h.b16 %v3811
      %v4120 = vunpack.c.l.b16 %v3812
      %v4121 = vunpack.c.h.b16 %v3812
      %v4122 = vunpack.c.l.b16 %v3813
      %v4123 = vunpack.c.l.b16 %v3814
      %v4124 = vunpack.c.h.b16 %v3814
      %v4125 = vunpack.c.l.b16 %v3815
      %v4126 = vunpack.c.h.b16 %v3815
      %v4127 = vunpack.c.l.b16 %v3816
      %v4128 = vunpack.c.l.b16 %v3817
      %v4129 = vunpack.c.h.b16 %v3817
      %v4130 = vunpack.c.l.b16 %v3818
      %v4131 = vunpack.c.h.b16 %v3818
      %v4132 = vunpack.c.l.b16 %v3819
      %v4133 = vunpack.c.l.b16 %v3820
      %v4134 = vunpack.c.h.b16 %v3820
      %v4135 = vunpack.c.l.b16 %v3821
      %v4136 = vunpack.c.h.b16 %v3821
      %v4137 = vunpack.c.l.b16 %v3822
      %v4138 = vunpack.c.l.b16 %v3823
      %v4139 = vunpack.c.h.b16 %v3823
      %v4140 = vunpack.c.l.b16 %v3824
      %v4141 = vunpack.c.h.b16 %v3824
      %v4142 = vunpack.c.l.b16 %v3825
      %v4143 = vunpack.c.l.b16 %v3826
      %v4144 = vunpack.c.h.b16 %v3826
      %v4145 = vunpack.c.l.b16 %v3827
      %v4146 = vunpack.c.h.b16 %v3827
      %v4147 = vunpack.c.l.b16 %v3828
      %v4148 = vunpack.c.l.b16 %v3829
      %v4149 = vunpack.c.h.b16 %v3829
      %v4150 = vunpack.c.l.b16 %v3830
      %v4151 = vunpack.c.h.b16 %v3830
      %v4152 = vunpack.c.l.b16 %v3831
      %v4153 = vunpack.c.l.b16 %v3832
      %v4154 = vunpack.c.h.b16 %v3832
      %v4155 = vunpack.c.l.b16 %v3833
      %v4156 = vunpack.c.h.b16 %v3833
      %v4157 = vunpack.c.l.b16 %v3834
      %v4158 = vunpack.c.l.b16 %v3835
      %v4159 = vunpack.c.h.b16 %v3835
      %v4160 = vunpack.c.l.b16 %v3836
      %v4161 = vunpack.c.h.b16 %v3836
      %v4162 = vunpack.c.l.b16 %v3837
      %v4163 = vunpack.c.l.b16 %v3838
      %v4164 = vunpack.c.h.b16 %v3838
      %v4165 = vunpack.c.l.b16 %v3839
      %v4166 = vunpack.c.h.b16 %v3839
      %v4167 = vunpack.c.l.b16 %v3840
      %v4168 = vunpack.c.l.b16 %v3841
      %v4169 = vunpack.c.h.b16 %v3841
      %v4170 = vunpack.c.l.b16 %v3842
      %v4171 = vunpack.c.h.b16 %v3842
      %v4172 = vunpack.c.l.b16 %v3843
      %v4173 = vunpack.c.l.b16 %v3844
      %v4174 = vunpack.c.h.b16 %v3844
      %v4175 = vunpack.c.l.b16 %v3845
      %v4176 = vunpack.c.h.b16 %v3845
      %v4177 = vunpack.c.l.b16 %v3846
      %v4178 = vunpack.c.l.b16 %v3847
      %v4179 = vunpack.c.h.b16 %v3847
      %v4180 = vunpack.c.l.b16 %v3848
      %v4181 = vunpack.c.h.b16 %v3848
      %v4182 = vunpack.c.l.b16 %v3849
      %v4183 = vunpack.c.l.b16 %v3850
      %v4184 = vunpack.c.h.b16 %v3850
      %v4185 = vunpack.c.l.b16 %v3851
      %v4186 = vunpack.c.h.b16 %v3851
      %v4187 = vunpack.c.l.b16 %v3852
      %v4188 = vunpack.c.l.b16 %v3853
      %v4189 = vunpack.c.h.b16 %v3853
      %v4190 = vunpack.c.l.b16 %v3854
      %v4191 = vunpack.c.h.b16 %v3854
      %v4192 = vunpack.c.l.b16 %v3855
      %v4193 = vunpack.c.l.b16 %v3856
      %v4194 = vunpack.c.h.b16 %v3856
      %v4195 = vunpack.c.l.b16 %v3857
      %v4196 = vunpack.c.h.b16 %v3857
      %v4197 = vunpack.c.l.b16 %v3858
      %v4198 = vunpack.c.l.b16 %v3859
      %v4199 = vunpack.c.h.b16 %v3859
      %v4200 = vunpack.c.l.b16 %v3860
      %v4201 = vunpack.c.h.b16 %v3860
      %v4202 = vunpack.c.l.b16 %v3861
      %v4203 = vunpack.c.l.b16 %v3862
      %v4204 = vunpack.c.h.b16 %v3862
      %v4205 = vunpack.c.l.b16 %v3863
      %v4206 = vunpack.c.h.b16 %v3863
      %v4207 = vunpack.c.l.b16 %v3864
      %v4208 = vunpack.c.l.b16 %v3865
      %v4209 = vunpack.c.h.b16 %v3865
      %v4210 = vunpack.c.l.b16 %v3866
      %v4211 = vunpack.c.h.b16 %v3866
      %v4212 = vunpack.c.l.b16 %v3867
      %v4213 = vunpack.c.l.b16 %v3868
      %v4214 = vunpack.c.h.b16 %v3868
      %v4215 = vunpack.c.l.b16 %v3869
      %v4216 = vunpack.c.h.b16 %v3869
      %v4217 = vunpack.c.l.b16 %v3870
      %v4218 = vunpack.c.l.b16 %v3871
      %v4219 = vunpack.c.h.b16 %v3871
      %v4220 = vunpack.c.l.b16 %v3872
      %v4221 = vunpack.c.h.b16 %v3872
      %v4222 = vunpack.c.l.b16 %v3873
      %v4223 = vunpack.c.l.b16 %v3874
      %v4224 = vunpack.c.h.b16 %v3874
      %v4225 = vunpack.c.l.b16 %v3875
      %v4226 = vunpack.c.h.b16 %v3875
      %v4227 = vunpack.c.l.b16 %v3876
      %v4228 = vunpack.c.l.b16 %v3877
      %v4229 = vunpack.c.h.b16 %v3877
      %v4230 = vunpack.c.l.b16 %v3878
      %v4231 = vunpack.c.h.b16 %v3878
      %v4232 = vunpack.c.l.b16 %v3879
      %v4233 = vunpack.c.l.b16 %v3880
      %v4234 = vunpack.c.h.b16 %v3880
      %v4235 = vunpack.c.l.b16 %v3881
      %v4236 = vunpack.c.h.b16 %v3881
      %v4237 = vunpack.c.l.b16 %v3882
      %v4238 = vunpack.c.l.b16 %v3883
      %v4239 = vunpack.c.h.b16 %v3883
      %v4240 = vunpack.c.l.b16 %v3884
      %v4241 = vunpack.c.h.b16 %v3884
      %v4242 = vunpack.c.l.b16 %v3885
      %v4243 = vunpack.c.l.b16 %v3886
      %v4244 = vunpack.c.h.b16 %v3886
      %v4245 = vunpack.c.l.b16 %v3887
      %v4246 = vunpack.c.h.b16 %v3887
      %v4247 = vunpack.c.l.b16 %v3888
      %v4248 = vunpack.c.l.b16 %v3889
      %v4249 = vunpack.c.h.b16 %v3889
      %v4250 = vunpack.c.l.b16 %v3890
      %v4251 = vunpack.c.h.b16 %v3890
      %v4252 = vunpack.c.l.b16 %v3891
      %v4253 = vunpack.c.l.b16 %v3892
      %v4254 = vunpack.c.h.b16 %v3892
      %v4255 = vunpack.c.l.b16 %v3893
      %v4256 = vunpack.c.h.b16 %v3893
      %v4257 = vunpack.c.l.b16 %v3894
      %v4258 = vunpack.c.l.b16 %v3895
      %v4259 = vunpack.c.h.b16 %v3895
      %v4260 = vunpack.c.l.b16 %v3896
      %v4261 = vunpack.c.h.b16 %v3896
      %v4262 = vunpack.c.l.b16 %v3897
      %v4263 = vunpack.c.l.b16 %v3898
      %v4264 = vunpack.c.h.b16 %v3898
      %v4265 = vunpack.c.l.b16 %v3899
      %v4266 = vunpack.c.h.b16 %v3899
      %v4267 = vunpack.c.l.b16 %v3900
      %v4268 = vunpack.c.l.b16 %v3901
      %v4269 = vunpack.c.h.b16 %v3901
      %v4270 = vunpack.c.l.b16 %v3902
      %v4271 = vunpack.c.h.b16 %v3902
      %v4272 = vunpack.c.l.b16 %v3903
      %v4273 = vunpack.c.l.b16 %v3904
      %v4274 = vunpack.c.h.b16 %v3904
      %v4275 = vunpack.c.l.b16 %v3905
      %v4276 = vunpack.c.h.b16 %v3905
      %v4277 = vunpack.c.l.b16 %v3906
      %v4278 = vpack.c.b16 %v4123, %v4118
      %v4279 = vpack.c.b16 %v4124, %v4119
      %v4280 = vpack.c.b16 %v4125, %v4120
      %v4281 = vpack.c.b16 %v4126, %v4121
      %v4282 = vpack.c.b16 %v4127, %v4122
      %v4283 = vpack.c.b16 %v4133, %v4128
      %v4284 = vpack.c.b16 %v4134, %v4129
      %v4285 = vpack.c.b16 %v4135, %v4130
      %v4286 = vpack.c.b16 %v4136, %v4131
      %v4287 = vpack.c.b16 %v4137, %v4132
      %v4288 = vpack.c.b16 %v4143, %v4138
      %v4289 = vpack.c.b16 %v4144, %v4139
      %v4290 = vpack.c.b16 %v4145, %v4140
      %v4291 = vpack.c.b16 %v4146, %v4141
      %v4292 = vpack.c.b16 %v4147, %v4142
      %v4293 = vpack.c.b16 %v4153, %v4148
      %v4294 = vpack.c.b16 %v4154, %v4149
      %v4295 = vpack.c.b16 %v4155, %v4150
      %v4296 = vpack.c.b16 %v4156, %v4151
      %v4297 = vpack.c.b16 %v4157, %v4152
      %v4298 = vpack.c.b16 %v4163, %v4158
      %v4299 = vpack.c.b16 %v4164, %v4159
      %v4300 = vpack.c.b16 %v4165, %v4160
      %v4301 = vpack.c.b16 %v4166, %v4161
      %v4302 = vpack.c.b16 %v4167, %v4162
      %v4303 = vpack.c.b16 %v4173, %v4168
      %v4304 = vpack.c.b16 %v4174, %v4169
      %v4305 = vpack.c.b16 %v4175, %v4170
      %v4306 = vpack.c.b16 %v4176, %v4171
      %v4307 = vpack.c.b16 %v4177, %v4172
      %v4308 = vpack.c.b16 %v4183, %v4178
      %v4309 = vpack.c.b16 %v4184, %v4179
      %v4310 = vpack.c.b16 %v4185, %v4180
      %v4311 = vpack.c.b16 %v4186, %v4181
      %v4312 = vpack.c.b16 %v4187, %v4182
      %v4313 = vpack.c.b16 %v4193, %v4188
      %v4314 = vpack.c.b16 %v4194, %v4189
      %v4315 = vpack.c.b16 %v4195, %v4190
      %v4316 = vpack.c.b16 %v4196, %v4191
      %v4317 = vpack.c.b16 %v4197, %v4192
      %v4318 = vpack.c.b16 %v4203, %v4198
      %v4319 = vpack.c.b16 %v4204, %v4199
      %v4320 = vpack.c.b16 %v4205, %v4200
      %v4321 = vpack.c.b16 %v4206, %v4201
      %v4322 = vpack.c.b16 %v4207, %v4202
      %v4323 = vpack.c.b16 %v4213, %v4208
      %v4324 = vpack.c.b16 %v4214, %v4209
      %v4325 = vpack.c.b16 %v4215, %v4210
      %v4326 = vpack.c.b16 %v4216, %v4211
      %v4327 = vpack.c.b16 %v4217, %v4212
      %v4328 = vpack.c.b16 %v4223, %v4218
      %v4329 = vpack.c.b16 %v4224, %v4219
      %v4330 = vpack.c.b16 %v4225, %v4220
      %v4331 = vpack.c.b16 %v4226, %v4221
      %v4332 = vpack.c.b16 %v4227, %v4222
      %v4333 = vpack.c.b16 %v4233, %v4228
      %v4334 = vpack.c.b16 %v4234, %v4229
      %v4335 = vpack.c.b16 %v4235, %v4230
      %v4336 = vpack.c.b16 %v4236, %v4231
      %v4337 = vpack.c.b16 %v4237, %v4232
      %v4338 = vpack.c.b16 %v4243, %v4238
      %v4339 = vpack.c.b16 %v4244, %v4239
      %v4340 = vpack.c.b16 %v4245, %v4240
      %v4341 = vpack.c.b16 %v4246, %v4241
      %v4342 = vpack.c.b16 %v4247, %v4242
      %v4343 = vpack.c.b16 %v4253, %v4248
      %v4344 = vpack.c.b16 %v4254, %v4249
      %v4345 = vpack.c.b16 %v4255, %v4250
      %v4346 = vpack.c.b16 %v4256, %v4251
      %v4347 = vpack.c.b16 %v4257, %v4252
      %v4348 = vpack.c.b16 %v4263, %v4258
      %v4349 = vpack.c.b16 %v4264, %v4259
      %v4350 = vpack.c.b16 %v4265, %v4260
      %v4351 = vpack.c.b16 %v4266, %v4261
      %v4352 = vpack.c.b16 %v4267, %v4262
      %v4353 = vpack.c.b16 %v4273, %v4268
      %v4354 = vpack.c.b16 %v4274, %v4269
      %v4355 = vpack.c.b16 %v4275, %v4270
      %v4356 = vpack.c.b16 %v4276, %v4271
      %v4357 = vpack.c.b16 %v4277, %v4272
      %v4423 = vsel %vm1910, %v4282, 0
      %v4426 = vsel %vm1910, %v4287, 0
      %v4429 = vsel %vm1910, %v4292, 0
      %v4432 = vsel %vm1910, %v4297, 0
      %v4435 = vsel %vm1910, %v4302, 0
      %v4438 = vsel %vm1910, %v4307, 0
      %v4441 = vsel %vm1910, %v4312, 0
      %v4444 = vsel %vm1910, %v4317, 0
      %v4447 = vsel %vm1910, %v4322, 0
      %v4450 = vsel %vm1910, %v4327, 0
      %v4453 = vsel %vm1910, %v4332, 0
      %v4456 = vsel %vm1910, %v4337, 0
      %v4459 = vsel %vm1910, %v4342, 0
      %v4462 = vsel %vm1910, %v4347, 0
      %v4465 = vsel %vm1910, %v4352, 0
      %v4468 = vsel %vm1910, %v4357, 0
      %4470 = vmatprep.subr.bf16.mxu0 0
      %4471 = vmatpush1.bf16.msra.mxu0 %v3979
      %4472 = vmatprep.subr.bf16.mxu0 0
      %4473 = vmatpush1.bf16.msra.mxu0 %v3980
      %4474 = vmatprep.subr.bf16.mxu0 0
      %4475 = vmatpush1.bf16.msra.mxu0 %v3981
      %4476 = vmatprep.subr.bf16.mxu0 0
      %4477 = vmatpush1.bf16.msra.mxu0 %v3982
      %4478 = vmatprep.subr.bf16.mxu0 0
      %4479 = vmatpush1.bf16.msra.mxu0 %v3983
      %4480 = vmatprep.subr.bf16.mxu0 0
      %4481 = vmatpush1.bf16.msra.mxu0 %v3984
      %4482 = vmatprep.subr.bf16.mxu0 0
      %4483 = vmatpush1.bf16.msra.mxu0 %v3985
      %4484 = vmatprep.subr.bf16.mxu0 0
      %4485 = vmatpush1.bf16.msra.mxu0 %v3986
      %4486 = vmatprep.subr.bf16.mxu0 0
      %4487 = vmatpush1.bf16.msra.mxu0 %v3987
      %4488 = vmatprep.subr.bf16.mxu0 0
      %4489 = vmatpush1.bf16.msra.mxu0 %v3988
      %4490 = vmatprep.subr.bf16.mxu0 0
      %4491 = vmatpush1.bf16.msra.mxu0 %v3989
      %4492 = vmatprep.subr.bf16.mxu0 0
      %4493 = vmatpush1.bf16.msra.mxu0 %v3990
      %4494 = vmatprep.subr.bf16.mxu0 0
      %4495 = vmatpush1.bf16.msra.mxu0 %v3991
      %4496 = vmatprep.subr.bf16.mxu0 0
      %4497 = vmatpush1.bf16.msra.mxu0 %v3992
      %4498 = vmatprep.subr.bf16.mxu0 0
      %4499 = vmatpush1.bf16.msra.mxu0 %v3993
      %4500 = vmatprep.subr.bf16.mxu0 0
      %4501 = vmatpush1.bf16.msra.mxu0 %v3994
      %4502 = vmatprep.mubr.bf16.mxu0 %v4279
      %4503 = vmatmul.mubr.bf16.gmra.mrb[0].mxu0 %v4278
      %v4504 = vpop.f32.mrb[0].mxu0
      %v4505 = vadd.f32 %v4020, %v4504
      %v4506 = vpop.f32.mrb[0].mxu0
      %v4507 = vpop.f32.mrb[0].mxu0
      %v4508 = vadd.f32 %v4020, %v4507
      %v4509 = vpop.f32.mrb[0].mxu0
      %4510 = vmatprep.mubr.bf16.mxu0 %v4284
      %4511 = vmatmul.mubr.bf16.gmra.mrb[0].mxu0 %v4283
      %v4512 = vpop.f32.mrb[0].mxu0
      %v4513 = vadd.f32 %v4020, %v4512
      %v4514 = vpop.f32.mrb[0].mxu0
      %v4515 = vpop.f32.mrb[0].mxu0
      %v4516 = vadd.f32 %v4020, %v4515
      %v4517 = vpop.f32.mrb[0].mxu0
      %4518 = vmatprep.mubr.bf16.mxu0 %v4289
      %4519 = vmatmul.mubr.bf16.gmra.mrb[0].mxu0 %v4288
      %v4520 = vpop.f32.mrb[0].mxu0
      %v4521 = vadd.f32 %v4020, %v4520
      %v4522 = vpop.f32.mrb[0].mxu0
      %v4523 = vpop.f32.mrb[0].mxu0
      %v4524 = vadd.f32 %v4020, %v4523
      %v4525 = vpop.f32.mrb[0].mxu0
      %4526 = vmatprep.mubr.bf16.mxu0 %v4294
      %4527 = vmatmul.mubr.bf16.gmra.mrb[0].mxu0 %v4293
      %v4528 = vpop.f32.mrb[0].mxu0
      %v4529 = vadd.f32 %v4020, %v4528
      %v4530 = vpop.f32.mrb[0].mxu0
      %v4531 = vpop.f32.mrb[0].mxu0
      %v4532 = vadd.f32 %v4020, %v4531
      %v4533 = vpop.f32.mrb[0].mxu0
      %4534 = vmatprep.mubr.bf16.mxu0 %v4299
      %4535 = vmatmul.mubr.bf16.gmra.mrb[0].mxu0 %v4298
      %v4536 = vpop.f32.mrb[0].mxu0
      %v4537 = vadd.f32 %v4020, %v4536
      %v4538 = vpop.f32.mrb[0].mxu0
      %v4539 = vpop.f32.mrb[0].mxu0
      %v4540 = vadd.f32 %v4020, %v4539
      %v4541 = vpop.f32.mrb[0].mxu0
      %4542 = vmatprep.mubr.bf16.mxu0 %v4304
      %4543 = vmatmul.mubr.bf16.gmra.mrb[0].mxu0 %v4303
      %v4544 = vpop.f32.mrb[0].mxu0
      %v4545 = vadd.f32 %v4020, %v4544
      %v4546 = vpop.f32.mrb[0].mxu0
      %v4547 = vpop.f32.mrb[0].mxu0
      %v4548 = vadd.f32 %v4020, %v4547
      %v4549 = vpop.f32.mrb[0].mxu0
      %4550 = vmatprep.mubr.bf16.mxu0 %v4309
      %4551 = vmatmul.mubr.bf16.gmra.mrb[0].mxu0 %v4308
      %v4552 = vpop.f32.mrb[0].mxu0
      %v4553 = vadd.f32 %v4020, %v4552
      %v4554 = vpop.f32.mrb[0].mxu0
      %v4555 = vpop.f32.mrb[0].mxu0
      %v4556 = vadd.f32 %v4020, %v4555
      %v4557 = vpop.f32.mrb[0].mxu0
      %4558 = vmatprep.mubr.bf16.mxu0 %v4314
      %4559 = vmatmul.mubr.bf16.gmra.mrb[0].mxu0 %v4313
      %v4560 = vpop.f32.mrb[0].mxu0
      %v4561 = vadd.f32 %v4020, %v4560
      %v4562 = vpop.f32.mrb[0].mxu0
      %v4563 = vpop.f32.mrb[0].mxu0
      %v4564 = vadd.f32 %v4020, %v4563
      %v4565 = vpop.f32.mrb[0].mxu0
      %4566 = vmatprep.mubr.bf16.mxu0 %v4319
      %4567 = vmatmul.mubr.bf16.gmra.mrb[0].mxu0 %v4318
      %v4568 = vpop.f32.mrb[0].mxu0
      %v4569 = vadd.f32 %v4020, %v4568
      %v4570 = vpop.f32.mrb[0].mxu0
      %v4571 = vpop.f32.mrb[0].mxu0
      %v4572 = vadd.f32 %v4020, %v4571
      %v4573 = vpop.f32.mrb[0].mxu0
      %4574 = vmatprep.mubr.bf16.mxu0 %v4324
      %4575 = vmatmul.mubr.bf16.gmra.mrb[0].mxu0 %v4323
      %v4576 = vpop.f32.mrb[0].mxu0
      %v4577 = vadd.f32 %v4020, %v4576
      %v4578 = vpop.f32.mrb[0].mxu0
      %v4579 = vpop.f32.mrb[0].mxu0
      %v4580 = vadd.f32 %v4020, %v4579
      %v4581 = vpop.f32.mrb[0].mxu0
      %4582 = vmatprep.mubr.bf16.mxu0 %v4329
      %4583 = vmatmul.mubr.bf16.gmra.mrb[0].mxu0 %v4328
      %v4584 = vpop.f32.mrb[0].mxu0
      %v4585 = vadd.f32 %v4020, %v4584
      %v4586 = vpop.f32.mrb[0].mxu0
      %v4587 = vpop.f32.mrb[0].mxu0
      %v4588 = vadd.f32 %v4020, %v4587
      %v4589 = vpop.f32.mrb[0].mxu0
      %4590 = vmatprep.mubr.bf16.mxu0 %v4334
      %4591 = vmatmul.mubr.bf16.gmra.mrb[0].mxu0 %v4333
      %v4592 = vpop.f32.mrb[0].mxu0
      %v4593 = vadd.f32 %v4020, %v4592
      %v4594 = vpop.f32.mrb[0].mxu0
      %v4595 = vpop.f32.mrb[0].mxu0
      %v4596 = vadd.f32 %v4020, %v4595
      %v4597 = vpop.f32.mrb[0].mxu0
      %4598 = vmatprep.mubr.bf16.mxu0 %v4339
      %4599 = vmatmul.mubr.bf16.gmra.mrb[0].mxu0 %v4338
      %v4600 = vpop.f32.mrb[0].mxu0
      %v4601 = vadd.f32 %v4020, %v4600
      %v4602 = vpop.f32.mrb[0].mxu0
      %v4603 = vpop.f32.mrb[0].mxu0
      %v4604 = vadd.f32 %v4020, %v4603
      %v4605 = vpop.f32.mrb[0].mxu0
      %4606 = vmatprep.mubr.bf16.mxu0 %v4344
      %4607 = vmatmul.mubr.bf16.gmra.mrb[0].mxu0 %v4343
      %v4608 = vpop.f32.mrb[0].mxu0
      %v4609 = vadd.f32 %v4020, %v4608
      %v4610 = vpop.f32.mrb[0].mxu0
      %v4611 = vpop.f32.mrb[0].mxu0
      %v4612 = vadd.f32 %v4020, %v4611
      %v4613 = vpop.f32.mrb[0].mxu0
      %4614 = vmatprep.mubr.bf16.mxu0 %v4349
      %4615 = vmatmul.mubr.bf16.gmra.mrb[0].mxu0 %v4348
      %v4616 = vpop.f32.mrb[0].mxu0
      %v4617 = vadd.f32 %v4020, %v4616
      %v4618 = vpop.f32.mrb[0].mxu0
      %v4619 = vpop.f32.mrb[0].mxu0
      %v4620 = vadd.f32 %v4020, %v4619
      %v4621 = vpop.f32.mrb[0].mxu0
      %4622 = vmatprep.mubr.bf16.mxu0 %v4354
      %4623 = vmatmul.mubr.bf16.gmra.mrb[0].mxu0 %v4353
      %v4624 = vpop.f32.mrb[0].mxu0
      %v4625 = vadd.f32 %v4020, %v4624
      %v4626 = vpop.f32.mrb[0].mxu0
      %v4627 = vpop.f32.mrb[0].mxu0
      %v4628 = vadd.f32 %v4020, %v4627
      %v4629 = vpop.f32.mrb[0].mxu0
      %4630 = vdwg.mxu0
      %4631 = vmatprep.subr.bf16.mxu0 0
      %4632 = vmatpush1.bf16.msra.mxu0 %v3995
      %4633 = vmatprep.subr.bf16.mxu0 0
      %4634 = vmatpush1.bf16.msra.mxu0 %v3996
      %4635 = vmatprep.subr.bf16.mxu0 0
      %4636 = vmatpush1.bf16.msra.mxu0 %v3997
      %4637 = vmatprep.subr.bf16.mxu0 0
      %4638 = vmatpush1.bf16.msra.mxu0 %v3998
      %4639 = vmatprep.subr.bf16.mxu0 0
      %4640 = vmatpush1.bf16.msra.mxu0 %v3999
      %4641 = vmatprep.subr.bf16.mxu0 0
      %4642 = vmatpush1.bf16.msra.mxu0 %v4000
      %4643 = vmatprep.subr.bf16.mxu0 0
      %4644 = vmatpush1.bf16.msra.mxu0 %v4001
      %4645 = vmatprep.subr.bf16.mxu0 0
      %4646 = vmatpush1.bf16.msra.mxu0 %v4002
      %4647 = vmatprep.subr.bf16.mxu0 0
      %4648 = vmatpush1.bf16.msra.mxu0 %v4003
      %4649 = vmatprep.subr.bf16.mxu0 0
      %4650 = vmatpush1.bf16.msra.mxu0 %v4004
      %4651 = vmatprep.subr.bf16.mxu0 0
      %4652 = vmatpush1.bf16.msra.mxu0 %v4005
      %4653 = vmatprep.subr.bf16.mxu0 0
      %4654 = vmatpush1.bf16.msra.mxu0 %v4006
      %4655 = vmatprep.subr.bf16.mxu0 0
      %4656 = vmatpush1.bf16.msra.mxu0 %v4007
      %4657 = vmatprep.subr.bf16.mxu0 0
      %4658 = vmatpush1.bf16.msra.mxu0 %v4008
      %4659 = vmatprep.subr.bf16.mxu0 0
      %4660 = vmatpush1.bf16.msra.mxu0 %v4009
      %4661 = vmatprep.subr.bf16.mxu0 0
      %4662 = vmatpush1.bf16.msra.mxu0 %v4010
      %4663 = vmatprep.mubr.bf16.mxu0 %v4281
      %4664 = vmatmul.mubr.bf16.gmra.mrb[0].mxu0 %v4280
      %v4665 = vpop.f32.mrb[0].mxu0
      %v4666 = vadd.f32 %v4505, %v4665
      %v4667 = vpop.f32.mrb[0].mxu0
      %v4668 = vpop.f32.mrb[0].mxu0
      %v4669 = vadd.f32 %v4508, %v4668
      %v4670 = vpop.f32.mrb[0].mxu0
      %4671 = vmatprep.mubr.bf16.mxu0 %v4286
      %4672 = vmatmul.mubr.bf16.gmra.mrb[0].mxu0 %v4285
      %v4673 = vpop.f32.mrb[0].mxu0
      %v4674 = vadd.f32 %v4513, %v4673
      %v4675 = vpop.f32.mrb[0].mxu0
      %v4676 = vpop.f32.mrb[0].mxu0
      %v4677 = vadd.f32 %v4516, %v4676
      %v4678 = vpop.f32.mrb[0].mxu0
      %4679 = vmatprep.mubr.bf16.mxu0 %v4291
      %4680 = vmatmul.mubr.bf16.gmra.mrb[0].mxu0 %v4290
      %v4681 = vpop.f32.mrb[0].mxu0
      %v4682 = vadd.f32 %v4521, %v4681
      %v4683 = vpop.f32.mrb[0].mxu0
      %v4684 = vpop.f32.mrb[0].mxu0
      %v4685 = vadd.f32 %v4524, %v4684
      %v4686 = vpop.f32.mrb[0].mxu0
      %4687 = vmatprep.mubr.bf16.mxu0 %v4296
      %4688 = vmatmul.mubr.bf16.gmra.mrb[0].mxu0 %v4295
      %v4689 = vpop.f32.mrb[0].mxu0
      %v4690 = vadd.f32 %v4529, %v4689
      %v4691 = vpop.f32.mrb[0].mxu0
      %v4692 = vpop.f32.mrb[0].mxu0
      %v4693 = vadd.f32 %v4532, %v4692
      %v4694 = vpop.f32.mrb[0].mxu0
      %4695 = vmatprep.mubr.bf16.mxu0 %v4301
      %4696 = vmatmul.mubr.bf16.gmra.mrb[0].mxu0 %v4300
      %v4697 = vpop.f32.mrb[0].mxu0
      %v4698 = vadd.f32 %v4537, %v4697
      %v4699 = vpop.f32.mrb[0].mxu0
      %v4700 = vpop.f32.mrb[0].mxu0
      %v4701 = vadd.f32 %v4540, %v4700
      %v4702 = vpop.f32.mrb[0].mxu0
      %4703 = vmatprep.mubr.bf16.mxu0 %v4306
      %4704 = vmatmul.mubr.bf16.gmra.mrb[0].mxu0 %v4305
      %v4705 = vpop.f32.mrb[0].mxu0
      %v4706 = vadd.f32 %v4545, %v4705
      %v4707 = vpop.f32.mrb[0].mxu0
      %v4708 = vpop.f32.mrb[0].mxu0
      %v4709 = vadd.f32 %v4548, %v4708
      %v4710 = vpop.f32.mrb[0].mxu0
      %4711 = vmatprep.mubr.bf16.mxu0 %v4311
      %4712 = vmatmul.mubr.bf16.gmra.mrb[0].mxu0 %v4310
      %v4713 = vpop.f32.mrb[0].mxu0
      %v4714 = vadd.f32 %v4553, %v4713
      %v4715 = vpop.f32.mrb[0].mxu0
      %v4716 = vpop.f32.mrb[0].mxu0
      %v4717 = vadd.f32 %v4556, %v4716
      %v4718 = vpop.f32.mrb[0].mxu0
      %4719 = vmatprep.mubr.bf16.mxu0 %v4316
      %4720 = vmatmul.mubr.bf16.gmra.mrb[0].mxu0 %v4315
      %v4721 = vpop.f32.mrb[0].mxu0
      %v4722 = vadd.f32 %v4561, %v4721
      %v4723 = vpop.f32.mrb[0].mxu0
      %v4724 = vpop.f32.mrb[0].mxu0
      %v4725 = vadd.f32 %v4564, %v4724
      %v4726 = vpop.f32.mrb[0].mxu0
      %4727 = vmatprep.mubr.bf16.mxu0 %v4321
      %4728 = vmatmul.mubr.bf16.gmra.mrb[0].mxu0 %v4320
      %v4729 = vpop.f32.mrb[0].mxu0
      %v4730 = vadd.f32 %v4569, %v4729
      %v4731 = vpop.f32.mrb[0].mxu0
      %v4732 = vpop.f32.mrb[0].mxu0
      %v4733 = vadd.f32 %v4572, %v4732
      %v4734 = vpop.f32.mrb[0].mxu0
      %4735 = vmatprep.mubr.bf16.mxu0 %v4326
      %4736 = vmatmul.mubr.bf16.gmra.mrb[0].mxu0 %v4325
      %v4737 = vpop.f32.mrb[0].mxu0
      %v4738 = vadd.f32 %v4577, %v4737
      %v4739 = vpop.f32.mrb[0].mxu0
      %v4740 = vpop.f32.mrb[0].mxu0
      %v4741 = vadd.f32 %v4580, %v4740
      %v4742 = vpop.f32.mrb[0].mxu0
      %4743 = vmatprep.mubr.bf16.mxu0 %v4331
      %4744 = vmatmul.mubr.bf16.gmra.mrb[0].mxu0 %v4330
      %v4745 = vpop.f32.mrb[0].mxu0
      %v4746 = vadd.f32 %v4585, %v4745
      %v4747 = vpop.f32.mrb[0].mxu0
      %v4748 = vpop.f32.mrb[0].mxu0
      %v4749 = vadd.f32 %v4588, %v4748
      %v4750 = vpop.f32.mrb[0].mxu0
      %4751 = vmatprep.mubr.bf16.mxu0 %v4336
      %4752 = vmatmul.mubr.bf16.gmra.mrb[0].mxu0 %v4335
      %v4753 = vpop.f32.mrb[0].mxu0
      %v4754 = vadd.f32 %v4593, %v4753
      %v4755 = vpop.f32.mrb[0].mxu0
      %v4756 = vpop.f32.mrb[0].mxu0
      %v4757 = vadd.f32 %v4596, %v4756
      %v4758 = vpop.f32.mrb[0].mxu0
      %4759 = vmatprep.mubr.bf16.mxu0 %v4341
      %4760 = vmatmul.mubr.bf16.gmra.mrb[0].mxu0 %v4340
      %v4761 = vpop.f32.mrb[0].mxu0
      %v4762 = vadd.f32 %v4601, %v4761
      %v4763 = vpop.f32.mrb[0].mxu0
      %v4764 = vpop.f32.mrb[0].mxu0
      %v4765 = vadd.f32 %v4604, %v4764
      %v4766 = vpop.f32.mrb[0].mxu0
      %4767 = vmatprep.mubr.bf16.mxu0 %v4346
      %4768 = vmatmul.mubr.bf16.gmra.mrb[0].mxu0 %v4345
      %v4769 = vpop.f32.mrb[0].mxu0
      %v4770 = vadd.f32 %v4609, %v4769
      %v4771 = vpop.f32.mrb[0].mxu0
      %v4772 = vpop.f32.mrb[0].mxu0
      %v4773 = vadd.f32 %v4612, %v4772
      %v4774 = vpop.f32.mrb[0].mxu0
      %4775 = vmatprep.mubr.bf16.mxu0 %v4351
      %4776 = vmatmul.mubr.bf16.gmra.mrb[0].mxu0 %v4350
      %v4777 = vpop.f32.mrb[0].mxu0
      %v4778 = vadd.f32 %v4617, %v4777
      %v4779 = vpop.f32.mrb[0].mxu0
      %v4780 = vpop.f32.mrb[0].mxu0
      %v4781 = vadd.f32 %v4620, %v4780
      %v4782 = vpop.f32.mrb[0].mxu0
      %4783 = vmatprep.mubr.bf16.mxu0 %v4356
      %4784 = vmatmul.mubr.bf16.gmra.mrb[0].mxu0 %v4355
      %v4785 = vpop.f32.mrb[0].mxu0
      %v4786 = vadd.f32 %v4625, %v4785
      %v4787 = vpop.f32.mrb[0].mxu0
      %v4788 = vpop.f32.mrb[0].mxu0
      %v4789 = vadd.f32 %v4628, %v4788
      %v4790 = vpop.f32.mrb[0].mxu0
      %4791 = vdwg.mxu0
      %4792 = vmatprep.subr.bf16.mxu0 0
      %4793 = vmatpush1.bf16.msra.mxu0 %v4011
      %4794 = vmatprep.subr.bf16.mxu0 0
      %4795 = vmatpush1.bf16.msra.mxu0 %v4012
      %4796 = vmatprep.subr.bf16.mxu0 0
      %4797 = vmatpush1.bf16.msra.mxu0 %v4013
      %4798 = vmatprep.subr.bf16.mxu0 0
      %4799 = vmatpush1.bf16.msra.mxu0 %v4014
      %4800 = vmatprep.subr.bf16.mxu0 0
      %4801 = vmatpush1.bf16.msra.mxu0 0
      %4802 = vmatprep.subr.bf16.mxu0 0
      %4803 = vmatpush1.bf16.msra.mxu0 0
      %4804 = vmatprep.subr.bf16.mxu0 0
      %4805 = vmatpush1.bf16.msra.mxu0 0
      %4806 = vmatprep.subr.bf16.mxu0 0
      %4807 = vmatpush1.bf16.msra.mxu0 0
      %4808 = vmatprep.subr.bf16.mxu0 0
      %4809 = vmatpush1.bf16.msra.mxu0 0
      %4810 = vmatprep.subr.bf16.mxu0 0
      %4811 = vmatpush1.bf16.msra.mxu0 0
      %4812 = vmatprep.subr.bf16.mxu0 0
      %4813 = vmatpush1.bf16.msra.mxu0 0
      %4814 = vmatprep.subr.bf16.mxu0 0
      %4815 = vmatpush1.bf16.msra.mxu0 0
      %4816 = vmatprep.subr.bf16.mxu0 0
      %4817 = vmatpush1.bf16.msra.mxu0 0
      %4818 = vmatprep.subr.bf16.mxu0 0
      %4819 = vmatpush1.bf16.msra.mxu0 0
      %4820 = vmatprep.subr.bf16.mxu0 0
      %4821 = vmatpush1.bf16.msra.mxu0 0
      %4822 = vmatprep.subr.bf16.mxu0 0
      %4823 = vmatpush1.bf16.msra.mxu0 0
      %4824 = vmatprep.mubr.bf16.mxu0 0
      %4825 = vmatmul.mubr.bf16.gmra.mrb[0].mxu0 %v4423
      %v4826 = vpop.f32.mrb[0].mxu0
      %v4827 = vadd.f32 %v4666, %v4826
      %v4828 = vpop.f32.mrb[0].mxu0
      %v4829 = vpop.f32.mrb[0].mxu0
      %v4830 = vadd.f32 %v4669, %v4829
      %v4831 = vpop.f32.mrb[0].mxu0
      %4832 = vmatprep.mubr.bf16.mxu0 0
      %4833 = vmatmul.mubr.bf16.gmra.mrb[0].mxu0 %v4426
      %v4834 = vpop.f32.mrb[0].mxu0
      %v4835 = vadd.f32 %v4674, %v4834
      %v4836 = vpop.f32.mrb[0].mxu0
      %v4837 = vpop.f32.mrb[0].mxu0
      %v4838 = vadd.f32 %v4677, %v4837
      %v4839 = vpop.f32.mrb[0].mxu0
      %4840 = vmatprep.mubr.bf16.mxu0 0
      %4841 = vmatmul.mubr.bf16.gmra.mrb[0].mxu0 %v4429
      %v4842 = vpop.f32.mrb[0].mxu0
      %v4843 = vadd.f32 %v4682, %v4842
      %v4844 = vpop.f32.mrb[0].mxu0
      %v4845 = vpop.f32.mrb[0].mxu0
      %v4846 = vadd.f32 %v4685, %v4845
      %v4847 = vpop.f32.mrb[0].mxu0
      %4848 = vmatprep.mubr.bf16.mxu0 0
      %4849 = vmatmul.mubr.bf16.gmra.mrb[0].mxu0 %v4432
      %v4850 = vpop.f32.mrb[0].mxu0
      %v4851 = vadd.f32 %v4690, %v4850
      %v4852 = vpop.f32.mrb[0].mxu0
      %v4853 = vpop.f32.mrb[0].mxu0
      %v4854 = vadd.f32 %v4693, %v4853
      %v4855 = vpop.f32.mrb[0].mxu0
      %4856 = vmatprep.mubr.bf16.mxu0 0
      %4857 = vmatmul.mubr.bf16.gmra.mrb[0].mxu0 %v4435
      %v4858 = vpop.f32.mrb[0].mxu0
      %v4859 = vadd.f32 %v4698, %v4858
      %v4860 = vpop.f32.mrb[0].mxu0
      %v4861 = vpop.f32.mrb[0].mxu0
      %v4862 = vadd.f32 %v4701, %v4861
      %v4863 = vpop.f32.mrb[0].mxu0
      %4864 = vmatprep.mubr.bf16.mxu0 0
      %4865 = vmatmul.mubr.bf16.gmra.mrb[0].mxu0 %v4438
      %v4866 = vpop.f32.mrb[0].mxu0
      %v4867 = vadd.f32 %v4706, %v4866
      %v4868 = vpop.f32.mrb[0].mxu0
      %v4869 = vpop.f32.mrb[0].mxu0
      %v4870 = vadd.f32 %v4709, %v4869
      %v4871 = vpop.f32.mrb[0].mxu0
      %4872 = vmatprep.mubr.bf16.mxu0 0
      %4873 = vmatmul.mubr.bf16.gmra.mrb[0].mxu0 %v4441
      %v4874 = vpop.f32.mrb[0].mxu0
      %v4875 = vadd.f32 %v4714, %v4874
      %v4876 = vpop.f32.mrb[0].mxu0
      %v4877 = vpop.f32.mrb[0].mxu0
      %v4878 = vadd.f32 %v4717, %v4877
      %v4879 = vpop.f32.mrb[0].mxu0
      %4880 = vmatprep.mubr.bf16.mxu0 0
      %4881 = vmatmul.mubr.bf16.gmra.mrb[0].mxu0 %v4444
      %v4882 = vpop.f32.mrb[0].mxu0
      %v4883 = vadd.f32 %v4722, %v4882
      %v4884 = vpop.f32.mrb[0].mxu0
      %v4885 = vpop.f32.mrb[0].mxu0
      %v4886 = vadd.f32 %v4725, %v4885
      %v4887 = vpop.f32.mrb[0].mxu0
      %4888 = vmatprep.mubr.bf16.mxu0 0
      %4889 = vmatmul.mubr.bf16.gmra.mrb[0].mxu0 %v4447
      %v4890 = vpop.f32.mrb[0].mxu0
      %v4891 = vadd.f32 %v4730, %v4890
      %v4892 = vpop.f32.mrb[0].mxu0
      %v4893 = vpop.f32.mrb[0].mxu0
      %v4894 = vadd.f32 %v4733, %v4893
      %v4895 = vpop.f32.mrb[0].mxu0
      %4896 = vmatprep.mubr.bf16.mxu0 0
      %4897 = vmatmul.mubr.bf16.gmra.mrb[0].mxu0 %v4450
      %v4898 = vpop.f32.mrb[0].mxu0
      %v4899 = vadd.f32 %v4738, %v4898
      %v4900 = vpop.f32.mrb[0].mxu0
      %v4901 = vpop.f32.mrb[0].mxu0
      %v4902 = vadd.f32 %v4741, %v4901
      %v4903 = vpop.f32.mrb[0].mxu0
      %4904 = vmatprep.mubr.bf16.mxu0 0
      %4905 = vmatmul.mubr.bf16.gmra.mrb[0].mxu0 %v4453
      %v4906 = vpop.f32.mrb[0].mxu0
      %v4907 = vadd.f32 %v4746, %v4906
      %v4908 = vpop.f32.mrb[0].mxu0
      %v4909 = vpop.f32.mrb[0].mxu0
      %v4910 = vadd.f32 %v4749, %v4909
      %v4911 = vpop.f32.mrb[0].mxu0
      %4912 = vmatprep.mubr.bf16.mxu0 0
      %4913 = vmatmul.mubr.bf16.gmra.mrb[0].mxu0 %v4456
      %v4914 = vpop.f32.mrb[0].mxu0
      %v4915 = vadd.f32 %v4754, %v4914
      %v4916 = vpop.f32.mrb[0].mxu0
      %v4917 = vpop.f32.mrb[0].mxu0
      %v4918 = vadd.f32 %v4757, %v4917
      %v4919 = vpop.f32.mrb[0].mxu0
      %4920 = vmatprep.mubr.bf16.mxu0 0
      %4921 = vmatmul.mubr.bf16.gmra.mrb[0].mxu0 %v4459
      %v4922 = vpop.f32.mrb[0].mxu0
      %v4923 = vadd.f32 %v4762, %v4922
      %v4924 = vpop.f32.mrb[0].mxu0
      %v4925 = vpop.f32.mrb[0].mxu0
      %v4926 = vadd.f32 %v4765, %v4925
      %v4927 = vpop.f32.mrb[0].mxu0
      %4928 = vmatprep.mubr.bf16.mxu0 0
      %4929 = vmatmul.mubr.bf16.gmra.mrb[0].mxu0 %v4462
      %v4930 = vpop.f32.mrb[0].mxu0
      %v4931 = vadd.f32 %v4770, %v4930
      %v4932 = vpop.f32.mrb[0].mxu0
      %v4933 = vpop.f32.mrb[0].mxu0
      %v4934 = vadd.f32 %v4773, %v4933
      %v4935 = vpop.f32.mrb[0].mxu0
      %4936 = vmatprep.mubr.bf16.mxu0 0
      %4937 = vmatmul.mubr.bf16.gmra.mrb[0].mxu0 %v4465
      %v4938 = vpop.f32.mrb[0].mxu0
      %v4939 = vadd.f32 %v4778, %v4938
      %v4940 = vpop.f32.mrb[0].mxu0
      %v4941 = vpop.f32.mrb[0].mxu0
      %v4942 = vadd.f32 %v4781, %v4941
      %v4943 = vpop.f32.mrb[0].mxu0
      %4944 = vmatprep.mubr.bf16.mxu0 0
      %4945 = vmatmul.mubr.bf16.gmra.mrb[0].mxu0 %v4468
      %v4946 = vpop.f32.mrb[0].mxu0
      %v4947 = vadd.f32 %v4786, %v4946
      %v4948 = vpop.f32.mrb[0].mxu0
      %v4949 = vpop.f32.mrb[0].mxu0
      %v4950 = vadd.f32 %v4789, %v4949
      %v4951 = vpop.f32.mrb[0].mxu0
      %4952 = vdwg.mxu0
      %v4953 = vxor.u32 %v4827, 2147483648
      %v4954 = vxor.u32 %v4830, 2147483648
      %v4955 = vxor.u32 %v4835, 2147483648
      %v4956 = vxor.u32 %v4838, 2147483648
      %v4957 = vxor.u32 %v4843, 2147483648
      %v4958 = vxor.u32 %v4846, 2147483648
      %v4959 = vxor.u32 %v4851, 2147483648
      %v4960 = vxor.u32 %v4854, 2147483648
      %v4961 = vxor.u32 %v4859, 2147483648
      %v4962 = vxor.u32 %v4862, 2147483648
      %v4963 = vxor.u32 %v4867, 2147483648
      %v4964 = vxor.u32 %v4870, 2147483648
      %v4965 = vxor.u32 %v4875, 2147483648
      %v4966 = vxor.u32 %v4878, 2147483648
      %v4967 = vxor.u32 %v4883, 2147483648
      %v4968 = vxor.u32 %v4886, 2147483648
      %v4969 = vxor.u32 %v4891, 2147483648
      %v4970 = vxor.u32 %v4894, 2147483648
      %v4971 = vxor.u32 %v4899, 2147483648
      %v4972 = vxor.u32 %v4902, 2147483648
      %v4973 = vxor.u32 %v4907, 2147483648
      %v4974 = vxor.u32 %v4910, 2147483648
      %v4975 = vxor.u32 %v4915, 2147483648
      %v4976 = vxor.u32 %v4918, 2147483648
      %v4977 = vxor.u32 %v4923, 2147483648
      %v4978 = vxor.u32 %v4926, 2147483648
      %v4979 = vxor.u32 %v4931, 2147483648
      %v4980 = vxor.u32 %v4934, 2147483648
      %v4981 = vxor.u32 %v4939, 2147483648
      %v4982 = vxor.u32 %v4942, 2147483648
      %v4983 = vxor.u32 %v4947, 2147483648
      %v4984 = vxor.u32 %v4950, 2147483648
      %v4985 = vmul.f32 %v4953, 1.442695
      %v4986 = vpow.pop %v4985
      %v4987 = vmul.f32 %v4954, 1.442695
      %v4988 = vpow.pop %v4987
      %v4989 = vmul.f32 %v4955, 1.442695
      %v4990 = vpow.pop %v4989
      %v4991 = vmul.f32 %v4956, 1.442695
      %v4992 = vpow.pop %v4991
      %v4993 = vmul.f32 %v4957, 1.442695
      %v4994 = vpow.pop %v4993
      %v4995 = vmul.f32 %v4958, 1.442695
      %v4996 = vpow.pop %v4995
      %v4997 = vmul.f32 %v4959, 1.442695
      %v4998 = vpow.pop %v4997
      %v4999 = vmul.f32 %v4960, 1.442695
      %v5000 = vpow.pop %v4999
      %v5001 = vmul.f32 %v4961, 1.442695
      %v5002 = vpow.pop %v5001
      %v5003 = vmul.f32 %v4962, 1.442695
      %v5004 = vpow.pop %v5003
      %v5005 = vmul.f32 %v4963, 1.442695
      %v5006 = vpow.pop %v5005
      %v5007 = vmul.f32 %v4964, 1.442695
      %v5008 = vpow.pop %v5007
      %v5009 = vmul.f32 %v4965, 1.442695
      %v5010 = vpow.pop %v5009
      %v5011 = vmul.f32 %v4966, 1.442695
      %v5012 = vpow.pop %v5011
      %v5013 = vmul.f32 %v4967, 1.442695
      %v5014 = vpow.pop %v5013
      %v5015 = vmul.f32 %v4968, 1.442695
      %v5016 = vpow.pop %v5015
      %v5017 = vmul.f32 %v4969, 1.442695
      %v5018 = vpow.pop %v5017
      %v5019 = vmul.f32 %v4970, 1.442695
      %v5020 = vpow.pop %v5019
      %v5021 = vmul.f32 %v4971, 1.442695
      %v5022 = vpow.pop %v5021
      %v5023 = vmul.f32 %v4972, 1.442695
      %v5024 = vpow.pop %v5023
      %v5025 = vmul.f32 %v4973, 1.442695
      %v5026 = vpow.pop %v5025
      %v5027 = vmul.f32 %v4974, 1.442695
      %v5028 = vpow.pop %v5027
      %v5029 = vmul.f32 %v4975, 1.442695
      %v5030 = vpow.pop %v5029
      %v5031 = vmul.f32 %v4976, 1.442695
      %v5032 = vpow.pop %v5031
      %v5033 = vmul.f32 %v4977, 1.442695
      %v5034 = vpow.pop %v5033
      %v5035 = vmul.f32 %v4978, 1.442695
      %v5036 = vpow.pop %v5035
      %v5037 = vmul.f32 %v4979, 1.442695
      %v5038 = vpow.pop %v5037
      %v5039 = vmul.f32 %v4980, 1.442695
      %v5040 = vpow.pop %v5039
      %v5041 = vmul.f32 %v4981, 1.442695
      %v5042 = vpow.pop %v5041
      %v5043 = vmul.f32 %v4982, 1.442695
      %v5044 = vpow.pop %v5043
      %v5045 = vmul.f32 %v4983, 1.442695
      %v5046 = vpow.pop %v5045
      %v5047 = vmul.f32 %v4984, 1.442695
      %v5048 = vpow.pop %v5047
      %v5049 = vadd.f32 %v4986, 1.0
      %v5050 = vadd.f32 %v4988, 1.0
      %v5051 = vadd.f32 %v4990, 1.0
      %v5052 = vadd.f32 %v4992, 1.0
      %v5053 = vadd.f32 %v4994, 1.0
      %v5054 = vadd.f32 %v4996, 1.0
      %v5055 = vadd.f32 %v4998, 1.0
      %v5056 = vadd.f32 %v5000, 1.0
      %v5057 = vadd.f32 %v5002, 1.0
      %v5058 = vadd.f32 %v5004, 1.0
      %v5059 = vadd.f32 %v5006, 1.0
      %v5060 = vadd.f32 %v5008, 1.0
      %v5061 = vadd.f32 %v5010, 1.0
      %v5062 = vadd.f32 %v5012, 1.0
      %v5063 = vadd.f32 %v5014, 1.0
      %v5064 = vadd.f32 %v5016, 1.0
      %v5065 = vadd.f32 %v5018, 1.0
      %v5066 = vadd.f32 %v5020, 1.0
      %v5067 = vadd.f32 %v5022, 1.0
      %v5068 = vadd.f32 %v5024, 1.0
      %v5069 = vadd.f32 %v5026, 1.0
      %v5070 = vadd.f32 %v5028, 1.0
      %v5071 = vadd.f32 %v5030, 1.0
      %v5072 = vadd.f32 %v5032, 1.0
      %v5073 = vadd.f32 %v5034, 1.0
      %v5074 = vadd.f32 %v5036, 1.0
      %v5075 = vadd.f32 %v5038, 1.0
      %v5076 = vadd.f32 %v5040, 1.0
      %v5077 = vadd.f32 %v5042, 1.0
      %v5078 = vadd.f32 %v5044, 1.0
      %v5079 = vadd.f32 %v5046, 1.0
      %v5080 = vadd.f32 %v5048, 1.0
      %v5081 = vrcp.pop %v5049
      %v5082 = vmul.f32 1.0, %v5081
      %v5083 = vrcp.pop %v5050
      %v5084 = vmul.f32 1.0, %v5083
      %v5085 = vrcp.pop %v5051
      %v5086 = vmul.f32 1.0, %v5085
      %v5087 = vrcp.pop %v5052
      %v5088 = vmul.f32 1.0, %v5087
      %v5089 = vrcp.pop %v5053
      %v5090 = vmul.f32 1.0, %v5089
      %v5091 = vrcp.pop %v5054
      %v5092 = vmul.f32 1.0, %v5091
      %v5093 = vrcp.pop %v5055
      %v5094 = vmul.f32 1.0, %v5093
      %v5095 = vrcp.pop %v5056
      %v5096 = vmul.f32 1.0, %v5095
      %v5097 = vrcp.pop %v5057
      %v5098 = vmul.f32 1.0, %v5097
      %v5099 = vrcp.pop %v5058
      %v5100 = vmul.f32 1.0, %v5099
      %v5101 = vrcp.pop %v5059
      %v5102 = vmul.f32 1.0, %v5101
      %v5103 = vrcp.pop %v5060
      %v5104 = vmul.f32 1.0, %v5103
      %v5105 = vrcp.pop %v5061
      %v5106 = vmul.f32 1.0, %v5105
      %v5107 = vrcp.pop %v5062
      %v5108 = vmul.f32 1.0, %v5107
      %v5109 = vrcp.pop %v5063
      %v5110 = vmul.f32 1.0, %v5109
      %v5111 = vrcp.pop %v5064
      %v5112 = vmul.f32 1.0, %v5111
      %v5113 = vrcp.pop %v5065
      %v5114 = vmul.f32 1.0, %v5113
      %v5115 = vrcp.pop %v5066
      %v5116 = vmul.f32 1.0, %v5115
      %v5117 = vrcp.pop %v5067
      %v5118 = vmul.f32 1.0, %v5117
      %v5119 = vrcp.pop %v5068
      %v5120 = vmul.f32 1.0, %v5119
      %v5121 = vrcp.pop %v5069
      %v5122 = vmul.f32 1.0, %v5121
      %v5123 = vrcp.pop %v5070
      %v5124 = vmul.f32 1.0, %v5123
      %v5125 = vrcp.pop %v5071
      %v5126 = vmul.f32 1.0, %v5125
      %v5127 = vrcp.pop %v5072
      %v5128 = vmul.f32 1.0, %v5127
      %v5129 = vrcp.pop %v5073
      %v5130 = vmul.f32 1.0, %v5129
      %v5131 = vrcp.pop %v5074
      %v5132 = vmul.f32 1.0, %v5131
      %v5133 = vrcp.pop %v5075
      %v5134 = vmul.f32 1.0, %v5133
      %v5135 = vrcp.pop %v5076
      %v5136 = vmul.f32 1.0, %v5135
      %v5137 = vrcp.pop %v5077
      %v5138 = vmul.f32 1.0, %v5137
      %v5139 = vrcp.pop %v5078
      %v5140 = vmul.f32 1.0, %v5139
      %v5141 = vrcp.pop %v5079
      %v5142 = vmul.f32 1.0, %v5141
      %v5143 = vrcp.pop %v5080
      %v5144 = vmul.f32 1.0, %v5143
      %5145 = vst.msk [vmem:[%s442] sm:$0xff] %vm3538, %v5082
      %5146 = vst.msk [vmem:[%s442 + $0x8] sm:$0xff] %vm3538, %v5084
      %5147 = vst.msk [vmem:[%s442 + $0x10] sm:$0xff] %vm3538, %v5086
      %5148 = vst.msk [vmem:[%s442 + $0x18] sm:$0xff] %vm3538, %v5088
      %5149 = vst.msk [vmem:[%s442 + $0x20] sm:$0xff] %vm3538, %v5090
      %5150 = vst.msk [vmem:[%s442 + $0x28] sm:$0xff] %vm3538, %v5092
      %5151 = vst.msk [vmem:[%s442 + $0x30] sm:$0xff] %vm3538, %v5094
      %5152 = vst.msk [vmem:[%s442 + $0x38] sm:$0xff] %vm3538, %v5096
      %5153 = vst.msk [vmem:[%s442 + $0x40] sm:$0xff] %vm3538, %v5098
      %5154 = vst.msk [vmem:[%s442 + $0x48] sm:$0xff] %vm3538, %v5100
      %5155 = vst.msk [vmem:[%s442 + $0x50] sm:$0xff] %vm3538, %v5102
      %5156 = vst.msk [vmem:[%s442 + $0x58] sm:$0xff] %vm3538, %v5104
      %5157 = vst.msk [vmem:[%s442 + $0x60] sm:$0xff] %vm3538, %v5106
      %5158 = vst.msk [vmem:[%s442 + $0x68] sm:$0xff] %vm3538, %v5108
      %5159 = vst.msk [vmem:[%s442 + $0x70] sm:$0xff] %vm3538, %v5110
      %5160 = vst.msk [vmem:[%s442 + $0x78] sm:$0xff] %vm3538, %v5112
      %5161 = vst.msk [vmem:[%s442 + $0x80] sm:$0xff] %vm3538, %v5114
      %5162 = vst.msk [vmem:[%s442 + $0x88] sm:$0xff] %vm3538, %v5116
      %5163 = vst.msk [vmem:[%s442 + $0x90] sm:$0xff] %vm3538, %v5118
      %5164 = vst.msk [vmem:[%s442 + $0x98] sm:$0xff] %vm3538, %v5120
      %5165 = vst.msk [vmem:[%s442 + $0xa0] sm:$0xff] %vm3538, %v5122
      %5166 = vst.msk [vmem:[%s442 + $0xa8] sm:$0xff] %vm3538, %v5124
      %5167 = vst.msk [vmem:[%s442 + $0xb0] sm:$0xff] %vm3538, %v5126
      %5168 = vst.msk [vmem:[%s442 + $0xb8] sm:$0xff] %vm3538, %v5128
      %5169 = vst.msk [vmem:[%s442 + $0xc0] sm:$0xff] %vm3538, %v5130
      %5170 = vst.msk [vmem:[%s442 + $0xc8] sm:$0xff] %vm3538, %v5132
      %5171 = vst.msk [vmem:[%s442 + $0xd0] sm:$0xff] %vm3538, %v5134
      %5172 = vst.msk [vmem:[%s442 + $0xd8] sm:$0xff] %vm3538, %v5136
      %5173 = vst.msk [vmem:[%s442 + $0xe0] sm:$0xff] %vm3538, %v5138
      %5174 = vst.msk [vmem:[%s442 + $0xe8] sm:$0xff] %vm3538, %v5140
      %5175 = vst.msk [vmem:[%s442 + $0xf0] sm:$0xff] %vm3538, %v5142
      %5176 = vst.msk [vmem:[%s442 + $0xf8] sm:$0xff] %vm3538, %v5144
      %p5177 = scmp.lt.s32.totalorder %s26, 1
      %s5178 = scalar_select %p5177, %s26, 1
      %s5179 = smul.addr %s5178, 32
      %s5180 = smul.addr %s5179, 8
      %s5181 = scalar_lea.vmem %s13, %s5180
      // Predicated region
      $region73: #{cae_forward.1} parent=71 // pred_check
        %p5182 = pneg %p322
      $region74: #{cae_forward.1} parent=71 // pred_check_branch
        %5184 = sbr.rel (%p5182) target = $region76
      $region75: #{cae_forward.1} parent=71 // pred_region
        _
      $region76: #{cae_forward.1} parent=71 // pred_fallthru
        _
    $region72: #{cae_forward.1} parent=5 // pred_fallthru
      _
    %p5185 = scmp.le.s32.totalorder 2, %s21
    // Predicated region
    $region77: #{cae_forward.1} parent=5 // pred_check
      %p5186 = pneg %p5185
    $region78: #{cae_forward.1} parent=5 // pred_check_branch
      %5188 = sbr.rel (%p5186) target = $region80
    $region79: #{cae_forward.1} parent=5 // pred_region
      %s5189 = ssub.s32 %s21, 2
      // Predicated region
      $region81: #{cae_forward.1} parent=79 // pred_check
        %p5190 = pneg %p328
      $region82: #{cae_forward.1} parent=79 // pred_check_branch
        %5192 = sbr.rel (%p5190) target = $region84
      $region83: #{cae_forward.1} parent=79 // pred_region
        %p5193 = scmp.lt.s32.totalorder %s27, 1
        %s5194 = scalar_select %p5193, %s27, 1
        %s5195 = smul.addr %s5194, 32
        %s5196 = smul.addr %s5195, 8
        %s5197 = scalar_lea.vmem %s13, %s5196
      $region84: #{cae_forward.1} parent=79 // pred_fallthru
        _
    $region80: #{cae_forward.1} parent=5 // pred_fallthru
      _
  $region6: #{cae_forward.1} parent=0 // loop_footer
    %s25 = sadd.s32 1, %s21
  $region7: #{cae_forward.1} parent=0 // loop_footer_branch
    %20 = sbr.rel target = $region3
  $region8: #{cae_forward.1} parent=0 // loop_exit
    _

</llo_original>
